<compile_context>
chip_gen: v5e
topology: v5e:2x2
jax: 0.10.0
libtpu: 0.0.40
codegen_flags: <defaults>
</compile_context>

<pallas_src>
import math

import jax
import jax.numpy as jnp
from jax.experimental import pallas as pl
from jax.experimental.pallas import tpu as pltpu

LN_EPS = 1e-5          # torch nn.LayerNorm default
MASK_BIAS = 1e9        # additive key bias magnitude for masked positions

_TLB_W_NAMES = ("ln1_g", "ln1_b", "wqkv", "bqkv", "wo", "bo",
                "ln2_g", "ln2_b", "wq", "bq", "wkv", "bkv", "wo2", "bo2",
                "ln3_g", "ln3_b", "w1", "b1", "w2", "b2")
_UPD_W_NAMES = ("ln1_g", "ln1_b", "wq", "bq", "wkv", "bkv", "wo", "bo",
                "ln2_g", "ln2_b", "w1", "b1", "w2", "b2")
_N_TLB = len(_TLB_W_NAMES)   # 20
_N_UPD = len(_UPD_W_NAMES)   # 14


# ----------------------------------------------------------------------------
# helpers
# ----------------------------------------------------------------------------
def _round_up(x, m):
    return ((x + m - 1) // m) * m


def _batch_tile(n, rows_per_batch):
    """Batches per grid step.  Keep >=2 grid steps when n>=2 (v7x megacore can
    split the 'parallel' axis across both TensorCores), cap the activation tile,
    and pad the batch instead of degrading to nb=1 for awkward n."""
    if n <= 1:
        return 1, max(n, 1)
    cap = max(1, 512 // max(rows_per_batch, 1))
    nb = min(max(1, n // 2), cap)
    n_pad = -(-n // nb) * nb
    return nb, n_pad


def _ln_rows(x, g, b, inv_d):
    """Row LayerNorm over the REAL hidden size.  Padded lanes of x/g/b are zero,
    so sums over the padded width equal sums over the real width and padded
    output lanes stay exactly zero."""
    mu = jnp.sum(x, axis=-1, keepdims=True) * inv_d
    var = jnp.maximum(jnp.sum(x * x, axis=-1, keepdims=True) * inv_d - mu * mu, 0.0)
    return (x - mu) * jax.lax.rsqrt(var + LN_EPS) * g + b


def _attn(q, k, v, bias, scale):
    """Masked softmax attention.  q:(nb,Sq,Dp) bf16, k/v:(nb,Sk,Dp) bf16,
    bias:(nb,1,Sk) f32 additive (0 / -1e9) or None.  Returns f32 (nb,Sq,Dp)."""
    s = jnp.einsum("bqd,bkd->bqk", q, k, preferred_element_type=jnp.float32) * scale
    if bias is not None:
        s = s + bias
    s = s - jnp.max(s, axis=-1, keepdims=True)
    p = jnp.exp(s)
    p = p * pl.reciprocal(jnp.sum(p, axis=-1, keepdims=True), approx=True)
    return jnp.einsum("bqk,bkd->bqd", p.astype(jnp.bfloat16), v,
                      preferred_element_type=jnp.float32)


# ----------------------------------------------------------------------------
# fused whole-chunk kernel: L TLB blocks + Lu memory-update blocks + gating
# ----------------------------------------------------------------------------
def _make_chunk_kernel(nb, S, M, Dp, L, Lu, d_real):
    scale = 1.0 / math.sqrt(d_real)
    inv_d = 1.0 / d_real
    bf16 = jnp.bfloat16

    def kernel(*refs):
        seq_ref, mem_ref, bias_ref, gate_ref = refs[:4]
        tw = refs[4:4 + _N_TLB]
        uw = refs[4 + _N_TLB:4 + _N_TLB + _N_UPD]
        seq_out, mem_out = refs[4 + _N_TLB + _N_UPD:]

        (t_ln1g, t_ln1b, t_wqkv, t_bqkv, t_wo, t_bo,
         t_ln2g, t_ln2b, t_wq, t_bq, t_wkv, t_bkv, t_wo2, t_bo2,
         t_ln3g, t_ln3b, t_w1, t_b1, t_w2, t_b2) = tw
        (u_ln1g, u_ln1b, u_wq, u_bq, u_wkv, u_bkv, u_wo, u_bo,
         u_ln2g, u_ln2b, u_w1, u_b1, u_w2, u_b2) = uw

        x0 = seq_ref[...]                 # (nb, S, Dp) f32  == original_sequence
        m0 = mem_ref[...]                 # (nb, M, Dp) f32  == original_memory
        bias = bias_ref[...]              # (nb, 1, S) f32 additive key bias
        gate = gate_ref[...]              # (nb, 1, 1) f32

        Rs, Rm = nb * S, nb * M
        mem_bf = m0.reshape(Rm, Dp).astype(bf16)   # memory constant across TLB layers

        # ---- TLB blocks: pre-LN self-attn -> cross-attn over memory -> FFN ----
        s = x0
        for l in range(L):
            # self attention (pseudo mask on keys); QKV as one wide matmul
            xn = _ln_rows(s.reshape(Rs, Dp), t_ln1g[l], t_ln1b[l], inv_d).astype(bf16)
            qkv = (jnp.dot(xn, t_wqkv[l], preferred_element_type=jnp.float32)
                   + t_bqkv[l]).astype(bf16)                       # (Rs, 3Dp)
            q = qkv[:, :Dp].reshape(nb, S, Dp)
            k = qkv[:, Dp:2 * Dp].reshape(nb, S, Dp)
            v = qkv[:, 2 * Dp:].reshape(nb, S, Dp)
            ctx = _attn(q, k, v, bias, scale)
            o = (jnp.dot(ctx.reshape(Rs, Dp).astype(bf16), t_wo[l],
                         preferred_element_type=jnp.float32) + t_bo[l])
            s = s + o.reshape(nb, S, Dp)

            # cross attention: chunk queries attend to memory (memory mask = ones)
            # TODO(synk): reference CrossTransformerBlock may also pre-LN the KV
            # source; block definition is not in the source file.
            xn = _ln_rows(s.reshape(Rs, Dp), t_ln2g[l], t_ln2b[l], inv_d).astype(bf16)
            q = (jnp.dot(xn, t_wq[l], preferred_element_type=jnp.float32)
                 + t_bq[l]).astype(bf16).reshape(nb, S, Dp)
            kv = (jnp.dot(mem_bf, t_wkv[l], preferred_element_type=jnp.float32)
                  + t_bkv[l]).astype(bf16)                         # (Rm, 2Dp)
            k = kv[:, :Dp].reshape(nb, M, Dp)
            v = kv[:, Dp:].reshape(nb, M, Dp)
            ctx = _attn(q, k, v, None, scale)
            o = (jnp.dot(ctx.reshape(Rs, Dp).astype(bf16), t_wo2[l],
                         preferred_element_type=jnp.float32) + t_bo2[l])
            s = s + o.reshape(nb, S, Dp)

            # FFN
            xn = _ln_rows(s.reshape(Rs, Dp), t_ln3g[l], t_ln3b[l], inv_d).astype(bf16)
            h = jnp.maximum(jnp.dot(xn, t_w1[l], preferred_element_type=jnp.float32)
                            + t_b1[l], 0.0).astype(bf16)
            o = (jnp.dot(h, t_w2[l], preferred_element_type=jnp.float32) + t_b2[l])
            s = s + o.reshape(nb, S, Dp)

        # ---- memory-update blocks: memory queries attend to updated chunk ----
        s_bf = s.reshape(Rs, Dp).astype(bf16)          # constant across update layers
        m = m0
        for l in range(Lu):
            xn = _ln_rows(m.reshape(Rm, Dp), u_ln1g[l], u_ln1b[l], inv_d).astype(bf16)
            q = (jnp.dot(xn, u_wq[l], preferred_element_type=jnp.float32)
                 + u_bq[l]).astype(bf16).reshape(nb, M, Dp)
            kv = (jnp.dot(s_bf, u_wkv[l], preferred_element_type=jnp.float32)
                  + u_bkv[l]).astype(bf16)                         # (Rs, 2Dp)
            k = kv[:, :Dp].reshape(nb, S, Dp)
            v = kv[:, Dp:].reshape(nb, S, Dp)
            ctx = _attn(q, k, v, bias, scale)          # pseudo mask on chunk keys
            o = (jnp.dot(ctx.reshape(Rm, Dp).astype(bf16), u_wo[l],
                         preferred_element_type=jnp.float32) + u_bo[l])
            m = m + o.reshape(nb, M, Dp)

            xn = _ln_rows(m.reshape(Rm, Dp), u_ln2g[l], u_ln2b[l], inv_d).astype(bf16)
            h = jnp.maximum(jnp.dot(xn, u_w1[l], preferred_element_type=jnp.float32)
                            + u_b1[l], 0.0).astype(bf16)
            o = (jnp.dot(h, u_w2[l], preferred_element_type=jnp.float32) + u_b2[l])
            m = m + o.reshape(nb, M, Dp)

        # ---- per-batch gating fused into the final stores ----
        keep = gate > 0.5
        seq_out[...] = jnp.where(keep, s, x0)
        mem_out[...] = jnp.where(keep, m, m0)

    return kernel


def tlb_chunk(seq, memory, key_bias, gate, tlb_w, upd_w, *, d_real, nb,
              layers, update_layers):
    """One fused pallas_call for a whole chunk.  Returns (new_seq, new_memory)."""
    n_pad, S, Dp = seq.shape
    M = memory.shape[1]
    grid = (n_pad // nb,)

    kernel = _make_chunk_kernel(nb, S, M, Dp, layers, update_layers, d_real)

    in_specs = [
        pl.BlockSpec((nb, S, Dp), lambda i: (i, 0, 0)),
        pl.BlockSpec((nb, M, Dp), lambda i: (i, 0, 0)),
        pl.BlockSpec((nb, 1, S), lambda i: (i, 0, 0)),
        pl.BlockSpec((nb, 1, 1), lambda i: (i, 0, 0)),
    ]
    # Layer-stacked weights: whole-array blocks, constant index_map -> DMA'd once
    # and kept resident across the batch grid.
    in_specs += [pl.BlockSpec(w.shape, lambda i, nd=w.ndim: (0,) * nd)
                 for w in (*tlb_w, *upd_w)]

    return pl.pallas_call(
        kernel,
        out_shape=(jax.ShapeDtypeStruct((n_pad, S, Dp), jnp.float32),
                   jax.ShapeDtypeStruct((n_pad, M, Dp), jnp.float32)),
        grid=grid,
        in_specs=in_specs,
        out_specs=(pl.BlockSpec((nb, S, Dp), lambda i: (i, 0, 0)),
                   pl.BlockSpec((nb, M, Dp), lambda i: (i, 0, 0))),
        compiler_params=pltpu.CompilerParams(dimension_semantics=("parallel",)),
    )(seq, memory, key_bias, gate, *tlb_w, *upd_w)


# ----------------------------------------------------------------------------
# LN(memory) + pooling (once, after the chunk loop)
# ----------------------------------------------------------------------------
def pool_memory(memory, ln_g, ln_b, pooling, d_real):
    """global_state = pooling(LayerNorm(memory));  memory:(N,M,Dp) -> (N,Dp)."""
    N, M, Dp = memory.shape
    inv_d = 1.0 / d_real

    if pooling == "mean":
        mem_in = memory

        def kernel(m_ref, g_ref, b_ref, o_ref):
            xn = _ln_rows(m_ref[...].reshape(N * M, Dp), g_ref[...], b_ref[...], inv_d)
            o_ref[...] = jnp.mean(xn.reshape(N, M, Dp), axis=1)
    else:  # 'cls' / 'cls+' / 'end' -> LN(memory)[:, -1, :] (last slot, as in reference)
        mem_in = memory[:, M - 1:, :]

        def kernel(m_ref, g_ref, b_ref, o_ref):
            o_ref[...] = _ln_rows(m_ref[...].reshape(N, Dp), g_ref[...], b_ref[...], inv_d)

    return pl.pallas_call(
        kernel, out_shape=jax.ShapeDtypeStruct((N, Dp), jnp.float32),
    )(mem_in, ln_g, ln_b)


# ----------------------------------------------------------------------------
# parameter initialization (deterministic, synthetic): stacked per-layer weights,
# hidden zero-padded to a multiple of 128 lanes, matmul weights in bf16.
# ----------------------------------------------------------------------------
def init_params(seed, D, memory_size, layers, update_layers, ffn_mult=4):
    assert layers >= 1 and update_layers >= 1
    Dp = _round_up(D, 128)
    H = ffn_mult * D
    Hp = _round_up(H, 128)
    key_it = iter(jax.random.split(jax.random.PRNGKey(seed), 4096))

    def w(din, dout, dinp, doutp):
        a = 0.02 * jax.random.normal(next(key_it), (din, dout), jnp.float32)
        return jnp.pad(a, ((0, dinp - din), (0, doutp - dout))).astype(jnp.bfloat16)

    def wcat(n, din, dout, dinp, doutp):
        # n independent projections concatenated along (padded) output columns
        return jnp.concatenate([w(din, dout, dinp, doutp) for _ in range(n)], axis=1)

    ln_gamma = jnp.pad(jnp.ones((1, D), jnp.float32), ((0, 0), (0, Dp - D)))
    ln_beta = jnp.zeros((1, Dp), jnp.float32)
    zf32 = lambda n: jnp.zeros((1, n), jnp.float32)

    def tlb_layer():
        return dict(
            ln1_g=ln_gamma, ln1_b=ln_beta,
            wqkv=wcat(3, D, D, Dp, Dp), bqkv=zf32(3 * Dp),
            wo=w(D, D, Dp, Dp), bo=zf32(Dp),
            ln2_g=ln_gamma, ln2_b=ln_beta,
            wq=w(D, D, Dp, Dp), bq=zf32(Dp),
            wkv=wcat(2, D, D, Dp, Dp), bkv=zf32(2 * Dp),
            wo2=w(D, D, Dp, Dp), bo2=zf32(Dp),
            ln3_g=ln_gamma, ln3_b=ln_beta,
            w1=w(D, H, Dp, Hp), b1=zf32(Hp),
            w2=w(H, D, Hp, Dp), b2=zf32(Dp),
        )

    def upd_layer():
        return dict(
            ln1_g=ln_gamma, ln1_b=ln_beta,
            wq=w(D, D, Dp, Dp), bq=zf32(Dp),
            wkv=wcat(2, D, D, Dp, Dp), bkv=zf32(2 * Dp),
            wo=w(D, D, Dp, Dp), bo=zf32(Dp),
            ln2_g=ln_gamma, ln2_b=ln_beta,
            w1=w(D, H, Dp, Hp), b1=zf32(Hp),
            w2=w(H, D, Hp, Dp), b2=zf32(Dp),
        )

    def stack(layer_fn, n):
        ps = [layer_fn() for _ in range(n)]
        return {k: jnp.stack([p[k] for p in ps]) for k in ps[0]}

    return {
        "memory": jnp.zeros((memory_size, Dp), jnp.float32),   # nn.Parameter(zeros)
        "LN_g": ln_gamma, "LN_b": ln_beta,
        "tlb": stack(tlb_layer, layers),
        "upd": stack(upd_layer, update_layers),
    }


# ----------------------------------------------------------------------------
# TLBEncoder.forward
# ----------------------------------------------------------------------------
def tlb_encoder_forward(params, config, sequence, input_mask):
    N, S0, D = sequence.shape
    M, Dp = params["memory"].shape
    L, Lu = config["layers"], config["update_layers"]
    chunk_size = config["model_chunk_size"]

    # torch.chunk semantics
    chunk_num = math.ceil(S0 / chunk_size)
    csz = math.ceil(S0 / chunk_num)
    bounds = [(i * csz, min((i + 1) * csz, S0)) for i in range(chunk_num)]
    bounds = [(a, b) for a, b in bounds if b > a]

    nb, n_pad = _batch_tile(N, max(csz, M))
    pad_n = n_pad - N

    # Pad hidden -> Dp (lane-dense) and batch -> n_pad once, outside the chunk loop.
    seq_p = jnp.pad(sequence, ((0, pad_n), (0, 0), (0, Dp - D)))
    mask_p = jnp.pad(input_mask, ((0, pad_n), (0, 0)))
    memory = jnp.tile(params["memory"][None], (n_pad, 1, 1))          # (n_pad, M, Dp)

    tlb_w = [params["tlb"][k] for k in _TLB_W_NAMES]
    upd_w = [params["upd"][k] for k in _UPD_W_NAMES]

    out_chunks = []
    for a, b in bounds:
        S = b - a
        seq_c = seq_p[:, a:b]
        mask_c = mask_p[:, a:b]
        pseudo = mask_c.at[:, 0].set(1.0)          # first chunk token always attendable
        key_bias = ((pseudo - 1.0) * MASK_BIAS).reshape(n_pad, 1, S)   # 0 / -1e9
        gate = mask_c[:, 0].reshape(n_pad, 1, 1)

        seq_c, memory = tlb_chunk(seq_c, memory, key_bias, gate, tlb_w, upd_w,
                                  d_real=D, nb=nb, layers=L, update_layers=Lu)
        out_chunks.append(seq_c)

    sequence_out = jnp.concatenate(out_chunks, axis=1)[:N, :, :D]

    if config["pooling"] not in ("cls", "cls+", "end", "mean"):
        raise ValueError("unknown pooling")
    # Only the final chunk's LN(memory) feeds global_state, so LN + pool once here.
    global_state = pool_memory(memory[:N], params["LN_g"], params["LN_b"],
                               config["pooling"], d_real=D)[:, :D]

    return {
        "sequence": sequence_out,
        "global_state": global_state,
        "input_mask": input_mask,     # == concatenation of the chunked masks
        "aux_loss": None,
    }


# ----------------------------------------------------------------------------
if __name__ == "__main__":
    config = dict(
        hidden_size=32,
        model_chunk_size=8,
        memory_size=8,
        layers=2,
        update_layers=1,
        pooling="cls",
        block="TransformerBlock",   # placeholder; synthetic pre-LN block used
    )
    N, S0, D = 2, 16, config["hidden_size"]

    params = init_params(
        seed=42,
        D=D,
        memory_size=config["memory_size"],
        layers=config["layers"],
        update_layers=config["update_layers"],
    )

    key = jax.random.PRNGKey(0)
    k_seq, _ = jax.random.split(key)
    sequence = jax.random.normal(k_seq, (N, S0, D), dtype=jnp.float32)
    input_mask = jnp.concatenate(
        [
            jnp.ones((1, S0), jnp.float32),
            jnp.concatenate(
                [jnp.ones((1, 10), jnp.float32), jnp.zeros((1, S0 - 10), jnp.float32)],
                axis=1,
            ),
        ],
        axis=0,
    )

    fwd = jax.jit(lambda p, s, m: tlb_encoder_forward(p, config, s, m))
    out = fwd(params, sequence, input_mask)
    jax.block_until_ready((out["sequence"], out["global_state"], out["input_mask"]))

    assert out["sequence"].shape == (N, S0, D)
    assert out["global_state"].shape == (N, D)
    assert out["input_mask"].shape == (N, S0)
    assert out["aux_loss"] is None
    assert not bool(jnp.any(jnp.isnan(out["sequence"])))
    assert not bool(jnp.any(jnp.isnan(out["global_state"])))
    print("KERNEL_OK")
</pallas_src>

<mosaic_0001>
module attributes {stable_mosaic.version = 11 : i64} {
  func.func @kernel(%arg0: memref<2x1x128xf32, #tpu.memory_space<vmem>>, %arg1: memref<1x128xf32, #tpu.memory_space<vmem>>, %arg2: memref<1x128xf32, #tpu.memory_space<vmem>>, %arg3: memref<2x128xf32, #tpu.memory_space<vmem>>) attributes {dimension_semantics = [], scalar_prefetch = 0 : i64, scratch_operands = 0 : i64, tpu.core_type = #tpu.core_type<tc>} {
    %c0 = arith.constant 0 : index
    %c0_0 = arith.constant 0 : index
    %c0_1 = arith.constant 0 : index
    %0 = vector.load %arg0[%c0, %c0_0, %c0_1] : memref<2x1x128xf32, #tpu.memory_space<vmem>>, vector<2x1x128xf32>
    %1 = vector.shape_cast %0 : vector<2x1x128xf32> to vector<2x128xf32>
    %c0_2 = arith.constant 0 : index
    %c0_3 = arith.constant 0 : index
    %2 = vector.load %arg1[%c0_2, %c0_3] : memref<1x128xf32, #tpu.memory_space<vmem>>, vector<1x128xf32>
    %c0_4 = arith.constant 0 : index
    %c0_5 = arith.constant 0 : index
    %3 = vector.load %arg2[%c0_4, %c0_5] : memref<1x128xf32, #tpu.memory_space<vmem>>, vector<1x128xf32>
    %cst = arith.constant dense<0.000000e+00> : vector<2xf32>
    %4 = vector.multi_reduction <add>, %1, %cst [1] : vector<2x128xf32> to vector<2xf32>
    %5 = vector.shape_cast %4 : vector<2xf32> to vector<2x1xf32>
    %cst_6 = arith.constant 3.125000e-02 : f32
    %6 = vector.broadcast %cst_6 : f32 to vector<2x1xf32>
    %7 = arith.mulf %5, %6 : vector<2x1xf32>
    %8 = arith.mulf %1, %1 : vector<2x128xf32>
    %cst_7 = arith.constant dense<0.000000e+00> : vector<2xf32>
    %9 = vector.multi_reduction <add>, %8, %cst_7 [1] : vector<2x128xf32> to vector<2xf32>
    %10 = vector.shape_cast %9 : vector<2xf32> to vector<2x1xf32>
    %cst_8 = arith.constant 3.125000e-02 : f32
    %11 = vector.broadcast %cst_8 : f32 to vector<2x1xf32>
    %12 = arith.mulf %10, %11 : vector<2x1xf32>
    %13 = arith.mulf %7, %7 : vector<2x1xf32>
    %14 = arith.subf %12, %13 : vector<2x1xf32>
    %cst_9 = arith.constant 0.000000e+00 : f32
    %15 = vector.broadcast %cst_9 : f32 to vector<2x1xf32>
    %16 = arith.maximumf %14, %15 : vector<2x1xf32>
    %17 = vector.broadcast %7 : vector<2x1xf32> to vector<2x128xf32>
    %18 = arith.subf %1, %17 : vector<2x128xf32>
    %cst_10 = arith.constant 9.99999974E-6 : f32
    %19 = vector.broadcast %cst_10 : f32 to vector<2x1xf32>
    %20 = arith.addf %16, %19 : vector<2x1xf32>
    %21 = math.rsqrt %20 : vector<2x1xf32>
    %22 = vector.broadcast %21 : vector<2x1xf32> to vector<2x128xf32>
    %23 = arith.mulf %18, %22 : vector<2x128xf32>
    %24 = vector.broadcast %2 : vector<1x128xf32> to vector<2x128xf32>
    %25 = arith.mulf %23, %24 : vector<2x128xf32>
    %26 = vector.broadcast %3 : vector<1x128xf32> to vector<2x128xf32>
    %27 = arith.addf %25, %26 : vector<2x128xf32>
    %c0_11 = arith.constant 0 : index
    %c0_12 = arith.constant 0 : index
    %28 = vector.load %arg3[%c0_11, %c0_12] : memref<2x128xf32, #tpu.memory_space<vmem>>, vector<2x128xf32>
    tpu.vector_store %arg3[%c0_11, %c0_12], %27 {strides = array<i32>} : memref<2x128xf32, #tpu.memory_space<vmem>>, vector<2x128xf32>,
    return
  }
}

module attributes {stable_mosaic.version = 11 : i64} {
  func.func @kernel(%arg0: i32, %arg1: memref<1x8x128xf32, #tpu.memory_space<vmem>>, %arg2: memref<1x8x128xf32, #tpu.memory_space<vmem>>, %arg3: memref<1x1x8xf32, #tpu.memory_space<vmem>>, %arg4: memref<1x1x1xf32, #tpu.memory_space<vmem>>, %arg5: memref<2x1x128xf32, #tpu.memory_space<vmem>>, %arg6: memref<2x1x128xf32, #tpu.memory_space<vmem>>, %arg7: memref<2x128x384xbf16, #tpu.memory_space<vmem>>, %arg8: memref<2x1x384xf32, #tpu.memory_space<vmem>>, %arg9: memref<2x128x128xbf16, #tpu.memory_space<vmem>>, %arg10: memref<2x1x128xf32, #tpu.memory_space<vmem>>, %arg11: memref<2x1x128xf32, #tpu.memory_space<vmem>>, %arg12: memref<2x1x128xf32, #tpu.memory_space<vmem>>, %arg13: memref<2x128x128xbf16, #tpu.memory_space<vmem>>, %arg14: memref<2x1x128xf32, #tpu.memory_space<vmem>>, %arg15: memref<2x128x256xbf16, #tpu.memory_space<vmem>>, %arg16: memref<2x1x256xf32, #tpu.memory_space<vmem>>, %arg17: memref<2x128x128xbf16, #tpu.memory_space<vmem>>, %arg18: memref<2x1x128xf32, #tpu.memory_space<vmem>>, %arg19: memref<2x1x128xf32, #tpu.memory_space<vmem>>, %arg20: memref<2x1x128xf32, #tpu.memory_space<vmem>>, %arg21: memref<2x128x128xbf16, #tpu.memory_space<vmem>>, %arg22: memref<2x1x128xf32, #tpu.memory_space<vmem>>, %arg23: memref<2x128x128xbf16, #tpu.memory_space<vmem>>, %arg24: memref<2x1x128xf32, #tpu.memory_space<vmem>>, %arg25: memref<1x1x128xf32, #tpu.memory_space<vmem>>, %arg26: memref<1x1x128xf32, #tpu.memory_space<vmem>>, %arg27: memref<1x128x128xbf16, #tpu.memory_space<vmem>>, %arg28: memref<1x1x128xf32, #tpu.memory_space<vmem>>, %arg29: memref<1x128x256xbf16, #tpu.memory_space<vmem>>, %arg30: memref<1x1x256xf32, #tpu.memory_space<vmem>>, %arg31: memref<1x128x128xbf16, #tpu.memory_space<vmem>>, %arg32: memref<1x1x128xf32, #tpu.memory_space<vmem>>, %arg33: memref<1x1x128xf32, #tpu.memory_space<vmem>>, %arg34: memref<1x1x128xf32, #tpu.memory_space<vmem>>, %arg35: memref<1x128x128xbf16, #tpu.memory_space<vmem>>, %arg36: memref<1x1x128xf32, #tpu.memory_space<vmem>>, %arg37: memref<1x128x128xbf16, #tpu.memory_space<vmem>>, %arg38: memref<1x1x128xf32, #tpu.memory_space<vmem>>, %arg39: memref<1x8x128xf32, #tpu.memory_space<vmem>>, %arg40: memref<1x8x128xf32, #tpu.memory_space<vmem>>) attributes {dimension_semantics = [#tpu.dimension_semantics<parallel>], iteration_bounds = array<i64: 2>, scalar_prefetch = 0 : i64, scratch_operands = 0 : i64, tpu.core_type = #tpu.core_type<tc>, window_params = [{transform_indices = @transform_0, window_bounds = array<i64: 1, 8, 128>}, {transform_indices = @transform_1, window_bounds = array<i64: 1, 8, 128>}, {transform_indices = @transform_2, window_bounds = array<i64: 1, 1, 8>}, {transform_indices = @transform_3, window_bounds = array<i64: 1, 1, 1>}, {pipeline_mode = #tpu.pipeline_mode<synchronous>, transform_indices = @transform_4, window_bounds = array<i64: 2, 1, 128>}, {pipeline_mode = #tpu.pipeline_mode<synchronous>, transform_indices = @transform_5, window_bounds = array<i64: 2, 1, 128>}, {pipeline_mode = #tpu.pipeline_mode<synchronous>, transform_indices = @transform_6, window_bounds = array<i64: 2, 128, 384>}, {pipeline_mode = #tpu.pipeline_mode<synchronous>, transform_indices = @transform_7, window_bounds = array<i64: 2, 1, 384>}, {pipeline_mode = #tpu.pipeline_mode<synchronous>, transform_indices = @transform_8, window_bounds = array<i64: 2, 128, 128>}, {pipeline_mode = #tpu.pipeline_mode<synchronous>, transform_indices = @transform_9, window_bounds = array<i64: 2, 1, 128>}, {pipeline_mode = #tpu.pipeline_mode<synchronous>, transform_indices = @transform_10, window_bounds = array<i64: 2, 1, 128>}, {pipeline_mode = #tpu.pipeline_mode<synchronous>, transform_indices = @transform_11, window_bounds = array<i64: 2, 1, 128>}, {pipeline_mode = #tpu.pipeline_mode<synchronous>, transform_indices = @transform_12, window_bounds = array<i64: 2, 128, 128>}, {pipeline_mode = #tpu.pipeline_mode<synchronous>, transform_indices = @transform_13, window_bounds = array<i64: 2, 1, 128>}, {pipeline_mode = #tpu.pipeline_mode<synchronous>, transform_indices = @transform_14, window_bounds = array<i64: 2, 128, 256>}, {pipeline_mode = #tpu.pipeline_mode<synchronous>, transform_indices = @transform_15, window_bounds = array<i64: 2, 1, 256>}, {pipeline_mode = #tpu.pipeline_mode<synchronous>, transform_indices = @transform_16, window_bounds = array<i64: 2, 128, 128>}, {pipeline_mode = #tpu.pipeline_mode<synchronous>, transform_indices = @transform_17, window_bounds = array<i64: 2, 1, 128>}, {pipeline_mode = #tpu.pipeline_mode<synchronous>, transform_indices = @transform_18, window_bounds = array<i64: 2, 1, 128>}, {pipeline_mode = #tpu.pipeline_mode<synchronous>, transform_indices = @transform_19, window_bounds = array<i64: 2, 1, 128>}, {pipeline_mode = #tpu.pipeline_mode<synchronous>, transform_indices = @transform_20, window_bounds = array<i64: 2, 128, 128>}, {pipeline_mode = #tpu.pipeline_mode<synchronous>, transform_indices = @transform_21, window_bounds = array<i64: 2, 1, 128>}, {pipeline_mode = #tpu.pipeline_mode<synchronous>, transform_indices = @transform_22, window_bounds = array<i64: 2, 128, 128>}, {pipeline_mode = #tpu.pipeline_mode<synchronous>, transform_indices = @transform_23, window_bounds = array<i64: 2, 1, 128>}, {pipeline_mode = #tpu.pipeline_mode<synchronous>, transform_indices = @transform_24, window_bounds = array<i64: 1, 1, 128>}, {pipeline_mode = #tpu.pipeline_mode<synchronous>, transform_indices = @transform_25, window_bounds = array<i64: 1, 1, 128>}, {pipeline_mode = #tpu.pipeline_mode<synchronous>, transform_indices = @transform_26, window_bounds = array<i64: 1, 128, 128>}, {pipeline_mode = #tpu.pipeline_mode<synchronous>, transform_indices = @transform_27, window_bounds = array<i64: 1, 1, 128>}, {pipeline_mode = #tpu.pipeline_mode<synchronous>, transform_indices = @transform_28, window_bounds = array<i64: 1, 128, 256>}, {pipeline_mode = #tpu.pipeline_mode<synchronous>, transform_indices = @transform_29, window_bounds = array<i64: 1, 1, 256>}, {pipeline_mode = #tpu.pipeline_mode<synchronous>, transform_indices = @transform_30, window_bounds = array<i64: 1, 128, 128>}, {pipeline_mode = #tpu.pipeline_mode<synchronous>, transform_indices = @transform_31, window_bounds = array<i64: 1, 1, 128>}, {pipeline_mode = #tpu.pipeline_mode<synchronous>, transform_indices = @transform_32, window_bounds = array<i64: 1, 1, 128>}, {pipeline_mode = #tpu.pipeline_mode<synchronous>, transform_indices = @transform_33, window_bounds = array<i64: 1, 1, 128>}, {pipeline_mode = #tpu.pipeline_mode<synchronous>, transform_indices = @transform_34, window_bounds = array<i64: 1, 128, 128>}, {pipeline_mode = #tpu.pipeline_mode<synchronous>, transform_indices = @transform_35, window_bounds = array<i64: 1, 1, 128>}, {pipeline_mode = #tpu.pipeline_mode<synchronous>, transform_indices = @transform_36, window_bounds = array<i64: 1, 128, 128>}, {pipeline_mode = #tpu.pipeline_mode<synchronous>, transform_indices = @transform_37, window_bounds = array<i64: 1, 1, 128>}, {transform_indices = @transform_38, window_bounds = array<i64: 1, 8, 128>}, {transform_indices = @transform_39, window_bounds = array<i64: 1, 8, 128>}]} {
    %c0 = arith.constant 0 : index
    %c0_0 = arith.constant 0 : index
    %c0_1 = arith.constant 0 : index
    %0 = vector.load %arg1[%c0, %c0_0, %c0_1] : memref<1x8x128xf32, #tpu.memory_space<vmem>>, vector<1x8x128xf32>
    %c0_2 = arith.constant 0 : index
    %c0_3 = arith.constant 0 : index
    %c0_4 = arith.constant 0 : index
    %1 = vector.load %arg2[%c0_2, %c0_3, %c0_4] : memref<1x8x128xf32, #tpu.memory_space<vmem>>, vector<1x8x128xf32>
    %c0_5 = arith.constant 0 : index
    %c0_6 = arith.constant 0 : index
    %c0_7 = arith.constant 0 : index
    %2 = vector.load %arg3[%c0_5, %c0_6, %c0_7] : memref<1x1x8xf32, #tpu.memory_space<vmem>>, vector<1x1x8xf32>
    %c0_8 = arith.constant 0 : index
    %c0_9 = arith.constant 0 : index
    %c0_10 = arith.constant 0 : index
    %3 = vector.load %arg4[%c0_8, %c0_9, %c0_10] : memref<1x1x1xf32, #tpu.memory_space<vmem>>, vector<1x1x1xf32>
    %4 = vector.shape_cast %1 : vector<1x8x128xf32> to vector<8x128xf32>
    %5 = arith.truncf %4 : vector<8x128xf32> to vector<8x128xbf16>
    %6 = vector.shape_cast %0 : vector<1x8x128xf32> to vector<8x128xf32>
    %c0_11 = arith.constant 0 : index
    %c0_12 = arith.constant 0 : index
    %c0_13 = arith.constant 0 : index
    %7 = vector.load %arg5[%c0_11, %c0_12, %c0_13] : memref<2x1x128xf32, #tpu.memory_space<vmem>>, vector<1x1x128xf32>
    %8 = vector.shape_cast %7 : vector<1x1x128xf32> to vector<1x128xf32>
    %c0_14 = arith.constant 0 : index
    %c0_15 = arith.constant 0 : index
    %c0_16 = arith.constant 0 : index
    %9 = vector.load %arg6[%c0_14, %c0_15, %c0_16] : memref<2x1x128xf32, #tpu.memory_space<vmem>>, vector<1x1x128xf32>
    %10 = vector.shape_cast %9 : vector<1x1x128xf32> to vector<1x128xf32>
    %cst = arith.constant dense<0.000000e+00> : vector<8xf32>
    %11 = vector.multi_reduction <add>, %6, %cst [1] : vector<8x128xf32> to vector<8xf32>
    %12 = vector.shape_cast %11 : vector<8xf32> to vector<8x1xf32>
    %cst_17 = arith.constant 3.125000e-02 : f32
    %13 = vector.broadcast %cst_17 : f32 to vector<8x1xf32>
    %14 = arith.mulf %12, %13 : vector<8x1xf32>
    %15 = arith.mulf %6, %6 : vector<8x128xf32>
    %cst_18 = arith.constant dense<0.000000e+00> : vector<8xf32>
    %16 = vector.multi_reduction <add>, %15, %cst_18 [1] : vector<8x128xf32> to vector<8xf32>
    %17 = vector.shape_cast %16 : vector<8xf32> to vector<8x1xf32>
    %cst_19 = arith.constant 3.125000e-02 : f32
    %18 = vector.broadcast %cst_19 : f32 to vector<8x1xf32>
    %19 = arith.mulf %17, %18 : vector<8x1xf32>
    %20 = arith.mulf %14, %14 : vector<8x1xf32>
    %21 = arith.subf %19, %20 : vector<8x1xf32>
    %cst_20 = arith.constant 0.000000e+00 : f32
    %22 = vector.broadcast %cst_20 : f32 to vector<8x1xf32>
    %23 = arith.maximumf %21, %22 : vector<8x1xf32>
    %24 = vector.broadcast %14 : vector<8x1xf32> to vector<8x128xf32>
    %25 = arith.subf %6, %24 : vector<8x128xf32>
    %cst_21 = arith.constant 9.99999974E-6 : f32
    %26 = vector.broadcast %cst_21 : f32 to vector<8x1xf32>
    %27 = arith.addf %23, %26 : vector<8x1xf32>
    %28 = math.rsqrt %27 : vector<8x1xf32>
    %29 = vector.broadcast %28 : vector<8x1xf32> to vector<8x128xf32>
    %30 = arith.mulf %25, %29 : vector<8x128xf32>
    %31 = vector.broadcast %8 : vector<1x128xf32> to vector<8x128xf32>
    %32 = arith.mulf %30, %31 : vector<8x128xf32>
    %33 = vector.broadcast %10 : vector<1x128xf32> to vector<8x128xf32>
    %34 = arith.addf %32, %33 : vector<8x128xf32>
    %35 = arith.truncf %34 : vector<8x128xf32> to vector<8x128xbf16>
    %c0_22 = arith.constant 0 : index
    %c0_23 = arith.constant 0 : index
    %c0_24 = arith.constant 0 : index
    %36 = vector.load %arg7[%c0_22, %c0_23, %c0_24] : memref<2x128x384xbf16, #tpu.memory_space<vmem>>, vector<1x128x384xbf16>
    %37 = vector.shape_cast %36 : vector<1x128x384xbf16> to vector<128x384xbf16>
    %cst_25 = arith.constant dense<0.000000e+00> : vector<8x384xf32>
    %38 = tpu.matmul %35, %37, %cst_25 {dimension_numbers = #tpu.dot_dimension_numbers<[1], [0], [0], [1], [0, 0, 1, 1], [], []>} : vector<8x128xbf16>, vector<128x384xbf16>, vector<8x384xf32> -> vector<8x384xf32>
    %c0_26 = arith.constant 0 : index
    %c0_27 = arith.constant 0 : index
    %c0_28 = arith.constant 0 : index
    %39 = vector.load %arg8[%c0_26, %c0_27, %c0_28] : memref<2x1x384xf32, #tpu.memory_space<vmem>>, vector<1x1x384xf32>
    %40 = vector.shape_cast %39 : vector<1x1x384xf32> to vector<1x384xf32>
    %41 = vector.broadcast %40 : vector<1x384xf32> to vector<8x384xf32>
    %42 = arith.addf %38, %41 : vector<8x384xf32>
    %43 = arith.truncf %42 : vector<8x384xf32> to vector<8x384xbf16>
    %44 = vector.extract_strided_slice %43 {offsets = [0, 0], sizes = [8, 128], strides = [1, 1]} : vector<8x384xbf16> to vector<8x128xbf16>
    %45 = vector.shape_cast %44 : vector<8x128xbf16> to vector<1x8x128xbf16>
    %46 = vector.extract_strided_slice %43 {offsets = [0, 128], sizes = [8, 128], strides = [1, 1]} : vector<8x384xbf16> to vector<8x128xbf16>
    %47 = vector.shape_cast %46 : vector<8x128xbf16> to vector<1x8x128xbf16>
    %48 = vector.extract_strided_slice %43 {offsets = [0, 256], sizes = [8, 128], strides = [1, 1]} : vector<8x384xbf16> to vector<8x128xbf16>
    %49 = vector.shape_cast %48 : vector<8x128xbf16> to vector<1x8x128xbf16>
    "tpu.trace_start"() <{level = 10 : i32, message = "bqd,bkd->bqk"}> : () -> ()
    %cst_29 = arith.constant dense<0.000000e+00> : vector<1x8x8xf32>
    %50 = tpu.matmul %45, %47, %cst_29 {dimension_numbers = #tpu.dot_dimension_numbers<[2], [2], [1], [1], [0, 0, 0, 1, 1, 1], [0], [0]>} : vector<1x8x128xbf16>, vector<1x8x128xbf16>, vector<1x8x8xf32> -> vector<1x8x8xf32>
    "tpu.trace_stop"() : () -> ()
    %cst_30 = arith.constant 0.176776692 : f32
    %51 = vector.broadcast %cst_30 : f32 to vector<1x8x8xf32>
    %52 = arith.mulf %50, %51 : vector<1x8x8xf32>
    %53 = vector.broadcast %2 : vector<1x1x8xf32> to vector<1x8x8xf32>
    %54 = arith.addf %52, %53 : vector<1x8x8xf32>
    %cst_31 = arith.constant dense<0xFF800000> : vector<1x8xf32>
    %55 = vector.multi_reduction <maximumf>, %54, %cst_31 [2] : vector<1x8x8xf32> to vector<1x8xf32>
    %56 = vector.shape_cast %55 : vector<1x8xf32> to vector<1x8x1xf32>
    %57 = vector.broadcast %56 : vector<1x8x1xf32> to vector<1x8x8xf32>
    %58 = arith.subf %54, %57 : vector<1x8x8xf32>
    %59 = math.exp %58 : vector<1x8x8xf32>
    %cst_32 = arith.constant dense<0.000000e+00> : vector<1x8xf32>
    %60 = vector.multi_reduction <add>, %59, %cst_32 [2] : vector<1x8x8xf32> to vector<1x8xf32>
    %61 = vector.shape_cast %60 : vector<1x8xf32> to vector<1x8x1xf32>
    %62 = tpu.reciprocal %61 {approx = true} : vector<1x8x1xf32> -> vector<1x8x1xf32>
    %63 = vector.broadcast %62 : vector<1x8x1xf32> to vector<1x8x8xf32>
    %64 = arith.mulf %59, %63 : vector<1x8x8xf32>
    %65 = arith.truncf %64 : vector<1x8x8xf32> to vector<1x8x8xbf16>
    "tpu.trace_start"() <{level = 10 : i32, message = "bqk,bkd->bqd"}> : () -> ()
    %cst_33 = arith.constant dense<0.000000e+00> : vector<1x8x128xf32>
    %66 = tpu.matmul %65, %49, %cst_33 {dimension_numbers = #tpu.dot_dimension_numbers<[2], [1], [1], [2], [0, 0, 0, 1, 1, 2], [0], [0]>} : vector<1x8x8xbf16>, vector<1x8x128xbf16>, vector<1x8x128xf32> -> vector<1x8x128xf32>
    "tpu.trace_stop"() : () -> ()
    %67 = vector.shape_cast %66 : vector<1x8x128xf32> to vector<8x128xf32>
    %68 = arith.truncf %67 : vector<8x128xf32> to vector<8x128xbf16>
    %c0_34 = arith.constant 0 : index
    %c0_35 = arith.constant 0 : index
    %c0_36 = arith.constant 0 : index
    %69 = vector.load %arg9[%c0_34, %c0_35, %c0_36] : memref<2x128x128xbf16, #tpu.memory_space<vmem>>, vector<1x128x128xbf16>
    %70 = vector.shape_cast %69 : vector<1x128x128xbf16> to vector<128x128xbf16>
    %cst_37 = arith.constant dense<0.000000e+00> : vector<8x128xf32>
    %71 = tpu.matmul %68, %70, %cst_37 {dimension_numbers = #tpu.dot_dimension_numbers<[1], [0], [0], [1], [0, 0, 1, 1], [], []>} : vector<8x128xbf16>, vector<128x128xbf16>, vector<8x128xf32> -> vector<8x128xf32>
    %c0_38 = arith.constant 0 : index
    %c0_39 = arith.constant 0 : index
    %c0_40 = arith.constant 0 : index
    %72 = vector.load %arg10[%c0_38, %c0_39, %c0_40] : memref<2x1x128xf32, #tpu.memory_space<vmem>>, vector<1x1x128xf32>
    %73 = vector.shape_cast %72 : vector<1x1x128xf32> to vector<1x128xf32>
    %74 = vector.broadcast %73 : vector<1x128xf32> to vector<8x128xf32>
    %75 = arith.addf %71, %74 : vector<8x128xf32>
    %76 = vector.shape_cast %75 : vector<8x128xf32> to vector<1x8x128xf32>
    %77 = arith.addf %0, %76 : vector<1x8x128xf32>
    %78 = vector.shape_cast %77 : vector<1x8x128xf32> to vector<8x128xf32>
    %c0_41 = arith.constant 0 : index
    %c0_42 = arith.constant 0 : index
    %c0_43 = arith.constant 0 : index
    %79 = vector.load %arg11[%c0_41, %c0_42, %c0_43] : memref<2x1x128xf32, #tpu.memory_space<vmem>>, vector<1x1x128xf32>
    %80 = vector.shape_cast %79 : vector<1x1x128xf32> to vector<1x128xf32>
    %c0_44 = arith.constant 0 : index
    %c0_45 = arith.constant 0 : index
    %c0_46 = arith.constant 0 : index
    %81 = vector.load %arg12[%c0_44, %c0_45, %c0_46] : memref<2x1x128xf32, #tpu.memory_space<vmem>>, vector<1x1x128xf32>
    %82 = vector.shape_cast %81 : vector<1x1x128xf32> to vector<1x128xf32>
    %cst_47 = arith.constant dense<0.000000e+00> : vector<8xf32>
    %83 = vector.multi_reduction <add>, %78, %cst_47 [1] : vector<8x128xf32> to vector<8xf32>
    %84 = vector.shape_cast %83 : vector<8xf32> to vector<8x1xf32>
    %cst_48 = arith.constant 3.125000e-02 : f32
    %85 = vector.broadcast %cst_48 : f32 to vector<8x1xf32>
    %86 = arith.mulf %84, %85 : vector<8x1xf32>
    %87 = arith.mulf %78, %78 : vector<8x128xf32>
    %cst_49 = arith.constant dense<0.000000e+00> : vector<8xf32>
    %88 = vector.multi_reduction <add>, %87, %cst_49 [1] : vector<8x128xf32> to vector<8xf32>
    %89 = vector.shape_cast %88 : vector<8xf32> to vector<8x1xf32>
    %cst_50 = arith.constant 3.125000e-02 : f32
    %90 = vector.broadcast %cst_50 : f32 to vector<8x1xf32>
    %91 = arith.mulf %89, %90 : vector<8x1xf32>
    %92 = arith.mulf %86, %86 : vector<8x1xf32>
    %93 = arith.subf %91, %92 : vector<8x1xf32>
    %cst_51 = arith.constant 0.000000e+00 : f32
    %94 = vector.broadcast %cst_51 : f32 to vector<8x1xf32>
    %95 = arith.maximumf %93, %94 : vector<8x1xf32>
    %96 = vector.broadcast %86 : vector<8x1xf32> to vector<8x128xf32>
    %97 = arith.subf %78, %96 : vector<8x128xf32>
    %cst_52 = arith.constant 9.99999974E-6 : f32
    %98 = vector.broadcast %cst_52 : f32 to vector<8x1xf32>
    %99 = arith.addf %95, %98 : vector<8x1xf32>
    %100 = math.rsqrt %99 : vector<8x1xf32>
    %101 = vector.broadcast %100 : vector<8x1xf32> to vector<8x128xf32>
    %102 = arith.mulf %97, %101 : vector<8x128xf32>
    %103 = vector.broadcast %80 : vector<1x128xf32> to vector<8x128xf32>
    %104 = arith.mulf %102, %103 : vector<8x128xf32>
    %105 = vector.broadcast %82 : vector<1x128xf32> to vector<8x128xf32>
    %106 = arith.addf %104, %105 : vector<8x128xf32>
    %107 = arith.truncf %106 : vector<8x128xf32> to vector<8x128xbf16>
    %c0_53 = arith.constant 0 : index
    %c0_54 = arith.constant 0 : index
    %c0_55 = arith.constant 0 : index
    %108 = vector.load %arg13[%c0_53, %c0_54, %c0_55] : memref<2x128x128xbf16, #tpu.memory_space<vmem>>, vector<1x128x128xbf16>
    %109 = vector.shape_cast %108 : vector<1x128x128xbf16> to vector<128x128xbf16>
    %cst_56 = arith.constant dense<0.000000e+00> : vector<8x128xf32>
    %110 = tpu.matmul %107, %109, %cst_56 {dimension_numbers = #tpu.dot_dimension_numbers<[1], [0], [0], [1], [0, 0, 1, 1], [], []>} : vector<8x128xbf16>, vector<128x128xbf16>, vector<8x128xf32> -> vector<8x128xf32>
    %c0_57 = arith.constant 0 : index
    %c0_58 = arith.constant 0 : index
    %c0_59 = arith.constant 0 : index
    %111 = vector.load %arg14[%c0_57, %c0_58, %c0_59] : memref<2x1x128xf32, #tpu.memory_space<vmem>>, vector<1x1x128xf32>
    %112 = vector.shape_cast %111 : vector<1x1x128xf32> to vector<1x128xf32>
    %113 = vector.broadcast %112 : vector<1x128xf32> to vector<8x128xf32>
    %114 = arith.addf %110, %113 : vector<8x128xf32>
    %115 = arith.truncf %114 : vector<8x128xf32> to vector<8x128xbf16>
    %116 = vector.shape_cast %115 : vector<8x128xbf16> to vector<1x8x128xbf16>
    %c0_60 = arith.constant 0 : index
    %c0_61 = arith.constant 0 : index
    %c0_62 = arith.constant 0 : index
    %117 = vector.load %arg15[%c0_60, %c0_61, %c0_62] : memref<2x128x256xbf16, #tpu.memory_space<vmem>>, vector<1x128x256xbf16>
    %118 = vector.shape_cast %117 : vector<1x128x256xbf16> to vector<128x256xbf16>
    %cst_63 = arith.constant dense<0.000000e+00> : vector<8x256xf32>
    %119 = tpu.matmul %5, %118, %cst_63 {dimension_numbers = #tpu.dot_dimension_numbers<[1], [0], [0], [1], [0, 0, 1, 1], [], []>} : vector<8x128xbf16>, vector<128x256xbf16>, vector<8x256xf32> -> vector<8x256xf32>
    %c0_64 = arith.constant 0 : index
    %c0_65 = arith.constant 0 : index
    %c0_66 = arith.constant 0 : index
    %120 = vector.load %arg16[%c0_64, %c0_65, %c0_66] : memref<2x1x256xf32, #tpu.memory_space<vmem>>, vector<1x1x256xf32>
    %121 = vector.shape_cast %120 : vector<1x1x256xf32> to vector<1x256xf32>
    %122 = vector.broadcast %121 : vector<1x256xf32> to vector<8x256xf32>
    %123 = arith.addf %119, %122 : vector<8x256xf32>
    %124 = arith.truncf %123 : vector<8x256xf32> to vector<8x256xbf16>
    %125 = vector.extract_strided_slice %124 {offsets = [0, 0], sizes = [8, 128], strides = [1, 1]} : vector<8x256xbf16> to vector<8x128xbf16>
    %126 = vector.shape_cast %125 : vector<8x128xbf16> to vector<1x8x128xbf16>
    %127 = vector.extract_strided_slice %124 {offsets = [0, 128], sizes = [8, 128], strides = [1, 1]} : vector<8x256xbf16> to vector<8x128xbf16>
    %128 = vector.shape_cast %127 : vector<8x128xbf16> to vector<1x8x128xbf16>
    "tpu.trace_start"() <{level = 10 : i32, message = "bqd,bkd->bqk"}> : () -> ()
    %cst_67 = arith.constant dense<0.000000e+00> : vector<1x8x8xf32>
    %129 = tpu.matmul %116, %126, %cst_67 {dimension_numbers = #tpu.dot_dimension_numbers<[2], [2], [1], [1], [0, 0, 0, 1, 1, 1], [0], [0]>} : vector<1x8x128xbf16>, vector<1x8x128xbf16>, vector<1x8x8xf32> -> vector<1x8x8xf32>
    "tpu.trace_stop"() : () -> ()
    %cst_68 = arith.constant 0.176776692 : f32
    %130 = vector.broadcast %cst_68 : f32 to vector<1x8x8xf32>
    %131 = arith.mulf %129, %130 : vector<1x8x8xf32>
    %cst_69 = arith.constant dense<0xFF800000> : vector<1x8xf32>
    %132 = vector.multi_reduction <maximumf>, %131, %cst_69 [2] : vector<1x8x8xf32> to vector<1x8xf32>
    %133 = vector.shape_cast %132 : vector<1x8xf32> to vector<1x8x1xf32>
    %134 = vector.broadcast %133 : vector<1x8x1xf32> to vector<1x8x8xf32>
    %135 = arith.subf %131, %134 : vector<1x8x8xf32>
    %136 = math.exp %135 : vector<1x8x8xf32>
    %cst_70 = arith.constant dense<0.000000e+00> : vector<1x8xf32>
    %137 = vector.multi_reduction <add>, %136, %cst_70 [2] : vector<1x8x8xf32> to vector<1x8xf32>
    %138 = vector.shape_cast %137 : vector<1x8xf32> to vector<1x8x1xf32>
    %139 = tpu.reciprocal %138 {approx = true} : vector<1x8x1xf32> -> vector<1x8x1xf32>
    %140 = vector.broadcast %139 : vector<1x8x1xf32> to vector<1x8x8xf32>
    %141 = arith.mulf %136, %140 : vector<1x8x8xf32>
    %142 = arith.truncf %141 : vector<1x8x8xf32> to vector<1x8x8xbf16>
    "tpu.trace_start"() <{level = 10 : i32, message = "bqk,bkd->bqd"}> : () -> ()
    %cst_71 = arith.constant dense<0.000000e+00> : vector<1x8x128xf32>
    %143 = tpu.matmul %142, %128, %cst_71 {dimension_numbers = #tpu.dot_dimension_numbers<[2], [1], [1], [2], [0, 0, 0, 1, 1, 2], [0], [0]>} : vector<1x8x8xbf16>, vector<1x8x128xbf16>, vector<1x8x128xf32> -> vector<1x8x128xf32>
    "tpu.trace_stop"() : () -> ()
    %144 = vector.shape_cast %143 : vector<1x8x128xf32> to vector<8x128xf32>
    %145 = arith.truncf %144 : vector<8x128xf32> to vector<8x128xbf16>
    %c0_72 = arith.constant 0 : index
    %c0_73 = arith.constant 0 : index
    %c0_74 = arith.constant 0 : index
    %146 = vector.load %arg17[%c0_72, %c0_73, %c0_74] : memref<2x128x128xbf16, #tpu.memory_space<vmem>>, vector<1x128x128xbf16>
    %147 = vector.shape_cast %146 : vector<1x128x128xbf16> to vector<128x128xbf16>
    %cst_75 = arith.constant dense<0.000000e+00> : vector<8x128xf32>
    %148 = tpu.matmul %145, %147, %cst_75 {dimension_numbers = #tpu.dot_dimension_numbers<[1], [0], [0], [1], [0, 0, 1, 1], [], []>} : vector<8x128xbf16>, vector<128x128xbf16>, vector<8x128xf32> -> vector<8x128xf32>
    %c0_76 = arith.constant 0 : index
    %c0_77 = arith.constant 0 : index
    %c0_78 = arith.constant 0 : index
    %149 = vector.load %arg18[%c0_76, %c0_77, %c0_78] : memref<2x1x128xf32, #tpu.memory_space<vmem>>, vector<1x1x128xf32>
    %150 = vector.shape_cast %149 : vector<1x1x128xf32> to vector<1x128xf32>
    %151 = vector.broadcast %150 : vector<1x128xf32> to vector<8x128xf32>
    %152 = arith.addf %148, %151 : vector<8x128xf32>
    %153 = vector.shape_cast %152 : vector<8x128xf32> to vector<1x8x128xf32>
    %154 = arith.addf %77, %153 : vector<1x8x128xf32>
    %155 = vector.shape_cast %154 : vector<1x8x128xf32> to vector<8x128xf32>
    %c0_79 = arith.constant 0 : index
    %c0_80 = arith.constant 0 : index
    %c0_81 = arith.constant 0 : index
    %156 = vector.load %arg19[%c0_79, %c0_80, %c0_81] : memref<2x1x128xf32, #tpu.memory_space<vmem>>, vector<1x1x128xf32>
    %157 = vector.shape_cast %156 : vector<1x1x128xf32> to vector<1x128xf32>
    %c0_82 = arith.constant 0 : index
    %c0_83 = arith.constant 0 : index
    %c0_84 = arith.constant 0 : index
    %158 = vector.load %arg20[%c0_82, %c0_83, %c0_84] : memref<2x1x128xf32, #tpu.memory_space<vmem>>, vector<1x1x128xf32>
    %159 = vector.shape_cast %158 : vector<1x1x128xf32> to vector<1x128xf32>
    %cst_85 = arith.constant dense<0.000000e+00> : vector<8xf32>
    %160 = vector.multi_reduction <add>, %155, %cst_85 [1] : vector<8x128xf32> to vector<8xf32>
    %161 = vector.shape_cast %160 : vector<8xf32> to vector<8x1xf32>
    %cst_86 = arith.constant 3.125000e-02 : f32
    %162 = vector.broadcast %cst_86 : f32 to vector<8x1xf32>
    %163 = arith.mulf %161, %162 : vector<8x1xf32>
    %164 = arith.mulf %155, %155 : vector<8x128xf32>
    %cst_87 = arith.constant dense<0.000000e+00> : vector<8xf32>
    %165 = vector.multi_reduction <add>, %164, %cst_87 [1] : vector<8x128xf32> to vector<8xf32>
    %166 = vector.shape_cast %165 : vector<8xf32> to vector<8x1xf32>
    %cst_88 = arith.constant 3.125000e-02 : f32
    %167 = vector.broadcast %cst_88 : f32 to vector<8x1xf32>
    %168 = arith.mulf %166, %167 : vector<8x1xf32>
    %169 = arith.mulf %163, %163 : vector<8x1xf32>
    %170 = arith.subf %168, %169 : vector<8x1xf32>
    %cst_89 = arith.constant 0.000000e+00 : f32
    %171 = vector.broadcast %cst_89 : f32 to vector<8x1xf32>
    %172 = arith.maximumf %170, %171 : vector<8x1xf32>
    %173 = vector.broadcast %163 : vector<8x1xf32> to vector<8x128xf32>
    %174 = arith.subf %155, %173 : vector<8x128xf32>
    %cst_90 = arith.constant 9.99999974E-6 : f32
    %175 = vector.broadcast %cst_90 : f32 to vector<8x1xf32>
    %176 = arith.addf %172, %175 : vector<8x1xf32>
    %177 = math.rsqrt %176 : vector<8x1xf32>
    %178 = vector.broadcast %177 : vector<8x1xf32> to vector<8x128xf32>
    %179 = arith.mulf %174, %178 : vector<8x128xf32>
    %180 = vector.broadcast %157 : vector<1x128xf32> to vector<8x128xf32>
    %181 = arith.mulf %179, %180 : vector<8x128xf32>
    %182 = vector.broadcast %159 : vector<1x128xf32> to vector<8x128xf32>
    %183 = arith.addf %181, %182 : vector<8x128xf32>
    %184 = arith.truncf %183 : vector<8x128xf32> to vector<8x128xbf16>
    %c0_91 = arith.constant 0 : index
    %c0_92 = arith.constant 0 : index
    %c0_93 = arith.constant 0 : index
    %185 = vector.load %arg21[%c0_91, %c0_92, %c0_93] : memref<2x128x128xbf16, #tpu.memory_space<vmem>>, vector<1x128x128xbf16>
    %186 = vector.shape_cast %185 : vector<1x128x128xbf16> to vector<128x128xbf16>
    %cst_94 = arith.constant dense<0.000000e+00> : vector<8x128xf32>
    %187 = tpu.matmul %184, %186, %cst_94 {dimension_numbers = #tpu.dot_dimension_numbers<[1], [0], [0], [1], [0, 0, 1, 1], [], []>} : vector<8x128xbf16>, vector<128x128xbf16>, vector<8x128xf32> -> vector<8x128xf32>
    %c0_95 = arith.constant 0 : index
    %c0_96 = arith.constant 0 : index
    %c0_97 = arith.constant 0 : index
    %188 = vector.load %arg22[%c0_95, %c0_96, %c0_97] : memref<2x1x128xf32, #tpu.memory_space<vmem>>, vector<1x1x128xf32>
    %189 = vector.shape_cast %188 : vector<1x1x128xf32> to vector<1x128xf32>
    %190 = vector.broadcast %189 : vector<1x128xf32> to vector<8x128xf32>
    %191 = arith.addf %187, %190 : vector<8x128xf32>
    %cst_98 = arith.constant 0.000000e+00 : f32
    %192 = vector.broadcast %cst_98 : f32 to vector<8x128xf32>
    %193 = arith.maximumf %191, %192 : vector<8x128xf32>
    %194 = arith.truncf %193 : vector<8x128xf32> to vector<8x128xbf16>
    %c0_99 = arith.constant 0 : index
    %c0_100 = arith.constant 0 : index
    %c0_101 = arith.constant 0 : index
    %195 = vector.load %arg23[%c0_99, %c0_100, %c0_101] : memref<2x128x128xbf16, #tpu.memory_space<vmem>>, vector<1x128x128xbf16>
    %196 = vector.shape_cast %195 : vector<1x128x128xbf16> to vector<128x128xbf16>
    %cst_102 = arith.constant dense<0.000000e+00> : vector<8x128xf32>
    %197 = tpu.matmul %194, %196, %cst_102 {dimension_numbers = #tpu.dot_dimension_numbers<[1], [0], [0], [1], [0, 0, 1, 1], [], []>} : vector<8x128xbf16>, vector<128x128xbf16>, vector<8x128xf32> -> vector<8x128xf32>
    %c0_103 = arith.constant 0 : index
    %c0_104 = arith.constant 0 : index
    %c0_105 = arith.constant 0 : index
    %198 = vector.load %arg24[%c0_103, %c0_104, %c0_105] : memref<2x1x128xf32, #tpu.memory_space<vmem>>, vector<1x1x128xf32>
    %199 = vector.shape_cast %198 : vector<1x1x128xf32> to vector<1x128xf32>
    %200 = vector.broadcast %199 : vector<1x128xf32> to vector<8x128xf32>
    %201 = arith.addf %197, %200 : vector<8x128xf32>
    %202 = vector.shape_cast %201 : vector<8x128xf32> to vector<1x8x128xf32>
    %203 = arith.addf %154, %202 : vector<1x8x128xf32>
    %204 = vector.shape_cast %203 : vector<1x8x128xf32> to vector<8x128xf32>
    %c1 = arith.constant 1 : index
    %c0_106 = arith.constant 0 : index
    %c0_107 = arith.constant 0 : index
    %205 = vector.load %arg5[%c1, %c0_106, %c0_107] : memref<2x1x128xf32, #tpu.memory_space<vmem>>, vector<1x1x128xf32>
    %206 = vector.shape_cast %205 : vector<1x1x128xf32> to vector<1x128xf32>
    %c1_108 = arith.constant 1 : index
    %c0_109 = arith.constant 0 : index
    %c0_110 = arith.constant 0 : index
    %207 = vector.load %arg6[%c1_108, %c0_109, %c0_110] : memref<2x1x128xf32, #tpu.memory_space<vmem>>, vector<1x1x128xf32>
    %208 = vector.shape_cast %207 : vector<1x1x128xf32> to vector<1x128xf32>
    %cst_111 = arith.constant dense<0.000000e+00> : vector<8xf32>
    %209 = vector.multi_reduction <add>, %204, %cst_111 [1] : vector<8x128xf32> to vector<8xf32>
    %210 = vector.shape_cast %209 : vector<8xf32> to vector<8x1xf32>
    %cst_112 = arith.constant 3.125000e-02 : f32
    %211 = vector.broadcast %cst_112 : f32 to vector<8x1xf32>
    %212 = arith.mulf %210, %211 : vector<8x1xf32>
    %213 = arith.mulf %204, %204 : vector<8x128xf32>
    %cst_113 = arith.constant dense<0.000000e+00> : vector<8xf32>
    %214 = vector.multi_reduction <add>, %213, %cst_113 [1] : vector<8x128xf32> to vector<8xf32>
    %215 = vector.shape_cast %214 : vector<8xf32> to vector<8x1xf32>
    %cst_114 = arith.constant 3.125000e-02 : f32
    %216 = vector.broadcast %cst_114 : f32 to vector<8x1xf32>
    %217 = arith.mulf %215, %216 : vector<8x1xf32>
    %218 = arith.mulf %212, %212 : vector<8x1xf32>
    %219 = arith.subf %217, %218 : vector<8x1xf32>
    %cst_115 = arith.constant 0.000000e+00 : f32
    %220 = vector.broadcast %cst_115 : f32 to vector<8x1xf32>
    %221 = arith.maximumf %219, %220 : vector<8x1xf32>
    %222 = vector.broadcast %212 : vector<8x1xf32> to vector<8x128xf32>
    %223 = arith.subf %204, %222 : vector<8x128xf32>
    %cst_116 = arith.constant 9.99999974E-6 : f32
    %224 = vector.broadcast %cst_116 : f32 to vector<8x1xf32>
    %225 = arith.addf %221, %224 : vector<8x1xf32>
    %226 = math.rsqrt %225 : vector<8x1xf32>
    %227 = vector.broadcast %226 : vector<8x1xf32> to vector<8x128xf32>
    %228 = arith.mulf %223, %227 : vector<8x128xf32>
    %229 = vector.broadcast %206 : vector<1x128xf32> to vector<8x128xf32>
    %230 = arith.mulf %228, %229 : vector<8x128xf32>
    %231 = vector.broadcast %208 : vector<1x128xf32> to vector<8x128xf32>
    %232 = arith.addf %230, %231 : vector<8x128xf32>
    %233 = arith.truncf %232 : vector<8x128xf32> to vector<8x128xbf16>
    %c1_117 = arith.constant 1 : index
    %c0_118 = arith.constant 0 : index
    %c0_119 = arith.constant 0 : index
    %234 = vector.load %arg7[%c1_117, %c0_118, %c0_119] : memref<2x128x384xbf16, #tpu.memory_space<vmem>>, vector<1x128x384xbf16>
    %235 = vector.shape_cast %234 : vector<1x128x384xbf16> to vector<128x384xbf16>
    %cst_120 = arith.constant dense<0.000000e+00> : vector<8x384xf32>
    %236 = tpu.matmul %233, %235, %cst_120 {dimension_numbers = #tpu.dot_dimension_numbers<[1], [0], [0], [1], [0, 0, 1, 1], [], []>} : vector<8x128xbf16>, vector<128x384xbf16>, vector<8x384xf32> -> vector<8x384xf32>
    %c1_121 = arith.constant 1 : index
    %c0_122 = arith.constant 0 : index
    %c0_123 = arith.constant 0 : index
    %237 = vector.load %arg8[%c1_121, %c0_122, %c0_123] : memref<2x1x384xf32, #tpu.memory_space<vmem>>, vector<1x1x384xf32>
    %238 = vector.shape_cast %237 : vector<1x1x384xf32> to vector<1x384xf32>
    %239 = vector.broadcast %238 : vector<1x384xf32> to vector<8x384xf32>
    %240 = arith.addf %236, %239 : vector<8x384xf32>
    %241 = arith.truncf %240 : vector<8x384xf32> to vector<8x384xbf16>
    %242 = vector.extract_strided_slice %241 {offsets = [0, 0], sizes = [8, 128], strides = [1, 1]} : vector<8x384xbf16> to vector<8x128xbf16>
    %243 = vector.shape_cast %242 : vector<8x128xbf16> to vector<1x8x128xbf16>
    %244 = vector.extract_strided_slice %241 {offsets = [0, 128], sizes = [8, 128], strides = [1, 1]} : vector<8x384xbf16> to vector<8x128xbf16>
    %245 = vector.shape_cast %244 : vector<8x128xbf16> to vector<1x8x128xbf16>
    %246 = vector.extract_strided_slice %241 {offsets = [0, 256], sizes = [8, 128], strides = [1, 1]} : vector<8x384xbf16> to vector<8x128xbf16>
    %247 = vector.shape_cast %246 : vector<8x128xbf16> to vector<1x8x128xbf16>
    "tpu.trace_start"() <{level = 10 : i32, message = "bqd,bkd->bqk"}> : () -> ()
    %cst_124 = arith.constant dense<0.000000e+00> : vector<1x8x8xf32>
    %248 = tpu.matmul %243, %245, %cst_124 {dimension_numbers = #tpu.dot_dimension_numbers<[2], [2], [1], [1], [0, 0, 0, 1, 1, 1], [0], [0]>} : vector<1x8x128xbf16>, vector<1x8x128xbf16>, vector<1x8x8xf32> -> vector<1x8x8xf32>
    "tpu.trace_stop"() : () -> ()
    %cst_125 = arith.constant 0.176776692 : f32
    %249 = vector.broadcast %cst_125 : f32 to vector<1x8x8xf32>
    %250 = arith.mulf %248, %249 : vector<1x8x8xf32>
    %251 = vector.broadcast %2 : vector<1x1x8xf32> to vector<1x8x8xf32>
    %252 = arith.addf %250, %251 : vector<1x8x8xf32>
    %cst_126 = arith.constant dense<0xFF800000> : vector<1x8xf32>
    %253 = vector.multi_reduction <maximumf>, %252, %cst_126 [2] : vector<1x8x8xf32> to vector<1x8xf32>
    %254 = vector.shape_cast %253 : vector<1x8xf32> to vector<1x8x1xf32>
    %255 = vector.broadcast %254 : vector<1x8x1xf32> to vector<1x8x8xf32>
    %256 = arith.subf %252, %255 : vector<1x8x8xf32>
    %257 = math.exp %256 : vector<1x8x8xf32>
    %cst_127 = arith.constant dense<0.000000e+00> : vector<1x8xf32>
    %258 = vector.multi_reduction <add>, %257, %cst_127 [2] : vector<1x8x8xf32> to vector<1x8xf32>
    %259 = vector.shape_cast %258 : vector<1x8xf32> to vector<1x8x1xf32>
    %260 = tpu.reciprocal %259 {approx = true} : vector<1x8x1xf32> -> vector<1x8x1xf32>
    %261 = vector.broadcast %260 : vector<1x8x1xf32> to vector<1x8x8xf32>
    %262 = arith.mulf %257, %261 : vector<1x8x8xf32>
    %263 = arith.truncf %262 : vector<1x8x8xf32> to vector<1x8x8xbf16>
    "tpu.trace_start"() <{level = 10 : i32, message = "bqk,bkd->bqd"}> : () -> ()
    %cst_128 = arith.constant dense<0.000000e+00> : vector<1x8x128xf32>
    %264 = tpu.matmul %263, %247, %cst_128 {dimension_numbers = #tpu.dot_dimension_numbers<[2], [1], [1], [2], [0, 0, 0, 1, 1, 2], [0], [0]>} : vector<1x8x8xbf16>, vector<1x8x128xbf16>, vector<1x8x128xf32> -> vector<1x8x128xf32>
    "tpu.trace_stop"() : () -> ()
    %265 = vector.shape_cast %264 : vector<1x8x128xf32> to vector<8x128xf32>
    %266 = arith.truncf %265 : vector<8x128xf32> to vector<8x128xbf16>
    %c1_129 = arith.constant 1 : index
    %c0_130 = arith.constant 0 : index
    %c0_131 = arith.constant 0 : index
    %267 = vector.load %arg9[%c1_129, %c0_130, %c0_131] : memref<2x128x128xbf16, #tpu.memory_space<vmem>>, vector<1x128x128xbf16>
    %268 = vector.shape_cast %267 : vector<1x128x128xbf16> to vector<128x128xbf16>
    %cst_132 = arith.constant dense<0.000000e+00> : vector<8x128xf32>
    %269 = tpu.matmul %266, %268, %cst_132 {dimension_numbers = #tpu.dot_dimension_numbers<[1], [0], [0], [1], [0, 0, 1, 1], [], []>} : vector<8x128xbf16>, vector<128x128xbf16>, vector<8x128xf32> -> vector<8x128xf32>
    %c1_133 = arith.constant 1 : index
    %c0_134 = arith.constant 0 : index
    %c0_135 = arith.constant 0 : index
    %270 = vector.load %arg10[%c1_133, %c0_134, %c0_135] : memref<2x1x128xf32, #tpu.memory_space<vmem>>, vector<1x1x128xf32>
    %271 = vector.shape_cast %270 : vector<1x1x128xf32> to vector<1x128xf32>
    %272 = vector.broadcast %271 : vector<1x128xf32> to vector<8x128xf32>
    %273 = arith.addf %269, %272 : vector<8x128xf32>
    %274 = vector.shape_cast %273 : vector<8x128xf32> to vector<1x8x128xf32>
    %275 = arith.addf %203, %274 : vector<1x8x128xf32>
    %276 = vector.shape_cast %275 : vector<1x8x128xf32> to vector<8x128xf32>
    %c1_136 = arith.constant 1 : index
    %c0_137 = arith.constant 0 : index
    %c0_138 = arith.constant 0 : index
    %277 = vector.load %arg11[%c1_136, %c0_137, %c0_138] : memref<2x1x128xf32, #tpu.memory_space<vmem>>, vector<1x1x128xf32>
    %278 = vector.shape_cast %277 : vector<1x1x128xf32> to vector<1x128xf32>
    %c1_139 = arith.constant 1 : index
    %c0_140 = arith.constant 0 : index
    %c0_141 = arith.constant 0 : index
    %279 = vector.load %arg12[%c1_139, %c0_140, %c0_141] : memref<2x1x128xf32, #tpu.memory_space<vmem>>, vector<1x1x128xf32>
    %280 = vector.shape_cast %279 : vector<1x1x128xf32> to vector<1x128xf32>
    %cst_142 = arith.constant dense<0.000000e+00> : vector<8xf32>
    %281 = vector.multi_reduction <add>, %276, %cst_142 [1] : vector<8x128xf32> to vector<8xf32>
    %282 = vector.shape_cast %281 : vector<8xf32> to vector<8x1xf32>
    %cst_143 = arith.constant 3.125000e-02 : f32
    %283 = vector.broadcast %cst_143 : f32 to vector<8x1xf32>
    %284 = arith.mulf %282, %283 : vector<8x1xf32>
    %285 = arith.mulf %276, %276 : vector<8x128xf32>
    %cst_144 = arith.constant dense<0.000000e+00> : vector<8xf32>
    %286 = vector.multi_reduction <add>, %285, %cst_144 [1] : vector<8x128xf32> to vector<8xf32>
    %287 = vector.shape_cast %286 : vector<8xf32> to vector<8x1xf32>
    %cst_145 = arith.constant 3.125000e-02 : f32
    %288 = vector.broadcast %cst_145 : f32 to vector<8x1xf32>
    %289 = arith.mulf %287, %288 : vector<8x1xf32>
    %290 = arith.mulf %284, %284 : vector<8x1xf32>
    %291 = arith.subf %289, %290 : vector<8x1xf32>
    %cst_146 = arith.constant 0.000000e+00 : f32
    %292 = vector.broadcast %cst_146 : f32 to vector<8x1xf32>
    %293 = arith.maximumf %291, %292 : vector<8x1xf32>
    %294 = vector.broadcast %284 : vector<8x1xf32> to vector<8x128xf32>
    %295 = arith.subf %276, %294 : vector<8x128xf32>
    %cst_147 = arith.constant 9.99999974E-6 : f32
    %296 = vector.broadcast %cst_147 : f32 to vector<8x1xf32>
    %297 = arith.addf %293, %296 : vector<8x1xf32>
    %298 = math.rsqrt %297 : vector<8x1xf32>
    %299 = vector.broadcast %298 : vector<8x1xf32> to vector<8x128xf32>
    %300 = arith.mulf %295, %299 : vector<8x128xf32>
    %301 = vector.broadcast %278 : vector<1x128xf32> to vector<8x128xf32>
    %302 = arith.mulf %300, %301 : vector<8x128xf32>
    %303 = vector.broadcast %280 : vector<1x128xf32> to vector<8x128xf32>
    %304 = arith.addf %302, %303 : vector<8x128xf32>
    %305 = arith.truncf %304 : vector<8x128xf32> to vector<8x128xbf16>
    %c1_148 = arith.constant 1 : index
    %c0_149 = arith.constant 0 : index
    %c0_150 = arith.constant 0 : index
    %306 = vector.load %arg13[%c1_148, %c0_149, %c0_150] : memref<2x128x128xbf16, #tpu.memory_space<vmem>>, vector<1x128x128xbf16>
    %307 = vector.shape_cast %306 : vector<1x128x128xbf16> to vector<128x128xbf16>
    %cst_151 = arith.constant dense<0.000000e+00> : vector<8x128xf32>
    %308 = tpu.matmul %305, %307, %cst_151 {dimension_numbers = #tpu.dot_dimension_numbers<[1], [0], [0], [1], [0, 0, 1, 1], [], []>} : vector<8x128xbf16>, vector<128x128xbf16>, vector<8x128xf32> -> vector<8x128xf32>
    %c1_152 = arith.constant 1 : index
    %c0_153 = arith.constant 0 : index
    %c0_154 = arith.constant 0 : index
    %309 = vector.load %arg14[%c1_152, %c0_153, %c0_154] : memref<2x1x128xf32, #tpu.memory_space<vmem>>, vector<1x1x128xf32>
    %310 = vector.shape_cast %309 : vector<1x1x128xf32> to vector<1x128xf32>
    %311 = vector.broadcast %310 : vector<1x128xf32> to vector<8x128xf32>
    %312 = arith.addf %308, %311 : vector<8x128xf32>
    %313 = arith.truncf %312 : vector<8x128xf32> to vector<8x128xbf16>
    %314 = vector.shape_cast %313 : vector<8x128xbf16> to vector<1x8x128xbf16>
    %c1_155 = arith.constant 1 : index
    %c0_156 = arith.constant 0 : index
    %c0_157 = arith.constant 0 : index
    %315 = vector.load %arg15[%c1_155, %c0_156, %c0_157] : memref<2x128x256xbf16, #tpu.memory_space<vmem>>, vector<1x128x256xbf16>
    %316 = vector.shape_cast %315 : vector<1x128x256xbf16> to vector<128x256xbf16>
    %cst_158 = arith.constant dense<0.000000e+00> : vector<8x256xf32>
    %317 = tpu.matmul %5, %316, %cst_158 {dimension_numbers = #tpu.dot_dimension_numbers<[1], [0], [0], [1], [0, 0, 1, 1], [], []>} : vector<8x128xbf16>, vector<128x256xbf16>, vector<8x256xf32> -> vector<8x256xf32>
    %c1_159 = arith.constant 1 : index
    %c0_160 = arith.constant 0 : index
    %c0_161 = arith.constant 0 : index
    %318 = vector.load %arg16[%c1_159, %c0_160, %c0_161] : memref<2x1x256xf32, #tpu.memory_space<vmem>>, vector<1x1x256xf32>
    %319 = vector.shape_cast %318 : vector<1x1x256xf32> to vector<1x256xf32>
    %320 = vector.broadcast %319 : vector<1x256xf32> to vector<8x256xf32>
    %321 = arith.addf %317, %320 : vector<8x256xf32>
    %322 = arith.truncf %321 : vector<8x256xf32> to vector<8x256xbf16>
    %323 = vector.extract_strided_slice %322 {offsets = [0, 0], sizes = [8, 128], strides = [1, 1]} : vector<8x256xbf16> to vector<8x128xbf16>
    %324 = vector.shape_cast %323 : vector<8x128xbf16> to vector<1x8x128xbf16>
    %325 = vector.extract_strided_slice %322 {offsets = [0, 128], sizes = [8, 128], strides = [1, 1]} : vector<8x256xbf16> to vector<8x128xbf16>
    %326 = vector.shape_cast %325 : vector<8x128xbf16> to vector<1x8x128xbf16>
    "tpu.trace_start"() <{level = 10 : i32, message = "bqd,bkd->bqk"}> : () -> ()
    %cst_162 = arith.constant dense<0.000000e+00> : vector<1x8x8xf32>
    %327 = tpu.matmul %314, %324, %cst_162 {dimension_numbers = #tpu.dot_dimension_numbers<[2], [2], [1], [1], [0, 0, 0, 1, 1, 1], [0], [0]>} : vector<1x8x128xbf16>, vector<1x8x128xbf16>, vector<1x8x8xf32> -> vector<1x8x8xf32>
    "tpu.trace_stop"() : () -> ()
    %cst_163 = arith.constant 0.176776692 : f32
    %328 = vector.broadcast %cst_163 : f32 to vector<1x8x8xf32>
    %329 = arith.mulf %327, %328 : vector<1x8x8xf32>
    %cst_164 = arith.constant dense<0xFF800000> : vector<1x8xf32>
    %330 = vector.multi_reduction <maximumf>, %329, %cst_164 [2] : vector<1x8x8xf32> to vector<1x8xf32>
    %331 = vector.shape_cast %330 : vector<1x8xf32> to vector<1x8x1xf32>
    %332 = vector.broadcast %331 : vector<1x8x1xf32> to vector<1x8x8xf32>
    %333 = arith.subf %329, %332 : vector<1x8x8xf32>
    %334 = math.exp %333 : vector<1x8x8xf32>
    %cst_165 = arith.constant dense<0.000000e+00> : vector<1x8xf32>
    %335 = vector.multi_reduction <add>, %334, %cst_165 [2] : vector<1x8x8xf32> to vector<1x8xf32>
    %336 = vector.shape_cast %335 : vector<1x8xf32> to vector<1x8x1xf32>
    %337 = tpu.reciprocal %336 {approx = true} : vector<1x8x1xf32> -> vector<1x8x1xf32>
    %338 = vector.broadcast %337 : vector<1x8x1xf32> to vector<1x8x8xf32>
    %339 = arith.mulf %334, %338 : vector<1x8x8xf32>
    %340 = arith.truncf %339 : vector<1x8x8xf32> to vector<1x8x8xbf16>
    "tpu.trace_start"() <{level = 10 : i32, message = "bqk,bkd->bqd"}> : () -> ()
    %cst_166 = arith.constant dense<0.000000e+00> : vector<1x8x128xf32>
    %341 = tpu.matmul %340, %326, %cst_166 {dimension_numbers = #tpu.dot_dimension_numbers<[2], [1], [1], [2], [0, 0, 0, 1, 1, 2], [0], [0]>} : vector<1x8x8xbf16>, vector<1x8x128xbf16>, vector<1x8x128xf32> -> vector<1x8x128xf32>
    "tpu.trace_stop"() : () -> ()
    %342 = vector.shape_cast %341 : vector<1x8x128xf32> to vector<8x128xf32>
    %343 = arith.truncf %342 : vector<8x128xf32> to vector<8x128xbf16>
    %c1_167 = arith.constant 1 : index
    %c0_168 = arith.constant 0 : index
    %c0_169 = arith.constant 0 : index
    %344 = vector.load %arg17[%c1_167, %c0_168, %c0_169] : memref<2x128x128xbf16, #tpu.memory_space<vmem>>, vector<1x128x128xbf16>
    %345 = vector.shape_cast %344 : vector<1x128x128xbf16> to vector<128x128xbf16>
    %cst_170 = arith.constant dense<0.000000e+00> : vector<8x128xf32>
    %346 = tpu.matmul %343, %345, %cst_170 {dimension_numbers = #tpu.dot_dimension_numbers<[1], [0], [0], [1], [0, 0, 1, 1], [], []>} : vector<8x128xbf16>, vector<128x128xbf16>, vector<8x128xf32> -> vector<8x128xf32>
    %c1_171 = arith.constant 1 : index
    %c0_172 = arith.constant 0 : index
    %c0_173 = arith.constant 0 : index
    %347 = vector.load %arg18[%c1_171, %c0_172, %c0_173] : memref<2x1x128xf32, #tpu.memory_space<vmem>>, vector<1x1x128xf32>
    %348 = vector.shape_cast %347 : vector<1x1x128xf32> to vector<1x128xf32>
    %349 = vector.broadcast %348 : vector<1x128xf32> to vector<8x128xf32>
    %350 = arith.addf %346, %349 : vector<8x128xf32>
    %351 = vector.shape_cast %350 : vector<8x128xf32> to vector<1x8x128xf32>
    %352 = arith.addf %275, %351 : vector<1x8x128xf32>
    %353 = vector.shape_cast %352 : vector<1x8x128xf32> to vector<8x128xf32>
    %c1_174 = arith.constant 1 : index
    %c0_175 = arith.constant 0 : index
    %c0_176 = arith.constant 0 : index
    %354 = vector.load %arg19[%c1_174, %c0_175, %c0_176] : memref<2x1x128xf32, #tpu.memory_space<vmem>>, vector<1x1x128xf32>
    %355 = vector.shape_cast %354 : vector<1x1x128xf32> to vector<1x128xf32>
    %c1_177 = arith.constant 1 : index
    %c0_178 = arith.constant 0 : index
    %c0_179 = arith.constant 0 : index
    %356 = vector.load %arg20[%c1_177, %c0_178, %c0_179] : memref<2x1x128xf32, #tpu.memory_space<vmem>>, vector<1x1x128xf32>
    %357 = vector.shape_cast %356 : vector<1x1x128xf32> to vector<1x128xf32>
    %cst_180 = arith.constant dense<0.000000e+00> : vector<8xf32>
    %358 = vector.multi_reduction <add>, %353, %cst_180 [1] : vector<8x128xf32> to vector<8xf32>
    %359 = vector.shape_cast %358 : vector<8xf32> to vector<8x1xf32>
    %cst_181 = arith.constant 3.125000e-02 : f32
    %360 = vector.broadcast %cst_181 : f32 to vector<8x1xf32>
    %361 = arith.mulf %359, %360 : vector<8x1xf32>
    %362 = arith.mulf %353, %353 : vector<8x128xf32>
    %cst_182 = arith.constant dense<0.000000e+00> : vector<8xf32>
    %363 = vector.multi_reduction <add>, %362, %cst_182 [1] : vector<8x128xf32> to vector<8xf32>
    %364 = vector.shape_cast %363 : vector<8xf32> to vector<8x1xf32>
    %cst_183 = arith.constant 3.125000e-02 : f32
    %365 = vector.broadcast %cst_183 : f32 to vector<8x1xf32>
    %366 = arith.mulf %364, %365 : vector<8x1xf32>
    %367 = arith.mulf %361, %361 : vector<8x1xf32>
    %368 = arith.subf %366, %367 : vector<8x1xf32>
    %cst_184 = arith.constant 0.000000e+00 : f32
    %369 = vector.broadcast %cst_184 : f32 to vector<8x1xf32>
    %370 = arith.maximumf %368, %369 : vector<8x1xf32>
    %371 = vector.broadcast %361 : vector<8x1xf32> to vector<8x128xf32>
    %372 = arith.subf %353, %371 : vector<8x128xf32>
    %cst_185 = arith.constant 9.99999974E-6 : f32
    %373 = vector.broadcast %cst_185 : f32 to vector<8x1xf32>
    %374 = arith.addf %370, %373 : vector<8x1xf32>
    %375 = math.rsqrt %374 : vector<8x1xf32>
    %376 = vector.broadcast %375 : vector<8x1xf32> to vector<8x128xf32>
    %377 = arith.mulf %372, %376 : vector<8x128xf32>
    %378 = vector.broadcast %355 : vector<1x128xf32> to vector<8x128xf32>
    %379 = arith.mulf %377, %378 : vector<8x128xf32>
    %380 = vector.broadcast %357 : vector<1x128xf32> to vector<8x128xf32>
    %381 = arith.addf %379, %380 : vector<8x128xf32>
    %382 = arith.truncf %381 : vector<8x128xf32> to vector<8x128xbf16>
    %c1_186 = arith.constant 1 : index
    %c0_187 = arith.constant 0 : index
    %c0_188 = arith.constant 0 : index
    %383 = vector.load %arg21[%c1_186, %c0_187, %c0_188] : memref<2x128x128xbf16, #tpu.memory_space<vmem>>, vector<1x128x128xbf16>
    %384 = vector.shape_cast %383 : vector<1x128x128xbf16> to vector<128x128xbf16>
    %cst_189 = arith.constant dense<0.000000e+00> : vector<8x128xf32>
    %385 = tpu.matmul %382, %384, %cst_189 {dimension_numbers = #tpu.dot_dimension_numbers<[1], [0], [0], [1], [0, 0, 1, 1], [], []>} : vector<8x128xbf16>, vector<128x128xbf16>, vector<8x128xf32> -> vector<8x128xf32>
    %c1_190 = arith.constant 1 : index
    %c0_191 = arith.constant 0 : index
    %c0_192 = arith.constant 0 : index
    %386 = vector.load %arg22[%c1_190, %c0_191, %c0_192] : memref<2x1x128xf32, #tpu.memory_space<vmem>>, vector<1x1x128xf32>
    %387 = vector.shape_cast %386 : vector<1x1x128xf32> to vector<1x128xf32>
    %388 = vector.broadcast %387 : vector<1x128xf32> to vector<8x128xf32>
    %389 = arith.addf %385, %388 : vector<8x128xf32>
    %cst_193 = arith.constant 0.000000e+00 : f32
    %390 = vector.broadcast %cst_193 : f32 to vector<8x128xf32>
    %391 = arith.maximumf %389, %390 : vector<8x128xf32>
    %392 = arith.truncf %391 : vector<8x128xf32> to vector<8x128xbf16>
    %c1_194 = arith.constant 1 : index
    %c0_195 = arith.constant 0 : index
    %c0_196 = arith.constant 0 : index
    %393 = vector.load %arg23[%c1_194, %c0_195, %c0_196] : memref<2x128x128xbf16, #tpu.memory_space<vmem>>, vector<1x128x128xbf16>
    %394 = vector.shape_cast %393 : vector<1x128x128xbf16> to vector<128x128xbf16>
    %cst_197 = arith.constant dense<0.000000e+00> : vector<8x128xf32>
    %395 = tpu.matmul %392, %394, %cst_197 {dimension_numbers = #tpu.dot_dimension_numbers<[1], [0], [0], [1], [0, 0, 1, 1], [], []>} : vector<8x128xbf16>, vector<128x128xbf16>, vector<8x128xf32> -> vector<8x128xf32>
    %c1_198 = arith.constant 1 : index
    %c0_199 = arith.constant 0 : index
    %c0_200 = arith.constant 0 : index
    %396 = vector.load %arg24[%c1_198, %c0_199, %c0_200] : memref<2x1x128xf32, #tpu.memory_space<vmem>>, vector<1x1x128xf32>
    %397 = vector.shape_cast %396 : vector<1x1x128xf32> to vector<1x128xf32>
    %398 = vector.broadcast %397 : vector<1x128xf32> to vector<8x128xf32>
    %399 = arith.addf %395, %398 : vector<8x128xf32>
    %400 = vector.shape_cast %399 : vector<8x128xf32> to vector<1x8x128xf32>
    %401 = arith.addf %352, %400 : vector<1x8x128xf32>
    %402 = vector.shape_cast %401 : vector<1x8x128xf32> to vector<8x128xf32>
    %403 = arith.truncf %402 : vector<8x128xf32> to vector<8x128xbf16>
    %404 = vector.shape_cast %1 : vector<1x8x128xf32> to vector<8x128xf32>
    %c0_201 = arith.constant 0 : index
    %c0_202 = arith.constant 0 : index
    %c0_203 = arith.constant 0 : index
    %405 = vector.load %arg25[%c0_201, %c0_202, %c0_203] : memref<1x1x128xf32, #tpu.memory_space<vmem>>, vector<1x1x128xf32>
    %406 = vector.shape_cast %405 : vector<1x1x128xf32> to vector<1x128xf32>
    %c0_204 = arith.constant 0 : index
    %c0_205 = arith.constant 0 : index
    %c0_206 = arith.constant 0 : index
    %407 = vector.load %arg26[%c0_204, %c0_205, %c0_206] : memref<1x1x128xf32, #tpu.memory_space<vmem>>, vector<1x1x128xf32>
    %408 = vector.shape_cast %407 : vector<1x1x128xf32> to vector<1x128xf32>
    %cst_207 = arith.constant dense<0.000000e+00> : vector<8xf32>
    %409 = vector.multi_reduction <add>, %404, %cst_207 [1] : vector<8x128xf32> to vector<8xf32>
    %410 = vector.shape_cast %409 : vector<8xf32> to vector<8x1xf32>
    %cst_208 = arith.constant 3.125000e-02 : f32
    %411 = vector.broadcast %cst_208 : f32 to vector<8x1xf32>
    %412 = arith.mulf %410, %411 : vector<8x1xf32>
    %413 = arith.mulf %404, %404 : vector<8x128xf32>
    %cst_209 = arith.constant dense<0.000000e+00> : vector<8xf32>
    %414 = vector.multi_reduction <add>, %413, %cst_209 [1] : vector<8x128xf32> to vector<8xf32>
    %415 = vector.shape_cast %414 : vector<8xf32> to vector<8x1xf32>
    %cst_210 = arith.constant 3.125000e-02 : f32
    %416 = vector.broadcast %cst_210 : f32 to vector<8x1xf32>
    %417 = arith.mulf %415, %416 : vector<8x1xf32>
    %418 = arith.mulf %412, %412 : vector<8x1xf32>
    %419 = arith.subf %417, %418 : vector<8x1xf32>
    %cst_211 = arith.constant 0.000000e+00 : f32
    %420 = vector.broadcast %cst_211 : f32 to vector<8x1xf32>
    %421 = arith.maximumf %419, %420 : vector<8x1xf32>
    %422 = vector.broadcast %412 : vector<8x1xf32> to vector<8x128xf32>
    %423 = arith.subf %404, %422 : vector<8x128xf32>
    %cst_212 = arith.constant 9.99999974E-6 : f32
    %424 = vector.broadcast %cst_212 : f32 to vector<8x1xf32>
    %425 = arith.addf %421, %424 : vector<8x1xf32>
    %426 = math.rsqrt %425 : vector<8x1xf32>
    %427 = vector.broadcast %426 : vector<8x1xf32> to vector<8x128xf32>
    %428 = arith.mulf %423, %427 : vector<8x128xf32>
    %429 = vector.broadcast %406 : vector<1x128xf32> to vector<8x128xf32>
    %430 = arith.mulf %428, %429 : vector<8x128xf32>
    %431 = vector.broadcast %408 : vector<1x128xf32> to vector<8x128xf32>
    %432 = arith.addf %430, %431 : vector<8x128xf32>
    %433 = arith.truncf %432 : vector<8x128xf32> to vector<8x128xbf16>
    %c0_213 = arith.constant 0 : index
    %c0_214 = arith.constant 0 : index
    %c0_215 = arith.constant 0 : index
    %434 = vector.load %arg27[%c0_213, %c0_214, %c0_215] : memref<1x128x128xbf16, #tpu.memory_space<vmem>>, vector<1x128x128xbf16>
    %435 = vector.shape_cast %434 : vector<1x128x128xbf16> to vector<128x128xbf16>
    %cst_216 = arith.constant dense<0.000000e+00> : vector<8x128xf32>
    %436 = tpu.matmul %433, %435, %cst_216 {dimension_numbers = #tpu.dot_dimension_numbers<[1], [0], [0], [1], [0, 0, 1, 1], [], []>} : vector<8x128xbf16>, vector<128x128xbf16>, vector<8x128xf32> -> vector<8x128xf32>
    %c0_217 = arith.constant 0 : index
    %c0_218 = arith.constant 0 : index
    %c0_219 = arith.constant 0 : index
    %437 = vector.load %arg28[%c0_217, %c0_218, %c0_219] : memref<1x1x128xf32, #tpu.memory_space<vmem>>, vector<1x1x128xf32>
    %438 = vector.shape_cast %437 : vector<1x1x128xf32> to vector<1x128xf32>
    %439 = vector.broadcast %438 : vector<1x128xf32> to vector<8x128xf32>
    %440 = arith.addf %436, %439 : vector<8x128xf32>
    %441 = arith.truncf %440 : vector<8x128xf32> to vector<8x128xbf16>
    %442 = vector.shape_cast %441 : vector<8x128xbf16> to vector<1x8x128xbf16>
    %c0_220 = arith.constant 0 : index
    %c0_221 = arith.constant 0 : index
    %c0_222 = arith.constant 0 : index
    %443 = vector.load %arg29[%c0_220, %c0_221, %c0_222] : memref<1x128x256xbf16, #tpu.memory_space<vmem>>, vector<1x128x256xbf16>
    %444 = vector.shape_cast %443 : vector<1x128x256xbf16> to vector<128x256xbf16>
    %cst_223 = arith.constant dense<0.000000e+00> : vector<8x256xf32>
    %445 = tpu.matmul %403, %444, %cst_223 {dimension_numbers = #tpu.dot_dimension_numbers<[1], [0], [0], [1], [0, 0, 1, 1], [], []>} : vector<8x128xbf16>, vector<128x256xbf16>, vector<8x256xf32> -> vector<8x256xf32>
    %c0_224 = arith.constant 0 : index
    %c0_225 = arith.constant 0 : index
    %c0_226 = arith.constant 0 : index
    %446 = vector.load %arg30[%c0_224, %c0_225, %c0_226] : memref<1x1x256xf32, #tpu.memory_space<vmem>>, vector<1x1x256xf32>
    %447 = vector.shape_cast %446 : vector<1x1x256xf32> to vector<1x256xf32>
    %448 = vector.broadcast %447 : vector<1x256xf32> to vector<8x256xf32>
    %449 = arith.addf %445, %448 : vector<8x256xf32>
    %450 = arith.truncf %449 : vector<8x256xf32> to vector<8x256xbf16>
    %451 = vector.extract_strided_slice %450 {offsets = [0, 0], sizes = [8, 128], strides = [1, 1]} : vector<8x256xbf16> to vector<8x128xbf16>
    %452 = vector.shape_cast %451 : vector<8x128xbf16> to vector<1x8x128xbf16>
    %453 = vector.extract_strided_slice %450 {offsets = [0, 128], sizes = [8, 128], strides = [1, 1]} : vector<8x256xbf16> to vector<8x128xbf16>
    %454 = vector.shape_cast %453 : vector<8x128xbf16> to vector<1x8x128xbf16>
    "tpu.trace_start"() <{level = 10 : i32, message = "bqd,bkd->bqk"}> : () -> ()
    %cst_227 = arith.constant dense<0.000000e+00> : vector<1x8x8xf32>
    %455 = tpu.matmul %442, %452, %cst_227 {dimension_numbers = #tpu.dot_dimension_numbers<[2], [2], [1], [1], [0, 0, 0, 1, 1, 1], [0], [0]>} : vector<1x8x128xbf16>, vector<1x8x128xbf16>, vector<1x8x8xf32> -> vector<1x8x8xf32>
    "tpu.trace_stop"() : () -> ()
    %cst_228 = arith.constant 0.176776692 : f32
    %456 = vector.broadcast %cst_228 : f32 to vector<1x8x8xf32>
    %457 = arith.mulf %455, %456 : vector<1x8x8xf32>
    %458 = vector.broadcast %2 : vector<1x1x8xf32> to vector<1x8x8xf32>
    %459 = arith.addf %457, %458 : vector<1x8x8xf32>
    %cst_229 = arith.constant dense<0xFF800000> : vector<1x8xf32>
    %460 = vector.multi_reduction <maximumf>, %459, %cst_229 [2] : vector<1x8x8xf32> to vector<1x8xf32>
    %461 = vector.shape_cast %460 : vector<1x8xf32> to vector<1x8x1xf32>
    %462 = vector.broadcast %461 : vector<1x8x1xf32> to vector<1x8x8xf32>
    %463 = arith.subf %459, %462 : vector<1x8x8xf32>
    %464 = math.exp %463 : vector<1x8x8xf32>
    %cst_230 = arith.constant dense<0.000000e+00> : vector<1x8xf32>
    %465 = vector.multi_reduction <add>, %464, %cst_230 [2] : vector<1x8x8xf32> to vector<1x8xf32>
    %466 = vector.shape_cast %465 : vector<1x8xf32> to vector<1x8x1xf32>
    %467 = tpu.reciprocal %466 {approx = true} : vector<1x8x1xf32> -> vector<1x8x1xf32>
    %468 = vector.broadcast %467 : vector<1x8x1xf32> to vector<1x8x8xf32>
    %469 = arith.mulf %464, %468 : vector<1x8x8xf32>
    %470 = arith.truncf %469 : vector<1x8x8xf32> to vector<1x8x8xbf16>
    "tpu.trace_start"() <{level = 10 : i32, message = "bqk,bkd->bqd"}> : () -> ()
    %cst_231 = arith.constant dense<0.000000e+00> : vector<1x8x128xf32>
    %471 = tpu.matmul %470, %454, %cst_231 {dimension_numbers = #tpu.dot_dimension_numbers<[2], [1], [1], [2], [0, 0, 0, 1, 1, 2], [0], [0]>} : vector<1x8x8xbf16>, vector<1x8x128xbf16>, vector<1x8x128xf32> -> vector<1x8x128xf32>
    "tpu.trace_stop"() : () -> ()
    %472 = vector.shape_cast %471 : vector<1x8x128xf32> to vector<8x128xf32>
    %473 = arith.truncf %472 : vector<8x128xf32> to vector<8x128xbf16>
    %c0_232 = arith.constant 0 : index
    %c0_233 = arith.constant 0 : index
    %c0_234 = arith.constant 0 : index
    %474 = vector.load %arg31[%c0_232, %c0_233, %c0_234] : memref<1x128x128xbf16, #tpu.memory_space<vmem>>, vector<1x128x128xbf16>
    %475 = vector.shape_cast %474 : vector<1x128x128xbf16> to vector<128x128xbf16>
    %cst_235 = arith.constant dense<0.000000e+00> : vector<8x128xf32>
    %476 = tpu.matmul %473, %475, %cst_235 {dimension_numbers = #tpu.dot_dimension_numbers<[1], [0], [0], [1], [0, 0, 1, 1], [], []>} : vector<8x128xbf16>, vector<128x128xbf16>, vector<8x128xf32> -> vector<8x128xf32>
    %c0_236 = arith.constant 0 : index
    %c0_237 = arith.constant 0 : index
    %c0_238 = arith.constant 0 : index
    %477 = vector.load %arg32[%c0_236, %c0_237, %c0_238] : memref<1x1x128xf32, #tpu.memory_space<vmem>>, vector<1x1x128xf32>
    %478 = vector.shape_cast %477 : vector<1x1x128xf32> to vector<1x128xf32>
    %479 = vector.broadcast %478 : vector<1x128xf32> to vector<8x128xf32>
    %480 = arith.addf %476, %479 : vector<8x128xf32>
    %481 = vector.shape_cast %480 : vector<8x128xf32> to vector<1x8x128xf32>
    %482 = arith.addf %1, %481 : vector<1x8x128xf32>
    %483 = vector.shape_cast %482 : vector<1x8x128xf32> to vector<8x128xf32>
    %c0_239 = arith.constant 0 : index
    %c0_240 = arith.constant 0 : index
    %c0_241 = arith.constant 0 : index
    %484 = vector.load %arg33[%c0_239, %c0_240, %c0_241] : memref<1x1x128xf32, #tpu.memory_space<vmem>>, vector<1x1x128xf32>
    %485 = vector.shape_cast %484 : vector<1x1x128xf32> to vector<1x128xf32>
    %c0_242 = arith.constant 0 : index
    %c0_243 = arith.constant 0 : index
    %c0_244 = arith.constant 0 : index
    %486 = vector.load %arg34[%c0_242, %c0_243, %c0_244] : memref<1x1x128xf32, #tpu.memory_space<vmem>>, vector<1x1x128xf32>
    %487 = vector.shape_cast %486 : vector<1x1x128xf32> to vector<1x128xf32>
    %cst_245 = arith.constant dense<0.000000e+00> : vector<8xf32>
    %488 = vector.multi_reduction <add>, %483, %cst_245 [1] : vector<8x128xf32> to vector<8xf32>
    %489 = vector.shape_cast %488 : vector<8xf32> to vector<8x1xf32>
    %cst_246 = arith.constant 3.125000e-02 : f32
    %490 = vector.broadcast %cst_246 : f32 to vector<8x1xf32>
    %491 = arith.mulf %489, %490 : vector<8x1xf32>
    %492 = arith.mulf %483, %483 : vector<8x128xf32>
    %cst_247 = arith.constant dense<0.000000e+00> : vector<8xf32>
    %493 = vector.multi_reduction <add>, %492, %cst_247 [1] : vector<8x128xf32> to vector<8xf32>
    %494 = vector.shape_cast %493 : vector<8xf32> to vector<8x1xf32>
    %cst_248 = arith.constant 3.125000e-02 : f32
    %495 = vector.broadcast %cst_248 : f32 to vector<8x1xf32>
    %496 = arith.mulf %494, %495 : vector<8x1xf32>
    %497 = arith.mulf %491, %491 : vector<8x1xf32>
    %498 = arith.subf %496, %497 : vector<8x1xf32>
    %cst_249 = arith.constant 0.000000e+00 : f32
    %499 = vector.broadcast %cst_249 : f32 to vector<8x1xf32>
    %500 = arith.maximumf %498, %499 : vector<8x1xf32>
    %501 = vector.broadcast %491 : vector<8x1xf32> to vector<8x128xf32>
    %502 = arith.subf %483, %501 : vector<8x128xf32>
    %cst_250 = arith.constant 9.99999974E-6 : f32
    %503 = vector.broadcast %cst_250 : f32 to vector<8x1xf32>
    %504 = arith.addf %500, %503 : vector<8x1xf32>
    %505 = math.rsqrt %504 : vector<8x1xf32>
    %506 = vector.broadcast %505 : vector<8x1xf32> to vector<8x128xf32>
    %507 = arith.mulf %502, %506 : vector<8x128xf32>
    %508 = vector.broadcast %485 : vector<1x128xf32> to vector<8x128xf32>
    %509 = arith.mulf %507, %508 : vector<8x128xf32>
    %510 = vector.broadcast %487 : vector<1x128xf32> to vector<8x128xf32>
    %511 = arith.addf %509, %510 : vector<8x128xf32>
    %512 = arith.truncf %511 : vector<8x128xf32> to vector<8x128xbf16>
    %c0_251 = arith.constant 0 : index
    %c0_252 = arith.constant 0 : index
    %c0_253 = arith.constant 0 : index
    %513 = vector.load %arg35[%c0_251, %c0_252, %c0_253] : memref<1x128x128xbf16, #tpu.memory_space<vmem>>, vector<1x128x128xbf16>
    %514 = vector.shape_cast %513 : vector<1x128x128xbf16> to vector<128x128xbf16>
    %cst_254 = arith.constant dense<0.000000e+00> : vector<8x128xf32>
    %515 = tpu.matmul %512, %514, %cst_254 {dimension_numbers = #tpu.dot_dimension_numbers<[1], [0], [0], [1], [0, 0, 1, 1], [], []>} : vector<8x128xbf16>, vector<128x128xbf16>, vector<8x128xf32> -> vector<8x128xf32>
    %c0_255 = arith.constant 0 : index
    %c0_256 = arith.constant 0 : index
    %c0_257 = arith.constant 0 : index
    %516 = vector.load %arg36[%c0_255, %c0_256, %c0_257] : memref<1x1x128xf32, #tpu.memory_space<vmem>>, vector<1x1x128xf32>
    %517 = vector.shape_cast %516 : vector<1x1x128xf32> to vector<1x128xf32>
    %518 = vector.broadcast %517 : vector<1x128xf32> to vector<8x128xf32>
    %519 = arith.addf %515, %518 : vector<8x128xf32>
    %cst_258 = arith.constant 0.000000e+00 : f32
    %520 = vector.broadcast %cst_258 : f32 to vector<8x128xf32>
    %521 = arith.maximumf %519, %520 : vector<8x128xf32>
    %522 = arith.truncf %521 : vector<8x128xf32> to vector<8x128xbf16>
    %c0_259 = arith.constant 0 : index
    %c0_260 = arith.constant 0 : index
    %c0_261 = arith.constant 0 : index
    %523 = vector.load %arg37[%c0_259, %c0_260, %c0_261] : memref<1x128x128xbf16, #tpu.memory_space<vmem>>, vector<1x128x128xbf16>
    %524 = vector.shape_cast %523 : vector<1x128x128xbf16> to vector<128x128xbf16>
    %cst_262 = arith.constant dense<0.000000e+00> : vector<8x128xf32>
    %525 = tpu.matmul %522, %524, %cst_262 {dimension_numbers = #tpu.dot_dimension_numbers<[1], [0], [0], [1], [0, 0, 1, 1], [], []>} : vector<8x128xbf16>, vector<128x128xbf16>, vector<8x128xf32> -> vector<8x128xf32>
    %c0_263 = arith.constant 0 : index
    %c0_264 = arith.constant 0 : index
    %c0_265 = arith.constant 0 : index
    %526 = vector.load %arg38[%c0_263, %c0_264, %c0_265] : memref<1x1x128xf32, #tpu.memory_space<vmem>>, vector<1x1x128xf32>
    %527 = vector.shape_cast %526 : vector<1x1x128xf32> to vector<1x128xf32>
    %528 = vector.broadcast %527 : vector<1x128xf32> to vector<8x128xf32>
    %529 = arith.addf %525, %528 : vector<8x128xf32>
    %530 = vector.shape_cast %529 : vector<8x128xf32> to vector<1x8x128xf32>
    %531 = arith.addf %482, %530 : vector<1x8x128xf32>
    %cst_266 = arith.constant 5.000000e-01 : f32
    %532 = vector.broadcast %cst_266 : f32 to vector<1x1x1xf32>
    %533 = arith.cmpf ogt, %3, %532 : vector<1x1x1xf32>
    %534 = vector.shape_cast %533 : vector<1x1x1xi1> to vector<1x1x1xi1>
    %535 = vector.broadcast %534 : vector<1x1x1xi1> to vector<1x8x128xi1>
    %536 = arith.select %535, %401, %0 : vector<1x8x128xi1>, vector<1x8x128xf32>
    %c0_267 = arith.constant 0 : index
    %c0_268 = arith.constant 0 : index
    %c0_269 = arith.constant 0 : index
    %537 = vector.load %arg39[%c0_267, %c0_268, %c0_269] : memref<1x8x128xf32, #tpu.memory_space<vmem>>, vector<1x8x128xf32>
    tpu.vector_store %arg39[%c0_267, %c0_268, %c0_269], %536 {strides = array<i32>} : memref<1x8x128xf32, #tpu.memory_space<vmem>>, vector<1x8x128xf32>,
    %538 = vector.shape_cast %533 : vector<1x1x1xi1> to vector<1x1x1xi1>
    %539 = vector.broadcast %538 : vector<1x1x1xi1> to vector<1x8x128xi1>
    %540 = arith.select %539, %531, %1 : vector<1x8x128xi1>, vector<1x8x128xf32>
    %c0_270 = arith.constant 0 : index
    %c0_271 = arith.constant 0 : index
    %c0_272 = arith.constant 0 : index
    %541 = vector.load %arg40[%c0_270, %c0_271, %c0_272] : memref<1x8x128xf32, #tpu.memory_space<vmem>>, vector<1x8x128xf32>
    tpu.vector_store %arg40[%c0_270, %c0_271, %c0_272], %540 {strides = array<i32>} : memref<1x8x128xf32, #tpu.memory_space<vmem>>, vector<1x8x128xf32>,
    return
  }
  func.func @transform_0(%arg0: i32) -> (i32, i32, i32) {
    %c0_i32 = arith.constant 0 : i32
    %c0_i32_0 = arith.constant 0 : i32
    %c0_i32_1 = arith.constant 0 : i32
    return %arg0, %c0_i32, %c0_i32_0 : i32, i32, i32
  }
  func.func @transform_1(%arg0: i32) -> (i32, i32, i32) {
    %c0_i32 = arith.constant 0 : i32
    %c0_i32_0 = arith.constant 0 : i32
    %c0_i32_1 = arith.constant 0 : i32
    return %arg0, %c0_i32, %c0_i32_0 : i32, i32, i32
  }
  func.func @transform_2(%arg0: i32) -> (i32, i32, i32) {
    %c0_i32 = arith.constant 0 : i32
    %c0_i32_0 = arith.constant 0 : i32
    %c0_i32_1 = arith.constant 0 : i32
    return %arg0, %c0_i32, %c0_i32_0 : i32, i32, i32
  }
  func.func @transform_3(%arg0: i32) -> (i32, i32, i32) {
    %c0_i32 = arith.constant 0 : i32
    %c0_i32_0 = arith.constant 0 : i32
    %c0_i32_1 = arith.constant 0 : i32
    return %arg0, %c0_i32, %c0_i32_0 : i32, i32, i32
  }
  func.func @transform_4(%arg0: i32) -> (i32, i32, i32) {
    %c0_i32 = arith.constant 0 : i32
    %c0_i32_0 = arith.constant 0 : i32
    %c0_i32_1 = arith.constant 0 : i32
    %c0_i32_2 = arith.constant 0 : i32
    return %c0_i32, %c0_i32_0, %c0_i32_1 : i32, i32, i32
  }
  func.func @transform_5(%arg0: i32) -> (i32, i32, i32) {
    %c0_i32 = arith.constant 0 : i32
    %c0_i32_0 = arith.constant 0 : i32
    %c0_i32_1 = arith.constant 0 : i32
    %c0_i32_2 = arith.constant 0 : i32
    return %c0_i32, %c0_i32_0, %c0_i32_1 : i32, i32, i32
  }
  func.func @transform_6(%arg0: i32) -> (i32, i32, i32) {
    %c0_i32 = arith.constant 0 : i32
    %c0_i32_0 = arith.constant 0 : i32
    %c0_i32_1 = arith.constant 0 : i32
    %c0_i32_2 = arith.constant 0 : i32
    return %c0_i32, %c0_i32_0, %c0_i32_1 : i32, i32, i32
  }
  func.func @transform_7(%arg0: i32) -> (i32, i32, i32) {
    %c0_i32 = arith.constant 0 : i32
    %c0_i32_0 = arith.constant 0 : i32
    %c0_i32_1 = arith.constant 0 : i32
    %c0_i32_2 = arith.constant 0 : i32
    return %c0_i32, %c0_i32_0, %c0_i32_1 : i32, i32, i32
  }
  func.func @transform_8(%arg0: i32) -> (i32, i32, i32) {
    %c0_i32 = arith.constant 0 : i32
    %c0_i32_0 = arith.constant 0 : i32
    %c0_i32_1 = arith.constant 0 : i32
    %c0_i32_2 = arith.constant 0 : i32
    return %c0_i32, %c0_i32_0, %c0_i32_1 : i32, i32, i32
  }
  func.func @transform_9(%arg0: i32) -> (i32, i32, i32) {
    %c0_i32 = arith.constant 0 : i32
    %c0_i32_0 = arith.constant 0 : i32
    %c0_i32_1 = arith.constant 0 : i32
    %c0_i32_2 = arith.constant 0 : i32
    return %c0_i32, %c0_i32_0, %c0_i32_1 : i32, i32, i32
  }
  func.func @transform_10(%arg0: i32) -> (i32, i32, i32) {
    %c0_i32 = arith.constant 0 : i32
    %c0_i32_0 = arith.constant 0 : i32
    %c0_i32_1 = arith.constant 0 : i32
    %c0_i32_2 = arith.constant 0 : i32
    return %c0_i32, %c0_i32_0, %c0_i32_1 : i32, i32, i32
  }
  func.func @transform_11(%arg0: i32) -> (i32, i32, i32) {
    %c0_i32 = arith.constant 0 : i32
    %c0_i32_0 = arith.constant 0 : i32
    %c0_i32_1 = arith.constant 0 : i32
    %c0_i32_2 = arith.constant 0 : i32
    return %c0_i32, %c0_i32_0, %c0_i32_1 : i32, i32, i32
  }
  func.func @transform_12(%arg0: i32) -> (i32, i32, i32) {
    %c0_i32 = arith.constant 0 : i32
    %c0_i32_0 = arith.constant 0 : i32
    %c0_i32_1 = arith.constant 0 : i32
    %c0_i32_2 = arith.constant 0 : i32
    return %c0_i32, %c0_i32_0, %c0_i32_1 : i32, i32, i32
  }
  func.func @transform_13(%arg0: i32) -> (i32, i32, i32) {
    %c0_i32 = arith.constant 0 : i32
    %c0_i32_0 = arith.constant 0 : i32
    %c0_i32_1 = arith.constant 0 : i32
    %c0_i32_2 = arith.constant 0 : i32
    return %c0_i32, %c0_i32_0, %c0_i32_1 : i32, i32, i32
  }
  func.func @transform_14(%arg0: i32) -> (i32, i32, i32) {
    %c0_i32 = arith.constant 0 : i32
    %c0_i32_0 = arith.constant 0 : i32
    %c0_i32_1 = arith.constant 0 : i32
    %c0_i32_2 = arith.constant 0 : i32
    return %c0_i32, %c0_i32_0, %c0_i32_1 : i32, i32, i32
  }
  func.func @transform_15(%arg0: i32) -> (i32, i32, i32) {
    %c0_i32 = arith.constant 0 : i32
    %c0_i32_0 = arith.constant 0 : i32
    %c0_i32_1 = arith.constant 0 : i32
    %c0_i32_2 = arith.constant 0 : i32
    return %c0_i32, %c0_i32_0, %c0_i32_1 : i32, i32, i32
  }
  func.func @transform_16(%arg0: i32) -> (i32, i32, i32) {
    %c0_i32 = arith.constant 0 : i32
    %c0_i32_0 = arith.constant 0 : i32
    %c0_i32_1 = arith.constant 0 : i32
    %c0_i32_2 = arith.constant 0 : i32
    return %c0_i32, %c0_i32_0, %c0_i32_1 : i32, i32, i32
  }
  func.func @transform_17(%arg0: i32) -> (i32, i32, i32) {
    %c0_i32 = arith.constant 0 : i32
    %c0_i32_0 = arith.constant 0 : i32
    %c0_i32_1 = arith.constant 0 : i32
    %c0_i32_2 = arith.constant 0 : i32
    return %c0_i32, %c0_i32_0, %c0_i32_1 : i32, i32, i32
  }
  func.func @transform_18(%arg0: i32) -> (i32, i32, i32) {
    %c0_i32 = arith.constant 0 : i32
    %c0_i32_0 = arith.constant 0 : i32
    %c0_i32_1 = arith.constant 0 : i32
    %c0_i32_2 = arith.constant 0 : i32
    return %c0_i32, %c0_i32_0, %c0_i32_1 : i32, i32, i32
  }
  func.func @transform_19(%arg0: i32) -> (i32, i32, i32) {
    %c0_i32 = arith.constant 0 : i32
    %c0_i32_0 = arith.constant 0 : i32
    %c0_i32_1 = arith.constant 0 : i32
    %c0_i32_2 = arith.constant 0 : i32
    return %c0_i32, %c0_i32_0, %c0_i32_1 : i32, i32, i32
  }
  func.func @transform_20(%arg0: i32) -> (i32, i32, i32) {
    %c0_i32 = arith.constant 0 : i32
    %c0_i32_0 = arith.constant 0 : i32
    %c0_i32_1 = arith.constant 0 : i32
    %c0_i32_2 = arith.constant 0 : i32
    return %c0_i32, %c0_i32_0, %c0_i32_1 : i32, i32, i32
  }
  func.func @transform_21(%arg0: i32) -> (i32, i32, i32) {
    %c0_i32 = arith.constant 0 : i32
    %c0_i32_0 = arith.constant 0 : i32
    %c0_i32_1 = arith.constant 0 : i32
    %c0_i32_2 = arith.constant 0 : i32
    return %c0_i32, %c0_i32_0, %c0_i32_1 : i32, i32, i32
  }
  func.func @transform_22(%arg0: i32) -> (i32, i32, i32) {
    %c0_i32 = arith.constant 0 : i32
    %c0_i32_0 = arith.constant 0 : i32
    %c0_i32_1 = arith.constant 0 : i32
    %c0_i32_2 = arith.constant 0 : i32
    return %c0_i32, %c0_i32_0, %c0_i32_1 : i32, i32, i32
  }
  func.func @transform_23(%arg0: i32) -> (i32, i32, i32) {
    %c0_i32 = arith.constant 0 : i32
    %c0_i32_0 = arith.constant 0 : i32
    %c0_i32_1 = arith.constant 0 : i32
    %c0_i32_2 = arith.constant 0 : i32
    return %c0_i32, %c0_i32_0, %c0_i32_1 : i32, i32, i32
  }
  func.func @transform_24(%arg0: i32) -> (i32, i32, i32) {
    %c0_i32 = arith.constant 0 : i32
    %c0_i32_0 = arith.constant 0 : i32
    %c0_i32_1 = arith.constant 0 : i32
    %c0_i32_2 = arith.constant 0 : i32
    return %c0_i32, %c0_i32_0, %c0_i32_1 : i32, i32, i32
  }
  func.func @transform_25(%arg0: i32) -> (i32, i32, i32) {
    %c0_i32 = arith.constant 0 : i32
    %c0_i32_0 = arith.constant 0 : i32
    %c0_i32_1 = arith.constant 0 : i32
    %c0_i32_2 = arith.constant 0 : i32
    return %c0_i32, %c0_i32_0, %c0_i32_1 : i32, i32, i32
  }
  func.func @transform_26(%arg0: i32) -> (i32, i32, i32) {
    %c0_i32 = arith.constant 0 : i32
    %c0_i32_0 = arith.constant 0 : i32
    %c0_i32_1 = arith.constant 0 : i32
    %c0_i32_2 = arith.constant 0 : i32
    return %c0_i32, %c0_i32_0, %c0_i32_1 : i32, i32, i32
  }
  func.func @transform_27(%arg0: i32) -> (i32, i32, i32) {
    %c0_i32 = arith.constant 0 : i32
    %c0_i32_0 = arith.constant 0 : i32
    %c0_i32_1 = arith.constant 0 : i32
    %c0_i32_2 = arith.constant 0 : i32
    return %c0_i32, %c0_i32_0, %c0_i32_1 : i32, i32, i32
  }
  func.func @transform_28(%arg0: i32) -> (i32, i32, i32) {
    %c0_i32 = arith.constant 0 : i32
    %c0_i32_0 = arith.constant 0 : i32
    %c0_i32_1 = arith.constant 0 : i32
    %c0_i32_2 = arith.constant 0 : i32
    return %c0_i32, %c0_i32_0, %c0_i32_1 : i32, i32, i32
  }
  func.func @transform_29(%arg0: i32) -> (i32, i32, i32) {
    %c0_i32 = arith.constant 0 : i32
    %c0_i32_0 = arith.constant 0 : i32
    %c0_i32_1 = arith.constant 0 : i32
    %c0_i32_2 = arith.constant 0 : i32
    return %c0_i32, %c0_i32_0, %c0_i32_1 : i32, i32, i32
  }
  func.func @transform_30(%arg0: i32) -> (i32, i32, i32) {
    %c0_i32 = arith.constant 0 : i32
    %c0_i32_0 = arith.constant 0 : i32
    %c0_i32_1 = arith.constant 0 : i32
    %c0_i32_2 = arith.constant 0 : i32
    return %c0_i32, %c0_i32_0, %c0_i32_1 : i32, i32, i32
  }
  func.func @transform_31(%arg0: i32) -> (i32, i32, i32) {
    %c0_i32 = arith.constant 0 : i32
    %c0_i32_0 = arith.constant 0 : i32
    %c0_i32_1 = arith.constant 0 : i32
    %c0_i32_2 = arith.constant 0 : i32
    return %c0_i32, %c0_i32_0, %c0_i32_1 : i32, i32, i32
  }
  func.func @transform_32(%arg0: i32) -> (i32, i32, i32) {
    %c0_i32 = arith.constant 0 : i32
    %c0_i32_0 = arith.constant 0 : i32
    %c0_i32_1 = arith.constant 0 : i32
    %c0_i32_2 = arith.constant 0 : i32
    return %c0_i32, %c0_i32_0, %c0_i32_1 : i32, i32, i32
  }
  func.func @transform_33(%arg0: i32) -> (i32, i32, i32) {
    %c0_i32 = arith.constant 0 : i32
    %c0_i32_0 = arith.constant 0 : i32
    %c0_i32_1 = arith.constant 0 : i32
    %c0_i32_2 = arith.constant 0 : i32
    return %c0_i32, %c0_i32_0, %c0_i32_1 : i32, i32, i32
  }
  func.func @transform_34(%arg0: i32) -> (i32, i32, i32) {
    %c0_i32 = arith.constant 0 : i32
    %c0_i32_0 = arith.constant 0 : i32
    %c0_i32_1 = arith.constant 0 : i32
    %c0_i32_2 = arith.constant 0 : i32
    return %c0_i32, %c0_i32_0, %c0_i32_1 : i32, i32, i32
  }
  func.func @transform_35(%arg0: i32) -> (i32, i32, i32) {
    %c0_i32 = arith.constant 0 : i32
    %c0_i32_0 = arith.constant 0 : i32
    %c0_i32_1 = arith.constant 0 : i32
    %c0_i32_2 = arith.constant 0 : i32
    return %c0_i32, %c0_i32_0, %c0_i32_1 : i32, i32, i32
  }
  func.func @transform_36(%arg0: i32) -> (i32, i32, i32) {
    %c0_i32 = arith.constant 0 : i32
    %c0_i32_0 = arith.constant 0 : i32
    %c0_i32_1 = arith.constant 0 : i32
    %c0_i32_2 = arith.constant 0 : i32
    return %c0_i32, %c0_i32_0, %c0_i32_1 : i32, i32, i32
  }
  func.func @transform_37(%arg0: i32) -> (i32, i32, i32) {
    %c0_i32 = arith.constant 0 : i32
    %c0_i32_0 = arith.constant 0 : i32
    %c0_i32_1 = arith.constant 0 : i32
    %c0_i32_2 = arith.constant 0 : i32
    return %c0_i32, %c0_i32_0, %c0_i32_1 : i32, i32, i32
  }
  func.func @transform_38(%arg0: i32) -> (i32, i32, i32) {
    %c0_i32 = arith.constant 0 : i32
    %c0_i32_0 = arith.constant 0 : i32
    %c0_i32_1 = arith.constant 0 : i32
    return %arg0, %c0_i32, %c0_i32_0 : i32, i32, i32
  }
  func.func @transform_39(%arg0: i32) -> (i32, i32, i32) {
    %c0_i32 = arith.constant 0 : i32
    %c0_i32_0 = arith.constant 0 : i32
    %c0_i32_1 = arith.constant 0 : i32
    return %arg0, %c0_i32, %c0_i32_0 : i32, i32, i32
  }
}

</mosaic_0001>

<llo_original>
// kernel: _lambda_.5
$region0: #{_lambda_.5}
  #allocation0 [shape = 'u32[]', space=smem, size = 0x4, offset = 0x4, fixed_abs, tag = 'smem constant byte address 0x4 - core index']
  #allocation1 [shape = 'u32[72,128]{1,0:T(1,128)}', space=vmem, size = 0x9000, scoped, tag = 'internal scratch']
  %s0 = inlined_call_operand.vmem [shape: f32[2,1,128], index: 0, kind: input, shape index: {}]
  %s1 = inlined_call_operand.vmem [shape: f32[1,128], index: 1, kind: input, shape index: {}]
  %s2 = inlined_call_operand.vmem [shape: f32[1,128], index: 2, kind: input, shape index: {}]
  %s3 = inlined_call_operand.hbm [shape: f32[2,128], index: 3, kind: output, shape index: {}]
  %s4 = sld [smem:[#allocation0]]
  $region22: #{_lambda_.5} parent=0
    _
  %s6 = ssub.s32 1, %s4
  %s7 = scalar_select 0, %s6, %s4
  $region1: #{_lambda_.5} parent=0
    #allocation2 [shape = 'u8[1024]{0}', space=vmem, size = 0x400, scoped, tag = 'output window, operand 0, single buffered']
    #allocation3 [shape = 's32[1]{0}', space=sflag, size = 0x4, scoped, tag = 'scoped memory for _lambda_.5']
    %8 = vsyncpa [#allocation3], 0
    // Predicated region
    $region2: #{_lambda_.5} parent=1 // pred_check
      _
    $region3: #{_lambda_.5} parent=1 // pred_check_branch
      %10 = sbr.rel (0) target = $region5
    $region4: #{_lambda_.5} parent=1 // pred_region
      _
    $region5: #{_lambda_.5} parent=1 // pred_fallthru
      _
    // Predicated region
    $region6: #{_lambda_.5} parent=1 // pred_check
      _
    $region7: #{_lambda_.5} parent=1 // pred_check_branch
      %12 = sbr.rel (0) target = $region9
    $region8: #{_lambda_.5} parent=1 // pred_region
      _
    $region9: #{_lambda_.5} parent=1 // pred_fallthru
      _
    // Predicated region
    $region10: #{_lambda_.5} parent=1 // pred_check
      _
    $region11: #{_lambda_.5} parent=1 // pred_check_branch
      %14 = sbr.rel (0) target = $region13
    $region12: #{_lambda_.5} parent=1 // pred_region
      _
    $region13: #{_lambda_.5} parent=1 // pred_fallthru
      _
    %v15 = vld [vmem:[%s0] sm:$0x1]
    %v16 = vld [vmem:[%s0 + $0x1] sm:$0x1]
    %v17 = vld [vmem:[%s1] sm:$0x1]
    %v18 = vld [vmem:[%s2] sm:$0x1]
    %21 = vst [vmem:[#allocation1] ss:$9 sm:$0xff] %v15
    %s22 = scalar_lea.vmem [#allocation1], 1
    %23 = vst [vmem:[%s22] ss:$9 sm:$0xff] %v16
    %v24 = vld [vmem:[#allocation1] sm:$0xff]
    %vm26 = vcmask 1041408
    %v27 = vsel %vm26, %v24, 0.0
    %28 = vadd.xlane.f32.xlu0 %v27
    %v29 = vpop.xlane.xlu0 %28
    %v30 = vmul.f32 %v29, 0.03125
    %v31 = vmul.f32 %v15, %v15
    %v32 = vmul.f32 %v16, %v16
    %35 = vst [vmem:[#allocation1] ss:$9 sm:$0xff] %v31
    %s36 = scalar_lea.vmem [#allocation1], 1
    %37 = vst [vmem:[%s36] ss:$9 sm:$0xff] %v32
    %v38 = vld [vmem:[#allocation1] sm:$0xff]
    %v40 = vsel %vm26, %v38, 0.0
    %41 = vadd.xlane.f32.xlu0 %v40
    %v42 = vpop.xlane.xlu0 %41
    %v43 = vmul.f32 %v42, 0.03125
    %v44 = vmul.f32 %v30, %v30
    %v45 = vsub.f32 %v43, %v44
    %v46 = vmax.f32 %v45, 0.0
    %v48 = vperm.slane %v30, 0
    %v49 = vperm.slane %v30, 1
    %v52 = vsub.f32 %v15, %v48
    %v53 = vsub.f32 %v16, %v49
    %v54 = vadd.f32 %v46, 1e-05
    %v55 = vrsqrt.pop %v54
    %v56 = vmul.f32 %v55, %v54
    %v57 = vmul.f32 %v56, %v55
    %v58 = vmul.f32 0.5, %v57
    %v59 = vsub.f32 1.5, %v58
    %v60 = vmul.f32 %v55, %v59
    %vm61 = vweird.f32 %v54
    %vm62 = vweird.f32 %v55
    %vm63 = vmor %vm61, %vm62
    %v64 = vsel %vm63, %v55, %v60
    %v66 = vperm.slane %v64, 0
    %v67 = vperm.slane %v64, 1
    %v70 = vmul.f32 %v52, %v66
    %v71 = vmul.f32 %v53, %v67
    %v73 = vperm.slane %v17, 0
    %v75 = vrot.slane %v73, 1
    %v77 = vmul.f32 %v70, %v73
    %v78 = vmul.f32 %v71, %v75
    %v80 = vperm.slane %v18, 0
    %v82 = vrot.slane %v80, 1
    %v84 = vadd.f32 %v77, %v80
    %v85 = vadd.f32 %v78, %v82
    %88 = vst [vmem:[#allocation1] ss:$9 sm:$0xff] %v84
    %s89 = scalar_lea.vmem [#allocation1], 1
    %90 = vst [vmem:[%s89] ss:$9 sm:$0xff] %v85
    %v91 = vld [vmem:[#allocation1] sm:$0xff]
    %93 = vst [vmem:[#allocation2] sm:$0x3] %v91
    // Predicated region
    $region14: #{_lambda_.5} parent=1 // pred_check
      _
    $region15: #{_lambda_.5} parent=1 // pred_check_branch
      %95 = sbr.rel (0) target = $region17
    $region16: #{_lambda_.5} parent=1 // pred_region
      %97 = vsyncadd [#allocation3], 0
      %s99 = sshll.u32 [#allocation2], 4
      %s100 = int_to_ptr.vmem [resolvable:$true] %s99
      %s101 = sshll.u32 %s3, 4
      %s102 = int_to_ptr.hbm [resolvable:$true] %s101
      %104 = dma.vmem_to_hbm [thread:$0]  %s100, 32, %s102, [#allocation3]
    $region17: #{_lambda_.5} parent=1 // pred_fallthru
      _
    // Predicated region
    $region18: #{_lambda_.5} parent=1 // pred_check
      _
    $region19: #{_lambda_.5} parent=1 // pred_check_branch
      %106 = sbr.rel (0) target = $region21
    $region20: #{_lambda_.5} parent=1 // pred_region
      %108 = dma.done [#allocation3], 32
    $region21: #{_lambda_.5} parent=1 // pred_fallthru
      _
    %109 = vsyncpa [#allocation3], 1

// kernel: _lambda_.3
$region0: #{_lambda_.3}
  #allocation0 [shape = 'u32[]', space=smem, size = 0x4, offset = 0x4, fixed_abs, tag = 'smem constant byte address 0x4 - core index']
  #allocation1 [shape = 'u32[72,128]{1,0:T(1,128)}', space=vmem, size = 0x9000, scoped, tag = 'internal scratch']
  %s0 = inlined_call_operand.smem [shape: u32[40], index: -1, kind: input, shape index: {}]
  %s1 = sld [smem:[%s0]]
  %s2 = scalar_lea.smem %s0, 1
  %s3 = sld [smem:[%s2]]
  %s4 = scalar_lea.smem %s0, 2
  %s5 = sld [smem:[%s4]]
  %s6 = scalar_lea.smem %s0, 3
  %s7 = sld [smem:[%s6]]
  %s8 = scalar_lea.smem %s0, 4
  %s9 = sld [smem:[%s8]]
  %s10 = scalar_lea.smem %s0, 5
  %s11 = sld [smem:[%s10]]
  %s12 = scalar_lea.smem %s0, 6
  %s13 = sld [smem:[%s12]]
  %s14 = scalar_lea.smem %s0, 7
  %s15 = sld [smem:[%s14]]
  %s16 = scalar_lea.smem %s0, 8
  %s17 = sld [smem:[%s16]]
  %s18 = scalar_lea.smem %s0, 9
  %s19 = sld [smem:[%s18]]
  %s20 = scalar_lea.smem %s0, 10
  %s21 = sld [smem:[%s20]]
  %s22 = scalar_lea.smem %s0, 11
  %s23 = sld [smem:[%s22]]
  %s24 = scalar_lea.smem %s0, 12
  %s25 = sld [smem:[%s24]]
  %s26 = scalar_lea.smem %s0, 13
  %s27 = sld [smem:[%s26]]
  %s28 = scalar_lea.smem %s0, 14
  %s29 = sld [smem:[%s28]]
  %s30 = scalar_lea.smem %s0, 15
  %s31 = sld [smem:[%s30]]
  %s32 = scalar_lea.smem %s0, 16
  %s33 = sld [smem:[%s32]]
  %s34 = scalar_lea.smem %s0, 17
  %s35 = sld [smem:[%s34]]
  %s36 = scalar_lea.smem %s0, 18
  %s37 = sld [smem:[%s36]]
  %s38 = scalar_lea.smem %s0, 19
  %s39 = sld [smem:[%s38]]
  %s40 = scalar_lea.smem %s0, 20
  %s41 = sld [smem:[%s40]]
  %s42 = scalar_lea.smem %s0, 21
  %s43 = sld [smem:[%s42]]
  %s44 = scalar_lea.smem %s0, 22
  %s45 = sld [smem:[%s44]]
  %s46 = scalar_lea.smem %s0, 23
  %s47 = sld [smem:[%s46]]
  %s48 = scalar_lea.smem %s0, 24
  %s49 = sld [smem:[%s48]]
  %s50 = scalar_lea.smem %s0, 25
  %s51 = sld [smem:[%s50]]
  %s52 = scalar_lea.smem %s0, 26
  %s53 = sld [smem:[%s52]]
  %s54 = scalar_lea.smem %s0, 27
  %s55 = sld [smem:[%s54]]
  %s56 = scalar_lea.smem %s0, 28
  %s57 = sld [smem:[%s56]]
  %s58 = scalar_lea.smem %s0, 29
  %s59 = sld [smem:[%s58]]
  %s60 = scalar_lea.smem %s0, 30
  %s61 = sld [smem:[%s60]]
  %s62 = scalar_lea.smem %s0, 31
  %s63 = sld [smem:[%s62]]
  %s64 = scalar_lea.smem %s0, 32
  %s65 = sld [smem:[%s64]]
  %s66 = scalar_lea.smem %s0, 33
  %s67 = sld [smem:[%s66]]
  %s68 = scalar_lea.smem %s0, 34
  %s69 = sld [smem:[%s68]]
  %s70 = scalar_lea.smem %s0, 35
  %s71 = sld [smem:[%s70]]
  %s72 = scalar_lea.smem %s0, 36
  %s73 = sld [smem:[%s72]]
  %s74 = scalar_lea.smem %s0, 37
  %s75 = sld [smem:[%s74]]
  %s76 = scalar_lea.smem %s0, 38
  %s77 = sld [smem:[%s76]]
  %s78 = scalar_lea.smem %s0, 39
  %s79 = sld [smem:[%s78]]
  %80 = xla_tuple %s77, %s79
  %s81 = sld [smem:[#allocation0]]
  $region237: #{_lambda_.3} parent=0
    _
  %s83 = ssub.s32 1, %s81
  %s84 = scalar_select 0, %s83, %s81
  $region1: #{_lambda_.3} parent=0
    #allocation2 [shape = 'u8[196608]{0}', space=vmem, size = 0x30000, scoped, tag = 'input window, operand 6, single buffered']
    #allocation3 [shape = 's32[2]{0}', space=sflag, size = 0x8, scoped, tag = 'scoped memory for _lambda_.3']
    #allocation4 [shape = 'u8[65536]{0}', space=vmem, size = 0x10000, scoped, tag = 'input window, operand 8, single buffered']
    #allocation5 [shape = 's32[1]{0}', space=sflag, size = 0x4, scoped, tag = 'scoped memory for _lambda_.3']
    #allocation6 [shape = 'u8[65536]{0}', space=vmem, size = 0x10000, scoped, tag = 'input window, operand 12, single buffered']
    #allocation7 [shape = 'u8[131072]{0}', space=vmem, size = 0x20000, scoped, tag = 'input window, operand 14, single buffered']
    #allocation8 [shape = 's32[1]{0}', space=sflag, size = 0x4, scoped, tag = 'scoped memory for _lambda_.3']
    #allocation9 [shape = 'u8[65536]{0}', space=vmem, size = 0x10000, scoped, tag = 'input window, operand 16, single buffered']
    #allocation10 [shape = 'u8[65536]{0}', space=vmem, size = 0x10000, scoped, tag = 'input window, operand 20, single buffered']
    #allocation11 [shape = 's32[1]{0}', space=sflag, size = 0x4, scoped, tag = 'scoped memory for _lambda_.3']
    #allocation12 [shape = 'u8[65536]{0}', space=vmem, size = 0x10000, scoped, tag = 'input window, operand 22, single buffered']
    #allocation13 [shape = 'u8[65536]{0}', space=vmem, size = 0x10000, scoped, tag = 'input window, operand 28, single buffered']
    #allocation14 [shape = 's32[1]{0}', space=sflag, size = 0x4, scoped, tag = 'scoped memory for _lambda_.3']
    #allocation15 [shape = 'u8[32768]{0}', space=vmem, size = 0x8000, scoped, tag = 'input window, operand 30, single buffered']
    #allocation16 [shape = 'u8[32768]{0}', space=vmem, size = 0x8000, scoped, tag = 'input window, operand 34, single buffered']
    #allocation17 [shape = 's32[1]{0}', space=sflag, size = 0x4, scoped, tag = 'scoped memory for _lambda_.3']
    #allocation18 [shape = 'u8[32768]{0}', space=vmem, size = 0x8000, scoped, tag = 'input window, operand 36, single buffered']
    %85 = vsyncpa [#allocation3], 0
    %86 = vsyncpa [#allocation5], 0
    %87 = vsyncpa [#allocation8], 0
    %88 = vsyncpa [#allocation11], 0
    %89 = vsyncpa [#allocation14], 0
    %90 = vsyncpa [#allocation17], 0
    loop: start=0, step=1, limit=4
    $region2: #{_lambda_.3} parent=1 // loop_pre_header
      _
    $region3: #{_lambda_.3} parent=1 // loop_header
      %s92 = sphi 0, %s96
      %p93 = scmp.ge.s32.totalorder %s92, 4
      %s102 = sphi 0, %s104
      %s105 = sphi 0, %s102
      %s106 = sphi 0, %s105
      %s122 = sphi 0, %s106
      %s128 = sphi 0, %s130
      %s131 = sphi 0, %s128
      %s132 = sphi 0, %s131
      %s148 = sphi 0, %s132
      %s154 = sphi 0, %s156
      %s157 = sphi 0, %s154
      %s158 = sphi 0, %s157
      %s174 = sphi 0, %s158
      %s180 = sphi 0, %s182
      %s183 = sphi 0, %s180
      %s184 = sphi 0, %s183
      %s200 = sphi 0, %s184
      %s204 = sphi 0, %s204
      %s206 = sphi 0, %s204
      %s207 = sphi 0, %s206
      %s221 = sphi 0, %s207
      %s225 = sphi 0, %s225
      %s227 = sphi 0, %s225
      %s228 = sphi 0, %s227
      %s242 = sphi 0, %s228
      %s246 = sphi 0, %s246
      %s248 = sphi 0, %s246
      %s249 = sphi 0, %s248
      %s263 = sphi 0, %s249
      %s267 = sphi 0, %s267
      %s269 = sphi 0, %s267
      %s270 = sphi 0, %s269
      %s284 = sphi 0, %s270
      %s288 = sphi 0, %s288
      %s290 = sphi 0, %s288
      %s291 = sphi 0, %s290
      %s305 = sphi 0, %s291
      %s309 = sphi 0, %s309
      %s311 = sphi 0, %s309
      %s312 = sphi 0, %s311
      %s326 = sphi 0, %s312
      %s330 = sphi 0, %s330
      %s332 = sphi 0, %s330
      %s333 = sphi 0, %s332
      %s347 = sphi 0, %s333
      %s351 = sphi 0, %s351
      %s353 = sphi 0, %s351
      %s354 = sphi 0, %s353
      %s368 = sphi 0, %s354
      %s372 = sphi 0, %s372
      %s374 = sphi 0, %s372
      %s375 = sphi 0, %s374
      %s389 = sphi 0, %s375
      %s393 = sphi 0, %s393
      %s395 = sphi 0, %s393
      %s396 = sphi 0, %s395
      %s410 = sphi 0, %s396
      %s414 = sphi 0, %s414
      %s416 = sphi 0, %s414
      %s417 = sphi 0, %s416
      %s431 = sphi 0, %s417
      %s435 = sphi 0, %s435
      %s437 = sphi 0, %s435
      %s438 = sphi 0, %s437
      %s452 = sphi 0, %s438
      %s456 = sphi 0, %s456
      %s458 = sphi 0, %s456
      %s459 = sphi 0, %s458
      %s473 = sphi 0, %s459
      %s477 = sphi 0, %s477
      %s479 = sphi 0, %s477
      %s480 = sphi 0, %s479
      %s494 = sphi 0, %s480
      %s498 = sphi 0, %s498
      %s500 = sphi 0, %s498
      %s501 = sphi 0, %s500
      %s515 = sphi 0, %s501
      %s519 = sphi 0, %s519
      %s521 = sphi 0, %s519
      %s522 = sphi 0, %s521
      %s536 = sphi 0, %s522
      %s540 = sphi 0, %s540
      %s542 = sphi 0, %s540
      %s543 = sphi 0, %s542
      %s557 = sphi 0, %s543
      %s561 = sphi 0, %s561
      %s563 = sphi 0, %s561
      %s564 = sphi 0, %s563
      %s578 = sphi 0, %s564
      %s582 = sphi 0, %s582
      %s584 = sphi 0, %s582
      %s585 = sphi 0, %s584
      %s599 = sphi 0, %s585
      %s603 = sphi 0, %s603
      %s605 = sphi 0, %s603
      %s606 = sphi 0, %s605
      %s620 = sphi 0, %s606
      %s624 = sphi 0, %s624
      %s626 = sphi 0, %s624
      %s627 = sphi 0, %s626
      %s641 = sphi 0, %s627
      %s645 = sphi 0, %s645
      %s647 = sphi 0, %s645
      %s648 = sphi 0, %s647
      %s662 = sphi 0, %s648
      %s666 = sphi 0, %s666
      %s668 = sphi 0, %s666
      %s669 = sphi 0, %s668
      %s683 = sphi 0, %s669
      %s687 = sphi 0, %s687
      %s689 = sphi 0, %s687
      %s690 = sphi 0, %s689
      %s704 = sphi 0, %s690
      %s708 = sphi 0, %s708
      %s710 = sphi 0, %s708
      %s711 = sphi 0, %s710
      %s725 = sphi 0, %s711
      %s729 = sphi 0, %s729
      %s731 = sphi 0, %s729
      %s732 = sphi 0, %s731
      %s746 = sphi 0, %s732
      %s750 = sphi 0, %s750
      %s752 = sphi 0, %s750
      %s753 = sphi 0, %s752
      %s767 = sphi 0, %s753
      %s771 = sphi 0, %s771
      %s773 = sphi 0, %s771
      %s774 = sphi 0, %s773
      %s788 = sphi 0, %s774
      %s792 = sphi 0, %s792
      %s794 = sphi 0, %s792
      %s795 = sphi 0, %s794
      %s809 = sphi 0, %s795
      %s813 = sphi 0, %s813
      %s815 = sphi 0, %s813
      %s816 = sphi 0, %s815
      %s830 = sphi 0, %s816
      %s834 = sphi 0, %s834
      %s836 = sphi 0, %s834
      %s837 = sphi 0, %s836
      %s851 = sphi 0, %s837
      %s855 = sphi 0, %s855
      %s857 = sphi 0, %s855
      %s858 = sphi 0, %s857
      %s872 = sphi 0, %s858
      %s876 = sphi 0, %s876
      %s878 = sphi 0, %s876
      %s879 = sphi 0, %s878
      %s893 = sphi 0, %s879
      %s897 = sphi 0, %s897
      %s899 = sphi 0, %s897
      %s900 = sphi 0, %s899
      %s914 = sphi 0, %s900
      %s920 = sphi 0, %s922
      %s923 = sphi 0, %s920
      %s924 = sphi 0, %s923
      %s940 = sphi 0, %s924
      %s946 = sphi 0, %s948
      %s949 = sphi 0, %s946
      %s950 = sphi 0, %s949
      %s966 = sphi 0, %s950
    $region4: #{_lambda_.3} parent=1 // loop_header_branch
      %95 = sbr.rel (%p93) target = $region8
    $region5: #{_lambda_.3} parent=1 // loop_body
      %s97 = ssub.s32 %s92, 1
      %s98 = ssub.s32 %s92, 2
      %s99 = sadd.s32 %s92, 1
      %s100 = ssub.s32 %s92, %s99
      %p101 = scmp.eq.s32.totalorder %s100, 0
      %s103 = sadd.s32 %s102, 1
      %s104 = scalar_select %p101, %s102, %s103
      %p107 = pneg %p101
      %p108 = scmp.eq.s32.totalorder %s92, 1
      %p109 = por %p107, %p108
      %p110 = scmp.ne.s32.totalorder %s102, %s105
      %p111 = scmp.eq.s32.totalorder %s92, 0
      %p112 = por %p110, %p111
      %p113 = scmp.ne.s32.totalorder %s102, %s105
      %p114 = scmp.eq.s32.totalorder %s97, 1
      %p115 = por %p113, %p114
      %p116 = scmp.ne.s32.totalorder %s105, %s106
      %p117 = scmp.eq.s32.totalorder %s97, 0
      %p118 = por %p116, %p117
      %p119 = scmp.ne.s32.totalorder %s105, %s106
      %p120 = scmp.eq.s32.totalorder %s98, 1
      %p121 = por %p119, %p120
      %p123 = scmp.ne.s32.totalorder %s106, %s122
      %p124 = scmp.eq.s32.totalorder %s98, 0
      %p125 = por %p123, %p124
      %s126 = ssub.s32 %s92, %s99
      %p127 = scmp.eq.s32.totalorder %s126, 0
      %s129 = sadd.s32 %s128, 1
      %s130 = scalar_select %p127, %s128, %s129
      %p133 = pneg %p127
      %p134 = scmp.eq.s32.totalorder %s92, 1
      %p135 = por %p133, %p134
      %p136 = scmp.ne.s32.totalorder %s128, %s131
      %p137 = scmp.eq.s32.totalorder %s92, 0
      %p138 = por %p136, %p137
      %p139 = scmp.ne.s32.totalorder %s128, %s131
      %p140 = scmp.eq.s32.totalorder %s97, 1
      %p141 = por %p139, %p140
      %p142 = scmp.ne.s32.totalorder %s131, %s132
      %p143 = scmp.eq.s32.totalorder %s97, 0
      %p144 = por %p142, %p143
      %p145 = scmp.ne.s32.totalorder %s131, %s132
      %p146 = scmp.eq.s32.totalorder %s98, 1
      %p147 = por %p145, %p146
      %p149 = scmp.ne.s32.totalorder %s132, %s148
      %p150 = scmp.eq.s32.totalorder %s98, 0
      %p151 = por %p149, %p150
      %s152 = ssub.s32 %s92, %s99
      %p153 = scmp.eq.s32.totalorder %s152, 0
      %s155 = sadd.s32 %s154, 1
      %s156 = scalar_select %p153, %s154, %s155
      %p159 = pneg %p153
      %p160 = scmp.eq.s32.totalorder %s92, 1
      %p161 = por %p159, %p160
      %p162 = scmp.ne.s32.totalorder %s154, %s157
      %p163 = scmp.eq.s32.totalorder %s92, 0
      %p164 = por %p162, %p163
      %p165 = scmp.ne.s32.totalorder %s154, %s157
      %p166 = scmp.eq.s32.totalorder %s97, 1
      %p167 = por %p165, %p166
      %p168 = scmp.ne.s32.totalorder %s157, %s158
      %p169 = scmp.eq.s32.totalorder %s97, 0
      %p170 = por %p168, %p169
      %p171 = scmp.ne.s32.totalorder %s157, %s158
      %p172 = scmp.eq.s32.totalorder %s98, 1
      %p173 = por %p171, %p172
      %p175 = scmp.ne.s32.totalorder %s158, %s174
      %p176 = scmp.eq.s32.totalorder %s98, 0
      %p177 = por %p175, %p176
      %s178 = ssub.s32 %s92, %s99
      %p179 = scmp.eq.s32.totalorder %s178, 0
      %s181 = sadd.s32 %s180, 1
      %s182 = scalar_select %p179, %s180, %s181
      %p185 = pneg %p179
      %p186 = scmp.eq.s32.totalorder %s92, 1
      %p187 = por %p185, %p186
      %p188 = scmp.ne.s32.totalorder %s180, %s183
      %p189 = scmp.eq.s32.totalorder %s92, 0
      %p190 = por %p188, %p189
      %p191 = scmp.ne.s32.totalorder %s180, %s183
      %p192 = scmp.eq.s32.totalorder %s97, 1
      %p193 = por %p191, %p192
      %p194 = scmp.ne.s32.totalorder %s183, %s184
      %p195 = scmp.eq.s32.totalorder %s97, 0
      %p196 = por %p194, %p195
      %p197 = scmp.ne.s32.totalorder %s183, %s184
      %p198 = scmp.eq.s32.totalorder %s98, 1
      %p199 = por %p197, %p198
      %p201 = scmp.ne.s32.totalorder %s184, %s200
      %p202 = scmp.eq.s32.totalorder %s98, 0
      %p203 = por %p201, %p202
      %s205 = sadd.s32 %s204, 1
      %p208 = scmp.eq.s32.totalorder %s92, 1
      %p209 = scmp.ne.s32.totalorder %s204, %s206
      %p210 = scmp.eq.s32.totalorder %s92, 0
      %p211 = por %p209, %p210
      %p212 = scmp.ne.s32.totalorder %s204, %s206
      %p213 = scmp.eq.s32.totalorder %s97, 1
      %p214 = por %p212, %p213
      %p215 = scmp.ne.s32.totalorder %s206, %s207
      %p216 = scmp.eq.s32.totalorder %s97, 0
      %p217 = por %p215, %p216
      %p218 = scmp.ne.s32.totalorder %s206, %s207
      %p219 = scmp.eq.s32.totalorder %s98, 1
      %p220 = por %p218, %p219
      %p222 = scmp.ne.s32.totalorder %s207, %s221
      %p223 = scmp.eq.s32.totalorder %s98, 0
      %p224 = por %p222, %p223
      %s226 = sadd.s32 %s225, 1
      %p229 = scmp.eq.s32.totalorder %s92, 1
      %p230 = scmp.ne.s32.totalorder %s225, %s227
      %p231 = scmp.eq.s32.totalorder %s92, 0
      %p232 = por %p230, %p231
      %p233 = scmp.ne.s32.totalorder %s225, %s227
      %p234 = scmp.eq.s32.totalorder %s97, 1
      %p235 = por %p233, %p234
      %p236 = scmp.ne.s32.totalorder %s227, %s228
      %p237 = scmp.eq.s32.totalorder %s97, 0
      %p238 = por %p236, %p237
      %p239 = scmp.ne.s32.totalorder %s227, %s228
      %p240 = scmp.eq.s32.totalorder %s98, 1
      %p241 = por %p239, %p240
      %p243 = scmp.ne.s32.totalorder %s228, %s242
      %p244 = scmp.eq.s32.totalorder %s98, 0
      %p245 = por %p243, %p244
      %s247 = sadd.s32 %s246, 1
      %p250 = scmp.eq.s32.totalorder %s92, 1
      %p251 = scmp.ne.s32.totalorder %s246, %s248
      %p252 = scmp.eq.s32.totalorder %s92, 0
      %p253 = por %p251, %p252
      %p254 = scmp.ne.s32.totalorder %s246, %s248
      %p255 = scmp.eq.s32.totalorder %s97, 1
      %p256 = por %p254, %p255
      %p257 = scmp.ne.s32.totalorder %s248, %s249
      %p258 = scmp.eq.s32.totalorder %s97, 0
      %p259 = por %p257, %p258
      %p260 = scmp.ne.s32.totalorder %s248, %s249
      %p261 = scmp.eq.s32.totalorder %s98, 1
      %p262 = por %p260, %p261
      %p264 = scmp.ne.s32.totalorder %s249, %s263
      %p265 = scmp.eq.s32.totalorder %s98, 0
      %p266 = por %p264, %p265
      %s268 = sadd.s32 %s267, 1
      %p271 = scmp.eq.s32.totalorder %s92, 1
      %p272 = scmp.ne.s32.totalorder %s267, %s269
      %p273 = scmp.eq.s32.totalorder %s92, 0
      %p274 = por %p272, %p273
      %p275 = scmp.ne.s32.totalorder %s267, %s269
      %p276 = scmp.eq.s32.totalorder %s97, 1
      %p277 = por %p275, %p276
      %p278 = scmp.ne.s32.totalorder %s269, %s270
      %p279 = scmp.eq.s32.totalorder %s97, 0
      %p280 = por %p278, %p279
      %p281 = scmp.ne.s32.totalorder %s269, %s270
      %p282 = scmp.eq.s32.totalorder %s98, 1
      %p283 = por %p281, %p282
      %p285 = scmp.ne.s32.totalorder %s270, %s284
      %p286 = scmp.eq.s32.totalorder %s98, 0
      %p287 = por %p285, %p286
      %s289 = sadd.s32 %s288, 1
      %p292 = scmp.eq.s32.totalorder %s92, 1
      %p293 = scmp.ne.s32.totalorder %s288, %s290
      %p294 = scmp.eq.s32.totalorder %s92, 0
      %p295 = por %p293, %p294
      %p296 = scmp.ne.s32.totalorder %s288, %s290
      %p297 = scmp.eq.s32.totalorder %s97, 1
      %p298 = por %p296, %p297
      %p299 = scmp.ne.s32.totalorder %s290, %s291
      %p300 = scmp.eq.s32.totalorder %s97, 0
      %p301 = por %p299, %p300
      %p302 = scmp.ne.s32.totalorder %s290, %s291
      %p303 = scmp.eq.s32.totalorder %s98, 1
      %p304 = por %p302, %p303
      %p306 = scmp.ne.s32.totalorder %s291, %s305
      %p307 = scmp.eq.s32.totalorder %s98, 0
      %p308 = por %p306, %p307
      %s310 = sadd.s32 %s309, 1
      %p313 = scmp.eq.s32.totalorder %s92, 1
      %p314 = scmp.ne.s32.totalorder %s309, %s311
      %p315 = scmp.eq.s32.totalorder %s92, 0
      %p316 = por %p314, %p315
      %p317 = scmp.ne.s32.totalorder %s309, %s311
      %p318 = scmp.eq.s32.totalorder %s97, 1
      %p319 = por %p317, %p318
      %p320 = scmp.ne.s32.totalorder %s311, %s312
      %p321 = scmp.eq.s32.totalorder %s97, 0
      %p322 = por %p320, %p321
      %p323 = scmp.ne.s32.totalorder %s311, %s312
      %p324 = scmp.eq.s32.totalorder %s98, 1
      %p325 = por %p323, %p324
      %p327 = scmp.ne.s32.totalorder %s312, %s326
      %p328 = scmp.eq.s32.totalorder %s98, 0
      %p329 = por %p327, %p328
      %s331 = sadd.s32 %s330, 1
      %p334 = scmp.eq.s32.totalorder %s92, 1
      %p335 = scmp.ne.s32.totalorder %s330, %s332
      %p336 = scmp.eq.s32.totalorder %s92, 0
      %p337 = por %p335, %p336
      %p338 = scmp.ne.s32.totalorder %s330, %s332
      %p339 = scmp.eq.s32.totalorder %s97, 1
      %p340 = por %p338, %p339
      %p341 = scmp.ne.s32.totalorder %s332, %s333
      %p342 = scmp.eq.s32.totalorder %s97, 0
      %p343 = por %p341, %p342
      %p344 = scmp.ne.s32.totalorder %s332, %s333
      %p345 = scmp.eq.s32.totalorder %s98, 1
      %p346 = por %p344, %p345
      %p348 = scmp.ne.s32.totalorder %s333, %s347
      %p349 = scmp.eq.s32.totalorder %s98, 0
      %p350 = por %p348, %p349
      %s352 = sadd.s32 %s351, 1
      %p355 = scmp.eq.s32.totalorder %s92, 1
      %p356 = scmp.ne.s32.totalorder %s351, %s353
      %p357 = scmp.eq.s32.totalorder %s92, 0
      %p358 = por %p356, %p357
      %p359 = scmp.ne.s32.totalorder %s351, %s353
      %p360 = scmp.eq.s32.totalorder %s97, 1
      %p361 = por %p359, %p360
      %p362 = scmp.ne.s32.totalorder %s353, %s354
      %p363 = scmp.eq.s32.totalorder %s97, 0
      %p364 = por %p362, %p363
      %p365 = scmp.ne.s32.totalorder %s353, %s354
      %p366 = scmp.eq.s32.totalorder %s98, 1
      %p367 = por %p365, %p366
      %p369 = scmp.ne.s32.totalorder %s354, %s368
      %p370 = scmp.eq.s32.totalorder %s98, 0
      %p371 = por %p369, %p370
      %s373 = sadd.s32 %s372, 1
      %p376 = scmp.eq.s32.totalorder %s92, 1
      %p377 = scmp.ne.s32.totalorder %s372, %s374
      %p378 = scmp.eq.s32.totalorder %s92, 0
      %p379 = por %p377, %p378
      %p380 = scmp.ne.s32.totalorder %s372, %s374
      %p381 = scmp.eq.s32.totalorder %s97, 1
      %p382 = por %p380, %p381
      %p383 = scmp.ne.s32.totalorder %s374, %s375
      %p384 = scmp.eq.s32.totalorder %s97, 0
      %p385 = por %p383, %p384
      %p386 = scmp.ne.s32.totalorder %s374, %s375
      %p387 = scmp.eq.s32.totalorder %s98, 1
      %p388 = por %p386, %p387
      %p390 = scmp.ne.s32.totalorder %s375, %s389
      %p391 = scmp.eq.s32.totalorder %s98, 0
      %p392 = por %p390, %p391
      %s394 = sadd.s32 %s393, 1
      %p397 = scmp.eq.s32.totalorder %s92, 1
      %p398 = scmp.ne.s32.totalorder %s393, %s395
      %p399 = scmp.eq.s32.totalorder %s92, 0
      %p400 = por %p398, %p399
      %p401 = scmp.ne.s32.totalorder %s393, %s395
      %p402 = scmp.eq.s32.totalorder %s97, 1
      %p403 = por %p401, %p402
      %p404 = scmp.ne.s32.totalorder %s395, %s396
      %p405 = scmp.eq.s32.totalorder %s97, 0
      %p406 = por %p404, %p405
      %p407 = scmp.ne.s32.totalorder %s395, %s396
      %p408 = scmp.eq.s32.totalorder %s98, 1
      %p409 = por %p407, %p408
      %p411 = scmp.ne.s32.totalorder %s396, %s410
      %p412 = scmp.eq.s32.totalorder %s98, 0
      %p413 = por %p411, %p412
      %s415 = sadd.s32 %s414, 1
      %p418 = scmp.eq.s32.totalorder %s92, 1
      %p419 = scmp.ne.s32.totalorder %s414, %s416
      %p420 = scmp.eq.s32.totalorder %s92, 0
      %p421 = por %p419, %p420
      %p422 = scmp.ne.s32.totalorder %s414, %s416
      %p423 = scmp.eq.s32.totalorder %s97, 1
      %p424 = por %p422, %p423
      %p425 = scmp.ne.s32.totalorder %s416, %s417
      %p426 = scmp.eq.s32.totalorder %s97, 0
      %p427 = por %p425, %p426
      %p428 = scmp.ne.s32.totalorder %s416, %s417
      %p429 = scmp.eq.s32.totalorder %s98, 1
      %p430 = por %p428, %p429
      %p432 = scmp.ne.s32.totalorder %s417, %s431
      %p433 = scmp.eq.s32.totalorder %s98, 0
      %p434 = por %p432, %p433
      %s436 = sadd.s32 %s435, 1
      %p439 = scmp.eq.s32.totalorder %s92, 1
      %p440 = scmp.ne.s32.totalorder %s435, %s437
      %p441 = scmp.eq.s32.totalorder %s92, 0
      %p442 = por %p440, %p441
      %p443 = scmp.ne.s32.totalorder %s435, %s437
      %p444 = scmp.eq.s32.totalorder %s97, 1
      %p445 = por %p443, %p444
      %p446 = scmp.ne.s32.totalorder %s437, %s438
      %p447 = scmp.eq.s32.totalorder %s97, 0
      %p448 = por %p446, %p447
      %p449 = scmp.ne.s32.totalorder %s437, %s438
      %p450 = scmp.eq.s32.totalorder %s98, 1
      %p451 = por %p449, %p450
      %p453 = scmp.ne.s32.totalorder %s438, %s452
      %p454 = scmp.eq.s32.totalorder %s98, 0
      %p455 = por %p453, %p454
      %s457 = sadd.s32 %s456, 1
      %p460 = scmp.eq.s32.totalorder %s92, 1
      %p461 = scmp.ne.s32.totalorder %s456, %s458
      %p462 = scmp.eq.s32.totalorder %s92, 0
      %p463 = por %p461, %p462
      %p464 = scmp.ne.s32.totalorder %s456, %s458
      %p465 = scmp.eq.s32.totalorder %s97, 1
      %p466 = por %p464, %p465
      %p467 = scmp.ne.s32.totalorder %s458, %s459
      %p468 = scmp.eq.s32.totalorder %s97, 0
      %p469 = por %p467, %p468
      %p470 = scmp.ne.s32.totalorder %s458, %s459
      %p471 = scmp.eq.s32.totalorder %s98, 1
      %p472 = por %p470, %p471
      %p474 = scmp.ne.s32.totalorder %s459, %s473
      %p475 = scmp.eq.s32.totalorder %s98, 0
      %p476 = por %p474, %p475
      %s478 = sadd.s32 %s477, 1
      %p481 = scmp.eq.s32.totalorder %s92, 1
      %p482 = scmp.ne.s32.totalorder %s477, %s479
      %p483 = scmp.eq.s32.totalorder %s92, 0
      %p484 = por %p482, %p483
      %p485 = scmp.ne.s32.totalorder %s477, %s479
      %p486 = scmp.eq.s32.totalorder %s97, 1
      %p487 = por %p485, %p486
      %p488 = scmp.ne.s32.totalorder %s479, %s480
      %p489 = scmp.eq.s32.totalorder %s97, 0
      %p490 = por %p488, %p489
      %p491 = scmp.ne.s32.totalorder %s479, %s480
      %p492 = scmp.eq.s32.totalorder %s98, 1
      %p493 = por %p491, %p492
      %p495 = scmp.ne.s32.totalorder %s480, %s494
      %p496 = scmp.eq.s32.totalorder %s98, 0
      %p497 = por %p495, %p496
      %s499 = sadd.s32 %s498, 1
      %p502 = scmp.eq.s32.totalorder %s92, 1
      %p503 = scmp.ne.s32.totalorder %s498, %s500
      %p504 = scmp.eq.s32.totalorder %s92, 0
      %p505 = por %p503, %p504
      %p506 = scmp.ne.s32.totalorder %s498, %s500
      %p507 = scmp.eq.s32.totalorder %s97, 1
      %p508 = por %p506, %p507
      %p509 = scmp.ne.s32.totalorder %s500, %s501
      %p510 = scmp.eq.s32.totalorder %s97, 0
      %p511 = por %p509, %p510
      %p512 = scmp.ne.s32.totalorder %s500, %s501
      %p513 = scmp.eq.s32.totalorder %s98, 1
      %p514 = por %p512, %p513
      %p516 = scmp.ne.s32.totalorder %s501, %s515
      %p517 = scmp.eq.s32.totalorder %s98, 0
      %p518 = por %p516, %p517
      %s520 = sadd.s32 %s519, 1
      %p523 = scmp.eq.s32.totalorder %s92, 1
      %p524 = scmp.ne.s32.totalorder %s519, %s521
      %p525 = scmp.eq.s32.totalorder %s92, 0
      %p526 = por %p524, %p525
      %p527 = scmp.ne.s32.totalorder %s519, %s521
      %p528 = scmp.eq.s32.totalorder %s97, 1
      %p529 = por %p527, %p528
      %p530 = scmp.ne.s32.totalorder %s521, %s522
      %p531 = scmp.eq.s32.totalorder %s97, 0
      %p532 = por %p530, %p531
      %p533 = scmp.ne.s32.totalorder %s521, %s522
      %p534 = scmp.eq.s32.totalorder %s98, 1
      %p535 = por %p533, %p534
      %p537 = scmp.ne.s32.totalorder %s522, %s536
      %p538 = scmp.eq.s32.totalorder %s98, 0
      %p539 = por %p537, %p538
      %s541 = sadd.s32 %s540, 1
      %p544 = scmp.eq.s32.totalorder %s92, 1
      %p545 = scmp.ne.s32.totalorder %s540, %s542
      %p546 = scmp.eq.s32.totalorder %s92, 0
      %p547 = por %p545, %p546
      %p548 = scmp.ne.s32.totalorder %s540, %s542
      %p549 = scmp.eq.s32.totalorder %s97, 1
      %p550 = por %p548, %p549
      %p551 = scmp.ne.s32.totalorder %s542, %s543
      %p552 = scmp.eq.s32.totalorder %s97, 0
      %p553 = por %p551, %p552
      %p554 = scmp.ne.s32.totalorder %s542, %s543
      %p555 = scmp.eq.s32.totalorder %s98, 1
      %p556 = por %p554, %p555
      %p558 = scmp.ne.s32.totalorder %s543, %s557
      %p559 = scmp.eq.s32.totalorder %s98, 0
      %p560 = por %p558, %p559
      %s562 = sadd.s32 %s561, 1
      %p565 = scmp.eq.s32.totalorder %s92, 1
      %p566 = scmp.ne.s32.totalorder %s561, %s563
      %p567 = scmp.eq.s32.totalorder %s92, 0
      %p568 = por %p566, %p567
      %p569 = scmp.ne.s32.totalorder %s561, %s563
      %p570 = scmp.eq.s32.totalorder %s97, 1
      %p571 = por %p569, %p570
      %p572 = scmp.ne.s32.totalorder %s563, %s564
      %p573 = scmp.eq.s32.totalorder %s97, 0
      %p574 = por %p572, %p573
      %p575 = scmp.ne.s32.totalorder %s563, %s564
      %p576 = scmp.eq.s32.totalorder %s98, 1
      %p577 = por %p575, %p576
      %p579 = scmp.ne.s32.totalorder %s564, %s578
      %p580 = scmp.eq.s32.totalorder %s98, 0
      %p581 = por %p579, %p580
      %s583 = sadd.s32 %s582, 1
      %p586 = scmp.eq.s32.totalorder %s92, 1
      %p587 = scmp.ne.s32.totalorder %s582, %s584
      %p588 = scmp.eq.s32.totalorder %s92, 0
      %p589 = por %p587, %p588
      %p590 = scmp.ne.s32.totalorder %s582, %s584
      %p591 = scmp.eq.s32.totalorder %s97, 1
      %p592 = por %p590, %p591
      %p593 = scmp.ne.s32.totalorder %s584, %s585
      %p594 = scmp.eq.s32.totalorder %s97, 0
      %p595 = por %p593, %p594
      %p596 = scmp.ne.s32.totalorder %s584, %s585
      %p597 = scmp.eq.s32.totalorder %s98, 1
      %p598 = por %p596, %p597
      %p600 = scmp.ne.s32.totalorder %s585, %s599
      %p601 = scmp.eq.s32.totalorder %s98, 0
      %p602 = por %p600, %p601
      %s604 = sadd.s32 %s603, 1
      %p607 = scmp.eq.s32.totalorder %s92, 1
      %p608 = scmp.ne.s32.totalorder %s603, %s605
      %p609 = scmp.eq.s32.totalorder %s92, 0
      %p610 = por %p608, %p609
      %p611 = scmp.ne.s32.totalorder %s603, %s605
      %p612 = scmp.eq.s32.totalorder %s97, 1
      %p613 = por %p611, %p612
      %p614 = scmp.ne.s32.totalorder %s605, %s606
      %p615 = scmp.eq.s32.totalorder %s97, 0
      %p616 = por %p614, %p615
      %p617 = scmp.ne.s32.totalorder %s605, %s606
      %p618 = scmp.eq.s32.totalorder %s98, 1
      %p619 = por %p617, %p618
      %p621 = scmp.ne.s32.totalorder %s606, %s620
      %p622 = scmp.eq.s32.totalorder %s98, 0
      %p623 = por %p621, %p622
      %s625 = sadd.s32 %s624, 1
      %p628 = scmp.eq.s32.totalorder %s92, 1
      %p629 = scmp.ne.s32.totalorder %s624, %s626
      %p630 = scmp.eq.s32.totalorder %s92, 0
      %p631 = por %p629, %p630
      %p632 = scmp.ne.s32.totalorder %s624, %s626
      %p633 = scmp.eq.s32.totalorder %s97, 1
      %p634 = por %p632, %p633
      %p635 = scmp.ne.s32.totalorder %s626, %s627
      %p636 = scmp.eq.s32.totalorder %s97, 0
      %p637 = por %p635, %p636
      %p638 = scmp.ne.s32.totalorder %s626, %s627
      %p639 = scmp.eq.s32.totalorder %s98, 1
      %p640 = por %p638, %p639
      %p642 = scmp.ne.s32.totalorder %s627, %s641
      %p643 = scmp.eq.s32.totalorder %s98, 0
      %p644 = por %p642, %p643
      %s646 = sadd.s32 %s645, 1
      %p649 = scmp.eq.s32.totalorder %s92, 1
      %p650 = scmp.ne.s32.totalorder %s645, %s647
      %p651 = scmp.eq.s32.totalorder %s92, 0
      %p652 = por %p650, %p651
      %p653 = scmp.ne.s32.totalorder %s645, %s647
      %p654 = scmp.eq.s32.totalorder %s97, 1
      %p655 = por %p653, %p654
      %p656 = scmp.ne.s32.totalorder %s647, %s648
      %p657 = scmp.eq.s32.totalorder %s97, 0
      %p658 = por %p656, %p657
      %p659 = scmp.ne.s32.totalorder %s647, %s648
      %p660 = scmp.eq.s32.totalorder %s98, 1
      %p661 = por %p659, %p660
      %p663 = scmp.ne.s32.totalorder %s648, %s662
      %p664 = scmp.eq.s32.totalorder %s98, 0
      %p665 = por %p663, %p664
      %s667 = sadd.s32 %s666, 1
      %p670 = scmp.eq.s32.totalorder %s92, 1
      %p671 = scmp.ne.s32.totalorder %s666, %s668
      %p672 = scmp.eq.s32.totalorder %s92, 0
      %p673 = por %p671, %p672
      %p674 = scmp.ne.s32.totalorder %s666, %s668
      %p675 = scmp.eq.s32.totalorder %s97, 1
      %p676 = por %p674, %p675
      %p677 = scmp.ne.s32.totalorder %s668, %s669
      %p678 = scmp.eq.s32.totalorder %s97, 0
      %p679 = por %p677, %p678
      %p680 = scmp.ne.s32.totalorder %s668, %s669
      %p681 = scmp.eq.s32.totalorder %s98, 1
      %p682 = por %p680, %p681
      %p684 = scmp.ne.s32.totalorder %s669, %s683
      %p685 = scmp.eq.s32.totalorder %s98, 0
      %p686 = por %p684, %p685
      %s688 = sadd.s32 %s687, 1
      %p691 = scmp.eq.s32.totalorder %s92, 1
      %p692 = scmp.ne.s32.totalorder %s687, %s689
      %p693 = scmp.eq.s32.totalorder %s92, 0
      %p694 = por %p692, %p693
      %p695 = scmp.ne.s32.totalorder %s687, %s689
      %p696 = scmp.eq.s32.totalorder %s97, 1
      %p697 = por %p695, %p696
      %p698 = scmp.ne.s32.totalorder %s689, %s690
      %p699 = scmp.eq.s32.totalorder %s97, 0
      %p700 = por %p698, %p699
      %p701 = scmp.ne.s32.totalorder %s689, %s690
      %p702 = scmp.eq.s32.totalorder %s98, 1
      %p703 = por %p701, %p702
      %p705 = scmp.ne.s32.totalorder %s690, %s704
      %p706 = scmp.eq.s32.totalorder %s98, 0
      %p707 = por %p705, %p706
      %s709 = sadd.s32 %s708, 1
      %p712 = scmp.eq.s32.totalorder %s92, 1
      %p713 = scmp.ne.s32.totalorder %s708, %s710
      %p714 = scmp.eq.s32.totalorder %s92, 0
      %p715 = por %p713, %p714
      %p716 = scmp.ne.s32.totalorder %s708, %s710
      %p717 = scmp.eq.s32.totalorder %s97, 1
      %p718 = por %p716, %p717
      %p719 = scmp.ne.s32.totalorder %s710, %s711
      %p720 = scmp.eq.s32.totalorder %s97, 0
      %p721 = por %p719, %p720
      %p722 = scmp.ne.s32.totalorder %s710, %s711
      %p723 = scmp.eq.s32.totalorder %s98, 1
      %p724 = por %p722, %p723
      %p726 = scmp.ne.s32.totalorder %s711, %s725
      %p727 = scmp.eq.s32.totalorder %s98, 0
      %p728 = por %p726, %p727
      %s730 = sadd.s32 %s729, 1
      %p733 = scmp.eq.s32.totalorder %s92, 1
      %p734 = scmp.ne.s32.totalorder %s729, %s731
      %p735 = scmp.eq.s32.totalorder %s92, 0
      %p736 = por %p734, %p735
      %p737 = scmp.ne.s32.totalorder %s729, %s731
      %p738 = scmp.eq.s32.totalorder %s97, 1
      %p739 = por %p737, %p738
      %p740 = scmp.ne.s32.totalorder %s731, %s732
      %p741 = scmp.eq.s32.totalorder %s97, 0
      %p742 = por %p740, %p741
      %p743 = scmp.ne.s32.totalorder %s731, %s732
      %p744 = scmp.eq.s32.totalorder %s98, 1
      %p745 = por %p743, %p744
      %p747 = scmp.ne.s32.totalorder %s732, %s746
      %p748 = scmp.eq.s32.totalorder %s98, 0
      %p749 = por %p747, %p748
      %s751 = sadd.s32 %s750, 1
      %p754 = scmp.eq.s32.totalorder %s92, 1
      %p755 = scmp.ne.s32.totalorder %s750, %s752
      %p756 = scmp.eq.s32.totalorder %s92, 0
      %p757 = por %p755, %p756
      %p758 = scmp.ne.s32.totalorder %s750, %s752
      %p759 = scmp.eq.s32.totalorder %s97, 1
      %p760 = por %p758, %p759
      %p761 = scmp.ne.s32.totalorder %s752, %s753
      %p762 = scmp.eq.s32.totalorder %s97, 0
      %p763 = por %p761, %p762
      %p764 = scmp.ne.s32.totalorder %s752, %s753
      %p765 = scmp.eq.s32.totalorder %s98, 1
      %p766 = por %p764, %p765
      %p768 = scmp.ne.s32.totalorder %s753, %s767
      %p769 = scmp.eq.s32.totalorder %s98, 0
      %p770 = por %p768, %p769
      %s772 = sadd.s32 %s771, 1
      %p775 = scmp.eq.s32.totalorder %s92, 1
      %p776 = scmp.ne.s32.totalorder %s771, %s773
      %p777 = scmp.eq.s32.totalorder %s92, 0
      %p778 = por %p776, %p777
      %p779 = scmp.ne.s32.totalorder %s771, %s773
      %p780 = scmp.eq.s32.totalorder %s97, 1
      %p781 = por %p779, %p780
      %p782 = scmp.ne.s32.totalorder %s773, %s774
      %p783 = scmp.eq.s32.totalorder %s97, 0
      %p784 = por %p782, %p783
      %p785 = scmp.ne.s32.totalorder %s773, %s774
      %p786 = scmp.eq.s32.totalorder %s98, 1
      %p787 = por %p785, %p786
      %p789 = scmp.ne.s32.totalorder %s774, %s788
      %p790 = scmp.eq.s32.totalorder %s98, 0
      %p791 = por %p789, %p790
      %s793 = sadd.s32 %s792, 1
      %p796 = scmp.eq.s32.totalorder %s92, 1
      %p797 = scmp.ne.s32.totalorder %s792, %s794
      %p798 = scmp.eq.s32.totalorder %s92, 0
      %p799 = por %p797, %p798
      %p800 = scmp.ne.s32.totalorder %s792, %s794
      %p801 = scmp.eq.s32.totalorder %s97, 1
      %p802 = por %p800, %p801
      %p803 = scmp.ne.s32.totalorder %s794, %s795
      %p804 = scmp.eq.s32.totalorder %s97, 0
      %p805 = por %p803, %p804
      %p806 = scmp.ne.s32.totalorder %s794, %s795
      %p807 = scmp.eq.s32.totalorder %s98, 1
      %p808 = por %p806, %p807
      %p810 = scmp.ne.s32.totalorder %s795, %s809
      %p811 = scmp.eq.s32.totalorder %s98, 0
      %p812 = por %p810, %p811
      %s814 = sadd.s32 %s813, 1
      %p817 = scmp.eq.s32.totalorder %s92, 1
      %p818 = scmp.ne.s32.totalorder %s813, %s815
      %p819 = scmp.eq.s32.totalorder %s92, 0
      %p820 = por %p818, %p819
      %p821 = scmp.ne.s32.totalorder %s813, %s815
      %p822 = scmp.eq.s32.totalorder %s97, 1
      %p823 = por %p821, %p822
      %p824 = scmp.ne.s32.totalorder %s815, %s816
      %p825 = scmp.eq.s32.totalorder %s97, 0
      %p826 = por %p824, %p825
      %p827 = scmp.ne.s32.totalorder %s815, %s816
      %p828 = scmp.eq.s32.totalorder %s98, 1
      %p829 = por %p827, %p828
      %p831 = scmp.ne.s32.totalorder %s816, %s830
      %p832 = scmp.eq.s32.totalorder %s98, 0
      %p833 = por %p831, %p832
      %s835 = sadd.s32 %s834, 1
      %p838 = scmp.eq.s32.totalorder %s92, 1
      %p839 = scmp.ne.s32.totalorder %s834, %s836
      %p840 = scmp.eq.s32.totalorder %s92, 0
      %p841 = por %p839, %p840
      %p842 = scmp.ne.s32.totalorder %s834, %s836
      %p843 = scmp.eq.s32.totalorder %s97, 1
      %p844 = por %p842, %p843
      %p845 = scmp.ne.s32.totalorder %s836, %s837
      %p846 = scmp.eq.s32.totalorder %s97, 0
      %p847 = por %p845, %p846
      %p848 = scmp.ne.s32.totalorder %s836, %s837
      %p849 = scmp.eq.s32.totalorder %s98, 1
      %p850 = por %p848, %p849
      %p852 = scmp.ne.s32.totalorder %s837, %s851
      %p853 = scmp.eq.s32.totalorder %s98, 0
      %p854 = por %p852, %p853
      %s856 = sadd.s32 %s855, 1
      %p859 = scmp.eq.s32.totalorder %s92, 1
      %p860 = scmp.ne.s32.totalorder %s855, %s857
      %p861 = scmp.eq.s32.totalorder %s92, 0
      %p862 = por %p860, %p861
      %p863 = scmp.ne.s32.totalorder %s855, %s857
      %p864 = scmp.eq.s32.totalorder %s97, 1
      %p865 = por %p863, %p864
      %p866 = scmp.ne.s32.totalorder %s857, %s858
      %p867 = scmp.eq.s32.totalorder %s97, 0
      %p868 = por %p866, %p867
      %p869 = scmp.ne.s32.totalorder %s857, %s858
      %p870 = scmp.eq.s32.totalorder %s98, 1
      %p871 = por %p869, %p870
      %p873 = scmp.ne.s32.totalorder %s858, %s872
      %p874 = scmp.eq.s32.totalorder %s98, 0
      %p875 = por %p873, %p874
      %s877 = sadd.s32 %s876, 1
      %p880 = scmp.eq.s32.totalorder %s92, 1
      %p881 = scmp.ne.s32.totalorder %s876, %s878
      %p882 = scmp.eq.s32.totalorder %s92, 0
      %p883 = por %p881, %p882
      %p884 = scmp.ne.s32.totalorder %s876, %s878
      %p885 = scmp.eq.s32.totalorder %s97, 1
      %p886 = por %p884, %p885
      %p887 = scmp.ne.s32.totalorder %s878, %s879
      %p888 = scmp.eq.s32.totalorder %s97, 0
      %p889 = por %p887, %p888
      %p890 = scmp.ne.s32.totalorder %s878, %s879
      %p891 = scmp.eq.s32.totalorder %s98, 1
      %p892 = por %p890, %p891
      %p894 = scmp.ne.s32.totalorder %s879, %s893
      %p895 = scmp.eq.s32.totalorder %s98, 0
      %p896 = por %p894, %p895
      %s898 = sadd.s32 %s897, 1
      %p901 = scmp.eq.s32.totalorder %s92, 1
      %p902 = scmp.ne.s32.totalorder %s897, %s899
      %p903 = scmp.eq.s32.totalorder %s92, 0
      %p904 = por %p902, %p903
      %p905 = scmp.ne.s32.totalorder %s897, %s899
      %p906 = scmp.eq.s32.totalorder %s97, 1
      %p907 = por %p905, %p906
      %p908 = scmp.ne.s32.totalorder %s899, %s900
      %p909 = scmp.eq.s32.totalorder %s97, 0
      %p910 = por %p908, %p909
      %p911 = scmp.ne.s32.totalorder %s899, %s900
      %p912 = scmp.eq.s32.totalorder %s98, 1
      %p913 = por %p911, %p912
      %p915 = scmp.ne.s32.totalorder %s900, %s914
      %p916 = scmp.eq.s32.totalorder %s98, 0
      %p917 = por %p915, %p916
      %s918 = ssub.s32 %s92, %s99
      %p919 = scmp.eq.s32.totalorder %s918, 0
      %s921 = sadd.s32 %s920, 1
      %s922 = scalar_select %p919, %s920, %s921
      %p925 = pneg %p919
      %p926 = scmp.eq.s32.totalorder %s92, 1
      %p927 = por %p925, %p926
      %p928 = scmp.ne.s32.totalorder %s920, %s923
      %p929 = scmp.eq.s32.totalorder %s92, 0
      %p930 = por %p928, %p929
      %p931 = scmp.ne.s32.totalorder %s920, %s923
      %p932 = scmp.eq.s32.totalorder %s97, 1
      %p933 = por %p931, %p932
      %p934 = scmp.ne.s32.totalorder %s923, %s924
      %p935 = scmp.eq.s32.totalorder %s97, 0
      %p936 = por %p934, %p935
      %p937 = scmp.ne.s32.totalorder %s923, %s924
      %p938 = scmp.eq.s32.totalorder %s98, 1
      %p939 = por %p937, %p938
      %p941 = scmp.ne.s32.totalorder %s924, %s940
      %p942 = scmp.eq.s32.totalorder %s98, 0
      %p943 = por %p941, %p942
      %s944 = ssub.s32 %s92, %s99
      %p945 = scmp.eq.s32.totalorder %s944, 0
      %s947 = sadd.s32 %s946, 1
      %s948 = scalar_select %p945, %s946, %s947
      %p951 = pneg %p945
      %p952 = scmp.eq.s32.totalorder %s92, 1
      %p953 = por %p951, %p952
      %p954 = scmp.ne.s32.totalorder %s946, %s949
      %p955 = scmp.eq.s32.totalorder %s92, 0
      %p956 = por %p954, %p955
      %p957 = scmp.ne.s32.totalorder %s946, %s949
      %p958 = scmp.eq.s32.totalorder %s97, 1
      %p959 = por %p957, %p958
      %p960 = scmp.ne.s32.totalorder %s949, %s950
      %p961 = scmp.eq.s32.totalorder %s97, 0
      %p962 = por %p960, %p961
      %p963 = scmp.ne.s32.totalorder %s949, %s950
      %p964 = scmp.eq.s32.totalorder %s98, 1
      %p965 = por %p963, %p964
      %p967 = scmp.ne.s32.totalorder %s950, %s966
      %p968 = scmp.eq.s32.totalorder %s98, 0
      %p969 = por %p967, %p968
      %p970 = scmp.le.s32.totalorder 1, %s92
      %p971 = scmp.lt.s32.totalorder %s92, 3
      %p972 = pnand %p970, %p971
      %p973 = pneg %p972
      // Predicated region
      $region9: #{_lambda_.3} parent=5 // pred_check
        _
      $region10: #{_lambda_.3} parent=5 // pred_check_branch
        %975 = sbr.rel (%p972) target = $region12
      $region11: #{_lambda_.3} parent=5 // pred_region
        %s976 = ssub.s32 %s92, 1
        // Predicated region
        $region13: #{_lambda_.3} parent=11 // pred_check
          %p977 = pneg %p217
        $region14: #{_lambda_.3} parent=11 // pred_check_branch
          %979 = sbr.rel (%p977) target = $region16
        $region15: #{_lambda_.3} parent=11 // pred_region
          _
        $region16: #{_lambda_.3} parent=11 // pred_fallthru
          _
        // Predicated region
        $region17: #{_lambda_.3} parent=11 // pred_check
          %p980 = pneg %p238
        $region18: #{_lambda_.3} parent=11 // pred_check_branch
          %982 = sbr.rel (%p980) target = $region20
        $region19: #{_lambda_.3} parent=11 // pred_region
          _
        $region20: #{_lambda_.3} parent=11 // pred_fallthru
          _
        // Predicated region
        $region21: #{_lambda_.3} parent=11 // pred_check
          %p983 = pneg %p259
        $region22: #{_lambda_.3} parent=11 // pred_check_branch
          %985 = sbr.rel (%p983) target = $region24
        $region23: #{_lambda_.3} parent=11 // pred_region
          %987 = vsyncadd [#allocation3], 0
          %s988 = sshll.u32 %s13, 4
          %s989 = int_to_ptr.hbm [resolvable:$true] %s988
          %s990 = sshll.u32 [#allocation2], 4
          %s991 = int_to_ptr.vmem [resolvable:$true] %s990
          %996 = dma.hbm_to_vmem [thread:$0]  %s989, 6144, %s991, [#allocation3], 192, 192, 12
        $region24: #{_lambda_.3} parent=11 // pred_fallthru
          _
        // Predicated region
        $region25: #{_lambda_.3} parent=11 // pred_check
          %p997 = pneg %p280
        $region26: #{_lambda_.3} parent=11 // pred_check_branch
          %999 = sbr.rel (%p997) target = $region28
        $region27: #{_lambda_.3} parent=11 // pred_region
          _
        $region28: #{_lambda_.3} parent=11 // pred_fallthru
          _
        // Predicated region
        $region29: #{_lambda_.3} parent=11 // pred_check
          %p1000 = pneg %p301
        $region30: #{_lambda_.3} parent=11 // pred_check_branch
          %1002 = sbr.rel (%p1000) target = $region32
        $region31: #{_lambda_.3} parent=11 // pred_region
          %1004 = vsyncadd [#allocation5], 0
          %s1005 = sshll.u32 %s17, 4
          %s1006 = int_to_ptr.hbm [resolvable:$true] %s1005
          %s1007 = sshll.u32 [#allocation4], 4
          %s1008 = int_to_ptr.vmem [resolvable:$true] %s1007
          %1013 = dma.hbm_to_vmem [thread:$0]  %s1006, 2048, %s1008, [#allocation5], 64, 64, 4
        $region32: #{_lambda_.3} parent=11 // pred_fallthru
          _
        // Predicated region
        $region33: #{_lambda_.3} parent=11 // pred_check
          %p1014 = pneg %p322
        $region34: #{_lambda_.3} parent=11 // pred_check_branch
          %1016 = sbr.rel (%p1014) target = $region36
        $region35: #{_lambda_.3} parent=11 // pred_region
          _
        $region36: #{_lambda_.3} parent=11 // pred_fallthru
          _
        // Predicated region
        $region37: #{_lambda_.3} parent=11 // pred_check
          %p1017 = pneg %p343
        $region38: #{_lambda_.3} parent=11 // pred_check_branch
          %1019 = sbr.rel (%p1017) target = $region40
        $region39: #{_lambda_.3} parent=11 // pred_region
          _
        $region40: #{_lambda_.3} parent=11 // pred_fallthru
          _
        // Predicated region
        $region41: #{_lambda_.3} parent=11 // pred_check
          %p1020 = pneg %p364
        $region42: #{_lambda_.3} parent=11 // pred_check_branch
          %1022 = sbr.rel (%p1020) target = $region44
        $region43: #{_lambda_.3} parent=11 // pred_region
          _
        $region44: #{_lambda_.3} parent=11 // pred_fallthru
          _
        // Predicated region
        $region45: #{_lambda_.3} parent=11 // pred_check
          %p1023 = pneg %p385
        $region46: #{_lambda_.3} parent=11 // pred_check_branch
          %1025 = sbr.rel (%p1023) target = $region48
        $region47: #{_lambda_.3} parent=11 // pred_region
          %1027 = vsyncadd [#allocation5], 0
          %s1028 = sshll.u32 %s25, 4
          %s1029 = int_to_ptr.hbm [resolvable:$true] %s1028
          %s1030 = sshll.u32 [#allocation6], 4
          %s1031 = int_to_ptr.vmem [resolvable:$true] %s1030
          %1036 = dma.hbm_to_vmem [thread:$0]  %s1029, 2048, %s1031, [#allocation5], 64, 64, 4
        $region48: #{_lambda_.3} parent=11 // pred_fallthru
          _
        // Predicated region
        $region49: #{_lambda_.3} parent=11 // pred_check
          %p1037 = pneg %p406
        $region50: #{_lambda_.3} parent=11 // pred_check_branch
          %1039 = sbr.rel (%p1037) target = $region52
        $region51: #{_lambda_.3} parent=11 // pred_region
          _
        $region52: #{_lambda_.3} parent=11 // pred_fallthru
          _
        // Predicated region
        $region53: #{_lambda_.3} parent=11 // pred_check
          %p1040 = pneg %p427
        $region54: #{_lambda_.3} parent=11 // pred_check_branch
          %1042 = sbr.rel (%p1040) target = $region56
        $region55: #{_lambda_.3} parent=11 // pred_region
          %1044 = vsyncadd [#allocation8], 0
          %s1045 = sshll.u32 %s29, 4
          %s1046 = int_to_ptr.hbm [resolvable:$true] %s1045
          %s1047 = sshll.u32 [#allocation7], 4
          %s1048 = int_to_ptr.vmem [resolvable:$true] %s1047
          %1053 = dma.hbm_to_vmem [thread:$0]  %s1046, 4096, %s1048, [#allocation8], 128, 128, 8
        $region56: #{_lambda_.3} parent=11 // pred_fallthru
          _
        // Predicated region
        $region57: #{_lambda_.3} parent=11 // pred_check
          %p1054 = pneg %p448
        $region58: #{_lambda_.3} parent=11 // pred_check_branch
          %1056 = sbr.rel (%p1054) target = $region60
        $region59: #{_lambda_.3} parent=11 // pred_region
          _
        $region60: #{_lambda_.3} parent=11 // pred_fallthru
          _
        // Predicated region
        $region61: #{_lambda_.3} parent=11 // pred_check
          %p1057 = pneg %p469
        $region62: #{_lambda_.3} parent=11 // pred_check_branch
          %1059 = sbr.rel (%p1057) target = $region64
        $region63: #{_lambda_.3} parent=11 // pred_region
          %1061 = vsyncadd [#allocation8], 0
          %s1062 = sshll.u32 %s33, 4
          %s1063 = int_to_ptr.hbm [resolvable:$true] %s1062
          %s1064 = sshll.u32 [#allocation9], 4
          %s1065 = int_to_ptr.vmem [resolvable:$true] %s1064
          %1070 = dma.hbm_to_vmem [thread:$0]  %s1063, 2048, %s1065, [#allocation8], 64, 64, 4
        $region64: #{_lambda_.3} parent=11 // pred_fallthru
          _
        // Predicated region
        $region65: #{_lambda_.3} parent=11 // pred_check
          %p1071 = pneg %p490
        $region66: #{_lambda_.3} parent=11 // pred_check_branch
          %1073 = sbr.rel (%p1071) target = $region68
        $region67: #{_lambda_.3} parent=11 // pred_region
          _
        $region68: #{_lambda_.3} parent=11 // pred_fallthru
          _
        // Predicated region
        $region69: #{_lambda_.3} parent=11 // pred_check
          %p1074 = pneg %p511
        $region70: #{_lambda_.3} parent=11 // pred_check_branch
          %1076 = sbr.rel (%p1074) target = $region72
        $region71: #{_lambda_.3} parent=11 // pred_region
          _
        $region72: #{_lambda_.3} parent=11 // pred_fallthru
          _
        // Predicated region
        $region73: #{_lambda_.3} parent=11 // pred_check
          %p1077 = pneg %p532
        $region74: #{_lambda_.3} parent=11 // pred_check_branch
          %1079 = sbr.rel (%p1077) target = $region76
        $region75: #{_lambda_.3} parent=11 // pred_region
          _
        $region76: #{_lambda_.3} parent=11 // pred_fallthru
          _
        // Predicated region
        $region77: #{_lambda_.3} parent=11 // pred_check
          %p1080 = pneg %p553
        $region78: #{_lambda_.3} parent=11 // pred_check_branch
          %1082 = sbr.rel (%p1080) target = $region80
        $region79: #{_lambda_.3} parent=11 // pred_region
          %1084 = vsyncadd [#allocation11], 0
          %s1085 = sshll.u32 %s41, 4
          %s1086 = int_to_ptr.hbm [resolvable:$true] %s1085
          %s1087 = sshll.u32 [#allocation10], 4
          %s1088 = int_to_ptr.vmem [resolvable:$true] %s1087
          %1093 = dma.hbm_to_vmem [thread:$0]  %s1086, 2048, %s1088, [#allocation11], 64, 64, 4
        $region80: #{_lambda_.3} parent=11 // pred_fallthru
          _
        // Predicated region
        $region81: #{_lambda_.3} parent=11 // pred_check
          %p1094 = pneg %p574
        $region82: #{_lambda_.3} parent=11 // pred_check_branch
          %1096 = sbr.rel (%p1094) target = $region84
        $region83: #{_lambda_.3} parent=11 // pred_region
          _
        $region84: #{_lambda_.3} parent=11 // pred_fallthru
          _
        // Predicated region
        $region85: #{_lambda_.3} parent=11 // pred_check
          %p1097 = pneg %p595
        $region86: #{_lambda_.3} parent=11 // pred_check_branch
          %1099 = sbr.rel (%p1097) target = $region88
        $region87: #{_lambda_.3} parent=11 // pred_region
          %1101 = vsyncadd [#allocation11], 0
          %s1102 = sshll.u32 %s45, 4
          %s1103 = int_to_ptr.hbm [resolvable:$true] %s1102
          %s1104 = sshll.u32 [#allocation12], 4
          %s1105 = int_to_ptr.vmem [resolvable:$true] %s1104
          %1110 = dma.hbm_to_vmem [thread:$0]  %s1103, 2048, %s1105, [#allocation11], 64, 64, 4
        $region88: #{_lambda_.3} parent=11 // pred_fallthru
          _
        // Predicated region
        $region89: #{_lambda_.3} parent=11 // pred_check
          %p1111 = pneg %p616
        $region90: #{_lambda_.3} parent=11 // pred_check_branch
          %1113 = sbr.rel (%p1111) target = $region92
        $region91: #{_lambda_.3} parent=11 // pred_region
          _
        $region92: #{_lambda_.3} parent=11 // pred_fallthru
          _
        // Predicated region
        $region93: #{_lambda_.3} parent=11 // pred_check
          %p1114 = pneg %p637
        $region94: #{_lambda_.3} parent=11 // pred_check_branch
          %1116 = sbr.rel (%p1114) target = $region96
        $region95: #{_lambda_.3} parent=11 // pred_region
          _
        $region96: #{_lambda_.3} parent=11 // pred_fallthru
          _
        // Predicated region
        $region97: #{_lambda_.3} parent=11 // pred_check
          %p1117 = pneg %p658
        $region98: #{_lambda_.3} parent=11 // pred_check_branch
          %1119 = sbr.rel (%p1117) target = $region100
        $region99: #{_lambda_.3} parent=11 // pred_region
          _
        $region100: #{_lambda_.3} parent=11 // pred_fallthru
          _
        // Predicated region
        $region101: #{_lambda_.3} parent=11 // pred_check
          %p1120 = pneg %p679
        $region102: #{_lambda_.3} parent=11 // pred_check_branch
          %1122 = sbr.rel (%p1120) target = $region104
        $region103: #{_lambda_.3} parent=11 // pred_region
          _
        $region104: #{_lambda_.3} parent=11 // pred_fallthru
          _
        // Predicated region
        $region105: #{_lambda_.3} parent=11 // pred_check
          %p1123 = pneg %p700
        $region106: #{_lambda_.3} parent=11 // pred_check_branch
          %1125 = sbr.rel (%p1123) target = $region108
        $region107: #{_lambda_.3} parent=11 // pred_region
          _
        $region108: #{_lambda_.3} parent=11 // pred_fallthru
          _
        // Predicated region
        $region109: #{_lambda_.3} parent=11 // pred_check
          %p1126 = pneg %p721
        $region110: #{_lambda_.3} parent=11 // pred_check_branch
          %1128 = sbr.rel (%p1126) target = $region112
        $region111: #{_lambda_.3} parent=11 // pred_region
          %1130 = vsyncadd [#allocation14], 0
          %s1131 = sshll.u32 %s57, 4
          %s1132 = int_to_ptr.hbm [resolvable:$true] %s1131
          %s1133 = sshll.u32 [#allocation13], 4
          %s1134 = int_to_ptr.vmem [resolvable:$true] %s1133
          %1139 = dma.hbm_to_vmem [thread:$0]  %s1132, 2048, %s1134, [#allocation14], 128, 128, 8
        $region112: #{_lambda_.3} parent=11 // pred_fallthru
          _
        // Predicated region
        $region113: #{_lambda_.3} parent=11 // pred_check
          %p1140 = pneg %p742
        $region114: #{_lambda_.3} parent=11 // pred_check_branch
          %1142 = sbr.rel (%p1140) target = $region116
        $region115: #{_lambda_.3} parent=11 // pred_region
          _
        $region116: #{_lambda_.3} parent=11 // pred_fallthru
          _
        // Predicated region
        $region117: #{_lambda_.3} parent=11 // pred_check
          %p1143 = pneg %p763
        $region118: #{_lambda_.3} parent=11 // pred_check_branch
          %1145 = sbr.rel (%p1143) target = $region120
        $region119: #{_lambda_.3} parent=11 // pred_region
          %1147 = vsyncadd [#allocation14], 0
          %s1148 = sshll.u32 %s61, 4
          %s1149 = int_to_ptr.hbm [resolvable:$true] %s1148
          %s1150 = sshll.u32 [#allocation15], 4
          %s1151 = int_to_ptr.vmem [resolvable:$true] %s1150
          %1156 = dma.hbm_to_vmem [thread:$0]  %s1149, 1024, %s1151, [#allocation14], 64, 64, 4
        $region120: #{_lambda_.3} parent=11 // pred_fallthru
          _
        // Predicated region
        $region121: #{_lambda_.3} parent=11 // pred_check
          %p1157 = pneg %p784
        $region122: #{_lambda_.3} parent=11 // pred_check_branch
          %1159 = sbr.rel (%p1157) target = $region124
        $region123: #{_lambda_.3} parent=11 // pred_region
          _
        $region124: #{_lambda_.3} parent=11 // pred_fallthru
          _
        // Predicated region
        $region125: #{_lambda_.3} parent=11 // pred_check
          %p1160 = pneg %p805
        $region126: #{_lambda_.3} parent=11 // pred_check_branch
          %1162 = sbr.rel (%p1160) target = $region128
        $region127: #{_lambda_.3} parent=11 // pred_region
          _
        $region128: #{_lambda_.3} parent=11 // pred_fallthru
          _
        // Predicated region
        $region129: #{_lambda_.3} parent=11 // pred_check
          %p1163 = pneg %p826
        $region130: #{_lambda_.3} parent=11 // pred_check_branch
          %1165 = sbr.rel (%p1163) target = $region132
        $region131: #{_lambda_.3} parent=11 // pred_region
          _
        $region132: #{_lambda_.3} parent=11 // pred_fallthru
          _
        // Predicated region
        $region133: #{_lambda_.3} parent=11 // pred_check
          %p1166 = pneg %p847
        $region134: #{_lambda_.3} parent=11 // pred_check_branch
          %1168 = sbr.rel (%p1166) target = $region136
        $region135: #{_lambda_.3} parent=11 // pred_region
          %1170 = vsyncadd [#allocation17], 0
          %s1171 = sshll.u32 %s69, 4
          %s1172 = int_to_ptr.hbm [resolvable:$true] %s1171
          %s1173 = sshll.u32 [#allocation16], 4
          %s1174 = int_to_ptr.vmem [resolvable:$true] %s1173
          %1179 = dma.hbm_to_vmem [thread:$0]  %s1172, 1024, %s1174, [#allocation17], 64, 64, 4
        $region136: #{_lambda_.3} parent=11 // pred_fallthru
          _
        // Predicated region
        $region137: #{_lambda_.3} parent=11 // pred_check
          %p1180 = pneg %p868
        $region138: #{_lambda_.3} parent=11 // pred_check_branch
          %1182 = sbr.rel (%p1180) target = $region140
        $region139: #{_lambda_.3} parent=11 // pred_region
          _
        $region140: #{_lambda_.3} parent=11 // pred_fallthru
          _
        // Predicated region
        $region141: #{_lambda_.3} parent=11 // pred_check
          %p1183 = pneg %p889
        $region142: #{_lambda_.3} parent=11 // pred_check_branch
          %1185 = sbr.rel (%p1183) target = $region144
        $region143: #{_lambda_.3} parent=11 // pred_region
          %1187 = vsyncadd [#allocation17], 0
          %s1188 = sshll.u32 %s73, 4
          %s1189 = int_to_ptr.hbm [resolvable:$true] %s1188
          %s1190 = sshll.u32 [#allocation18], 4
          %s1191 = int_to_ptr.vmem [resolvable:$true] %s1190
          %1196 = dma.hbm_to_vmem [thread:$0]  %s1189, 1024, %s1191, [#allocation17], 64, 64, 4
        $region144: #{_lambda_.3} parent=11 // pred_fallthru
          _
        // Predicated region
        $region145: #{_lambda_.3} parent=11 // pred_check
          %p1197 = pneg %p910
        $region146: #{_lambda_.3} parent=11 // pred_check_branch
          %1199 = sbr.rel (%p1197) target = $region148
        $region147: #{_lambda_.3} parent=11 // pred_region
          _
        $region148: #{_lambda_.3} parent=11 // pred_fallthru
          _
      $region12: #{_lambda_.3} parent=5 // pred_fallthru
        _
      %p1200 = scmp.lt.s32.totalorder %s92, 2
      // Predicated region
      $region149: #{_lambda_.3} parent=5 // pred_check
        %p1201 = pneg %p1200
      $region150: #{_lambda_.3} parent=5 // pred_check_branch
        %1203 = sbr.rel (%p1201) target = $region152
      $region151: #{_lambda_.3} parent=5 // pred_region
        // Predicated region
        $region153: #{_lambda_.3} parent=151 // pred_check
          %p1204 = pneg %p112
        $region154: #{_lambda_.3} parent=151 // pred_check_branch
          %1206 = sbr.rel (%p1204) target = $region156
        $region155: #{_lambda_.3} parent=151 // pred_region
          %p1207 = scmp.lt.s32.totalorder %s92, 1
          %s1208 = scalar_select %p1207, %s92, 1
          %s1209 = smul.addr %s1208, 8
          %s1210 = scalar_lea.vmem %s1, %s1209
        $region156: #{_lambda_.3} parent=151 // pred_fallthru
          _
        // Predicated region
        $region157: #{_lambda_.3} parent=151 // pred_check
          %p1211 = pneg %p138
        $region158: #{_lambda_.3} parent=151 // pred_check_branch
          %1213 = sbr.rel (%p1211) target = $region160
        $region159: #{_lambda_.3} parent=151 // pred_region
          %p1214 = scmp.lt.s32.totalorder %s92, 1
          %s1215 = scalar_select %p1214, %s92, 1
          %s1216 = smul.addr %s1215, 8
          %s1217 = scalar_lea.vmem %s3, %s1216
        $region160: #{_lambda_.3} parent=151 // pred_fallthru
          _
        // Predicated region
        $region161: #{_lambda_.3} parent=151 // pred_check
          %p1218 = pneg %p164
        $region162: #{_lambda_.3} parent=151 // pred_check_branch
          %1220 = sbr.rel (%p1218) target = $region164
        $region163: #{_lambda_.3} parent=151 // pred_region
          %p1221 = scmp.lt.s32.totalorder %s92, 1
          %s1222 = scalar_select %p1221, %s92, 1
          %s1223 = scalar_lea.vmem %s5, %s1222
        $region164: #{_lambda_.3} parent=151 // pred_fallthru
          _
        // Predicated region
        $region165: #{_lambda_.3} parent=151 // pred_check
          %p1224 = pneg %p190
        $region166: #{_lambda_.3} parent=151 // pred_check_branch
          %1226 = sbr.rel (%p1224) target = $region168
        $region167: #{_lambda_.3} parent=151 // pred_region
          %p1227 = scmp.lt.s32.totalorder %s92, 1
          %s1228 = scalar_select %p1227, %s92, 1
          %s1229 = scalar_lea.vmem %s7, %s1228
        $region168: #{_lambda_.3} parent=151 // pred_fallthru
          _
      $region152: #{_lambda_.3} parent=5 // pred_fallthru
        _
      %p1230 = scmp.le.s32.totalorder 1, %s92
      %p1231 = scmp.lt.s32.totalorder %s92, 3
      %p1232 = pnand %p1230, %p1231
      %p1233 = pneg %p1232
      // Predicated region
      $region169: #{_lambda_.3} parent=5 // pred_check
        _
      $region170: #{_lambda_.3} parent=5 // pred_check_branch
        %1235 = sbr.rel (%p1232) target = $region172
      $region171: #{_lambda_.3} parent=5 // pred_region
        %s1236 = ssub.s32 %s92, 1
        // Predicated region
        $region173: #{_lambda_.3} parent=171 // pred_check
          %p1237 = pneg %p259
        $region174: #{_lambda_.3} parent=171 // pred_check_branch
          %1239 = sbr.rel (%p1237) target = $region176
        $region175: #{_lambda_.3} parent=171 // pred_region
          %1241 = dma.done [#allocation3], 6144
        $region176: #{_lambda_.3} parent=171 // pred_fallthru
          _
        // Predicated region
        $region177: #{_lambda_.3} parent=171 // pred_check
          %p1242 = pneg %p301
        $region178: #{_lambda_.3} parent=171 // pred_check_branch
          %1244 = sbr.rel (%p1242) target = $region180
        $region179: #{_lambda_.3} parent=171 // pred_region
          %1246 = dma.done [#allocation5], 2048
        $region180: #{_lambda_.3} parent=171 // pred_fallthru
          _
        // Predicated region
        $region181: #{_lambda_.3} parent=171 // pred_check
          %p1247 = pneg %p385
        $region182: #{_lambda_.3} parent=171 // pred_check_branch
          %1249 = sbr.rel (%p1247) target = $region184
        $region183: #{_lambda_.3} parent=171 // pred_region
          %1251 = dma.done [#allocation5], 2048
        $region184: #{_lambda_.3} parent=171 // pred_fallthru
          _
        // Predicated region
        $region185: #{_lambda_.3} parent=171 // pred_check
          %p1252 = pneg %p427
        $region186: #{_lambda_.3} parent=171 // pred_check_branch
          %1254 = sbr.rel (%p1252) target = $region188
        $region187: #{_lambda_.3} parent=171 // pred_region
          %1256 = dma.done [#allocation8], 4096
        $region188: #{_lambda_.3} parent=171 // pred_fallthru
          _
        // Predicated region
        $region189: #{_lambda_.3} parent=171 // pred_check
          %p1257 = pneg %p469
        $region190: #{_lambda_.3} parent=171 // pred_check_branch
          %1259 = sbr.rel (%p1257) target = $region192
        $region191: #{_lambda_.3} parent=171 // pred_region
          %1261 = dma.done [#allocation8], 2048
        $region192: #{_lambda_.3} parent=171 // pred_fallthru
          _
        // Predicated region
        $region193: #{_lambda_.3} parent=171 // pred_check
          %p1262 = pneg %p553
        $region194: #{_lambda_.3} parent=171 // pred_check_branch
          %1264 = sbr.rel (%p1262) target = $region196
        $region195: #{_lambda_.3} parent=171 // pred_region
          %1266 = dma.done [#allocation11], 2048
        $region196: #{_lambda_.3} parent=171 // pred_fallthru
          _
        // Predicated region
        $region197: #{_lambda_.3} parent=171 // pred_check
          %p1267 = pneg %p595
        $region198: #{_lambda_.3} parent=171 // pred_check_branch
          %1269 = sbr.rel (%p1267) target = $region200
        $region199: #{_lambda_.3} parent=171 // pred_region
          %1271 = dma.done [#allocation11], 2048
        $region200: #{_lambda_.3} parent=171 // pred_fallthru
          _
        // Predicated region
        $region201: #{_lambda_.3} parent=171 // pred_check
          %p1272 = pneg %p721
        $region202: #{_lambda_.3} parent=171 // pred_check_branch
          %1274 = sbr.rel (%p1272) target = $region204
        $region203: #{_lambda_.3} parent=171 // pred_region
          %1276 = dma.done [#allocation14], 2048
        $region204: #{_lambda_.3} parent=171 // pred_fallthru
          _
        // Predicated region
        $region205: #{_lambda_.3} parent=171 // pred_check
          %p1277 = pneg %p763
        $region206: #{_lambda_.3} parent=171 // pred_check_branch
          %1279 = sbr.rel (%p1277) target = $region208
        $region207: #{_lambda_.3} parent=171 // pred_region
          %1281 = dma.done [#allocation14], 1024
        $region208: #{_lambda_.3} parent=171 // pred_fallthru
          _
        // Predicated region
        $region209: #{_lambda_.3} parent=171 // pred_check
          %p1282 = pneg %p847
        $region210: #{_lambda_.3} parent=171 // pred_check_branch
          %1284 = sbr.rel (%p1282) target = $region212
        $region211: #{_lambda_.3} parent=171 // pred_region
          %1286 = dma.done [#allocation17], 1024
        $region212: #{_lambda_.3} parent=171 // pred_fallthru
          _
        // Predicated region
        $region213: #{_lambda_.3} parent=171 // pred_check
          %p1287 = pneg %p889
        $region214: #{_lambda_.3} parent=171 // pred_check_branch
          %1289 = sbr.rel (%p1287) target = $region216
        $region215: #{_lambda_.3} parent=171 // pred_region
          %1291 = dma.done [#allocation17], 1024
        $region216: #{_lambda_.3} parent=171 // pred_fallthru
          _
        %p1292 = scmp.lt.s32.totalorder %s97, 1
        %s1293 = scalar_select %p1292, %s97, 1
        %s1294 = smul.addr %s1293, 8
        %s1295 = scalar_lea.vmem %s1, %s1294
        %p1296 = pneg %p118
        %p1297 = pneg %p115
        %p1298 = scmp.lt.s32.totalorder %s97, 1
        %s1299 = scalar_select %p1298, %s97, 1
        %s1300 = smul.addr %s1299, 8
        %s1301 = scalar_lea.vmem %s3, %s1300
        %p1302 = pneg %p144
        %p1303 = pneg %p141
        %p1304 = scmp.lt.s32.totalorder %s97, 1
        %s1305 = scalar_select %p1304, %s97, 1
        %s1306 = scalar_lea.vmem %s5, %s1305
        %p1307 = pneg %p170
        %p1308 = pneg %p167
        %p1309 = scmp.lt.s32.totalorder %s97, 1
        %s1310 = scalar_select %p1309, %s97, 1
        %s1311 = scalar_lea.vmem %s7, %s1310
        %p1312 = pneg %p196
        %p1313 = pneg %p193
        %p1314 = pneg %p217
        %p1315 = pneg %p214
        %p1316 = pneg %p238
        %p1317 = pneg %p235
        %p1318 = pneg %p259
        %p1319 = pneg %p256
        %p1320 = pneg %p280
        %p1321 = pneg %p277
        %p1322 = pneg %p301
        %p1323 = pneg %p298
        %p1324 = pneg %p322
        %p1325 = pneg %p319
        %p1326 = pneg %p343
        %p1327 = pneg %p340
        %p1328 = pneg %p364
        %p1329 = pneg %p361
        %p1330 = pneg %p385
        %p1331 = pneg %p382
        %p1332 = pneg %p406
        %p1333 = pneg %p403
        %p1334 = pneg %p427
        %p1335 = pneg %p424
        %p1336 = pneg %p448
        %p1337 = pneg %p445
        %p1338 = pneg %p469
        %p1339 = pneg %p466
        %p1340 = pneg %p490
        %p1341 = pneg %p487
        %p1342 = pneg %p511
        %p1343 = pneg %p508
        %p1344 = pneg %p532
        %p1345 = pneg %p529
        %p1346 = pneg %p553
        %p1347 = pneg %p550
        %p1348 = pneg %p574
        %p1349 = pneg %p571
        %p1350 = pneg %p595
        %p1351 = pneg %p592
        %p1352 = pneg %p616
        %p1353 = pneg %p613
        %p1354 = pneg %p637
        %p1355 = pneg %p634
        %p1356 = pneg %p658
        %p1357 = pneg %p655
        %p1358 = pneg %p679
        %p1359 = pneg %p676
        %p1360 = pneg %p700
        %p1361 = pneg %p697
        %p1362 = pneg %p721
        %p1363 = pneg %p718
        %p1364 = pneg %p742
        %p1365 = pneg %p739
        %p1366 = pneg %p763
        %p1367 = pneg %p760
        %p1368 = pneg %p784
        %p1369 = pneg %p781
        %p1370 = pneg %p805
        %p1371 = pneg %p802
        %p1372 = pneg %p826
        %p1373 = pneg %p823
        %p1374 = pneg %p847
        %p1375 = pneg %p844
        %p1376 = pneg %p868
        %p1377 = pneg %p865
        %p1378 = pneg %p889
        %p1379 = pneg %p886
        %p1380 = pneg %p910
        %p1381 = pneg %p907
        %p1382 = pneg %p936
        %p1383 = pneg %p933
        %p1384 = scmp.lt.s32.totalorder %s97, 1
        %s1385 = scalar_select %p1384, %s97, 1
        %s1386 = smul.addr %s1385, 8
        %s1387 = scalar_lea.vmem %s77, %s1386
        %p1388 = pneg %p962
        %p1389 = pneg %p959
        %p1390 = scmp.lt.s32.totalorder %s97, 1
        %s1391 = scalar_select %p1390, %s97, 1
        %s1392 = smul.addr %s1391, 8
        %s1393 = scalar_lea.vmem %s79, %s1392
        %p1394 = scmp.lt.s32.totalorder %s97, 1
        %s1395 = scalar_select %p1394, %s97, 1
        %s1396 = smul.addr %s1395, 8
        %s1397 = scalar_lea.vmem %s1, %s1396
        %p1398 = scmp.lt.s32.totalorder %s97, 1
        %s1399 = scalar_select %p1398, %s97, 1
        %s1400 = smul.addr %s1399, 8
        %s1401 = scalar_lea.vmem %s3, %s1400
        %p1402 = scmp.lt.s32.totalorder %s97, 1
        %s1403 = scalar_select %p1402, %s97, 1
        %s1404 = scalar_lea.vmem %s5, %s1403
        %p1405 = scmp.lt.s32.totalorder %s97, 1
        %s1406 = scalar_select %p1405, %s97, 1
        %s1407 = scalar_lea.vmem %s7, %s1406
        %p1408 = scmp.lt.s32.totalorder %s97, 1
        %s1409 = scalar_select %p1408, %s97, 1
        %s1410 = smul.addr %s1409, 8
        %s1411 = scalar_lea.vmem %s77, %s1410
        %p1412 = scmp.lt.s32.totalorder %s97, 1
        %s1413 = scalar_select %p1412, %s97, 1
        %s1414 = smul.addr %s1413, 8
        %s1415 = scalar_lea.vmem %s79, %s1414
        %v1417 = vld [vmem:[%s1397] sm:$0xff]
        %v1418 = vld [vmem:[%s1401] sm:$0xff]
        %v1419 = vld [vmem:[%s1404] sm:$0x1]
        %v1420 = vld [vmem:[%s1407] sm:$0x1]
        %v1421 = vpack.c.bf16 %v1418, %v1418
        %v1422 = vld [vmem:[%s9] sm:$0x1]
        %v1423 = vld [vmem:[%s11] sm:$0x1]
        %1424 = vadd.xlane.f32.xlu0 %v1417
        %v1425 = vpop.xlane.xlu0 %1424
        %v1426 = vmul.f32 %v1425, 0.03125
        %v1427 = vmul.f32 %v1417, %v1417
        %1428 = vadd.xlane.f32.xlu0 %v1427
        %v1429 = vpop.xlane.xlu0 %1428
        %v1430 = vmul.f32 %v1429, 0.03125
        %v1431 = vmul.f32 %v1426, %v1426
        %v1432 = vsub.f32 %v1430, %v1431
        %v1433 = vmax.f32 %v1432, 0.0
        %v1434 = vsub.f32 %v1417, %v1426
        %v1435 = vadd.f32 %v1433, 1e-05
        %v1436 = vrsqrt.pop %v1435
        %v1437 = vmul.f32 %v1436, %v1435
        %v1438 = vmul.f32 %v1437, %v1436
        %v1439 = vmul.f32 0.5, %v1438
        %v1440 = vsub.f32 1.5, %v1439
        %v1441 = vmul.f32 %v1436, %v1440
        %vm1442 = vweird.f32 %v1435
        %vm1443 = vweird.f32 %v1436
        %vm1444 = vmor %vm1442, %vm1443
        %v1445 = vsel %vm1444, %v1436, %v1441
        %v1446 = vmul.f32 %v1434, %v1445
        %v1448 = vperm.slane %v1422, 0
        %v1450 = vmul.f32 %v1446, %v1448
        %v1452 = vperm.slane %v1423, 0
        %v1454 = vadd.f32 %v1450, %v1452
        %v1455 = vpack.c.bf16 %v1454, %v1454
        %v1456 = vld [vmem:[#allocation2] sm:$0xff]
        %v1457 = vld [vmem:[#allocation2 + $0x8] sm:$0xf]
        %v1458 = vld [vmem:[#allocation2 + $0xc] sm:$0xff]
        %v1459 = vld [vmem:[#allocation2 + $0x14] sm:$0xf]
        %v1460 = vld [vmem:[#allocation2 + $0x18] sm:$0xff]
        %v1461 = vld [vmem:[#allocation2 + $0x20] sm:$0xf]
        %v1462 = vld [vmem:[#allocation2 + $0x24] sm:$0xff]
        %v1463 = vld [vmem:[#allocation2 + $0x2c] sm:$0xf]
        %v1464 = vld [vmem:[#allocation2 + $0x30] sm:$0xff]
        %v1465 = vld [vmem:[#allocation2 + $0x38] sm:$0xf]
        %v1466 = vld [vmem:[#allocation2 + $0x3c] sm:$0xff]
        %v1467 = vld [vmem:[#allocation2 + $0x44] sm:$0xf]
        %v1468 = vld [vmem:[#allocation2 + $0x48] sm:$0xff]
        %v1469 = vld [vmem:[#allocation2 + $0x50] sm:$0xf]
        %v1470 = vld [vmem:[#allocation2 + $0x54] sm:$0xff]
        %v1471 = vld [vmem:[#allocation2 + $0x5c] sm:$0xf]
        %v1472 = vld [vmem:[#allocation2 + $0x60] sm:$0xff]
        %v1473 = vld [vmem:[#allocation2 + $0x68] sm:$0xf]
        %v1474 = vld [vmem:[#allocation2 + $0x6c] sm:$0xff]
        %v1475 = vld [vmem:[#allocation2 + $0x74] sm:$0xf]
        %v1476 = vld [vmem:[#allocation2 + $0x78] sm:$0xff]
        %v1477 = vld [vmem:[#allocation2 + $0x80] sm:$0xf]
        %v1478 = vld [vmem:[#allocation2 + $0x84] sm:$0xff]
        %v1479 = vld [vmem:[#allocation2 + $0x8c] sm:$0xf]
        %v1480 = vld [vmem:[#allocation2 + $0x90] sm:$0xff]
        %v1481 = vld [vmem:[#allocation2 + $0x98] sm:$0xf]
        %v1482 = vld [vmem:[#allocation2 + $0x9c] sm:$0xff]
        %v1483 = vld [vmem:[#allocation2 + $0xa4] sm:$0xf]
        %v1484 = vld [vmem:[#allocation2 + $0xa8] sm:$0xff]
        %v1485 = vld [vmem:[#allocation2 + $0xb0] sm:$0xf]
        %v1486 = vld [vmem:[#allocation2 + $0xb4] sm:$0xff]
        %v1487 = vld [vmem:[#allocation2 + $0xbc] sm:$0xf]
        %v1488 = vld [vmem:[%s15] sm:$0x7]
        %v1490 = vperm.slane %v1488, 0
        %v1491 = vperm.slane %v1488, 1
        %v1492 = vperm.slane %v1488, 2
        %v1528 = vunpack.c.l.b16 %v1456
        %v1529 = vunpack.c.h.b16 %v1456
        %v1530 = vunpack.c.l.b16 %v1457
        %v1531 = vunpack.c.l.b16 %v1458
        %v1532 = vunpack.c.h.b16 %v1458
        %v1533 = vunpack.c.l.b16 %v1459
        %v1534 = vunpack.c.l.b16 %v1460
        %v1535 = vunpack.c.h.b16 %v1460
        %v1536 = vunpack.c.l.b16 %v1461
        %v1537 = vunpack.c.l.b16 %v1462
        %v1538 = vunpack.c.h.b16 %v1462
        %v1539 = vunpack.c.l.b16 %v1463
        %v1540 = vunpack.c.l.b16 %v1464
        %v1541 = vunpack.c.h.b16 %v1464
        %v1542 = vunpack.c.l.b16 %v1465
        %v1543 = vunpack.c.l.b16 %v1466
        %v1544 = vunpack.c.h.b16 %v1466
        %v1545 = vunpack.c.l.b16 %v1467
        %v1546 = vunpack.c.l.b16 %v1468
        %v1547 = vunpack.c.h.b16 %v1468
        %v1548 = vunpack.c.l.b16 %v1469
        %v1549 = vunpack.c.l.b16 %v1470
        %v1550 = vunpack.c.h.b16 %v1470
        %v1551 = vunpack.c.l.b16 %v1471
        %v1552 = vunpack.c.l.b16 %v1472
        %v1553 = vunpack.c.h.b16 %v1472
        %v1554 = vunpack.c.l.b16 %v1473
        %v1555 = vunpack.c.l.b16 %v1474
        %v1556 = vunpack.c.h.b16 %v1474
        %v1557 = vunpack.c.l.b16 %v1475
        %v1558 = vunpack.c.l.b16 %v1476
        %v1559 = vunpack.c.h.b16 %v1476
        %v1560 = vunpack.c.l.b16 %v1477
        %v1561 = vunpack.c.l.b16 %v1478
        %v1562 = vunpack.c.h.b16 %v1478
        %v1563 = vunpack.c.l.b16 %v1479
        %v1564 = vunpack.c.l.b16 %v1480
        %v1565 = vunpack.c.h.b16 %v1480
        %v1566 = vunpack.c.l.b16 %v1481
        %v1567 = vunpack.c.l.b16 %v1482
        %v1568 = vunpack.c.h.b16 %v1482
        %v1569 = vunpack.c.l.b16 %v1483
        %v1570 = vunpack.c.l.b16 %v1484
        %v1571 = vunpack.c.h.b16 %v1484
        %v1572 = vunpack.c.l.b16 %v1485
        %v1573 = vunpack.c.l.b16 %v1486
        %v1574 = vunpack.c.h.b16 %v1486
        %v1575 = vunpack.c.l.b16 %v1487
        %v1576 = vpack.c.b16 %v1531, %v1528
        %v1577 = vpack.c.b16 %v1532, %v1529
        %v1578 = vpack.c.b16 %v1533, %v1530
        %v1579 = vpack.c.b16 %v1537, %v1534
        %v1580 = vpack.c.b16 %v1538, %v1535
        %v1581 = vpack.c.b16 %v1539, %v1536
        %v1582 = vpack.c.b16 %v1543, %v1540
        %v1583 = vpack.c.b16 %v1544, %v1541
        %v1584 = vpack.c.b16 %v1545, %v1542
        %v1585 = vpack.c.b16 %v1549, %v1546
        %v1586 = vpack.c.b16 %v1550, %v1547
        %v1587 = vpack.c.b16 %v1551, %v1548
        %v1588 = vpack.c.b16 %v1555, %v1552
        %v1589 = vpack.c.b16 %v1556, %v1553
        %v1590 = vpack.c.b16 %v1557, %v1554
        %v1591 = vpack.c.b16 %v1561, %v1558
        %v1592 = vpack.c.b16 %v1562, %v1559
        %v1593 = vpack.c.b16 %v1563, %v1560
        %v1594 = vpack.c.b16 %v1567, %v1564
        %v1595 = vpack.c.b16 %v1568, %v1565
        %v1596 = vpack.c.b16 %v1569, %v1566
        %v1597 = vpack.c.b16 %v1573, %v1570
        %v1598 = vpack.c.b16 %v1574, %v1571
        %v1599 = vpack.c.b16 %v1575, %v1572
        %1624 = vmatpush.bf16.msra.mxu0 %v1597
        %1625 = vmatpush.bf16.msra.mxu0 %v1594
        %1626 = vmatpush.bf16.msra.mxu0 %v1591
        %1627 = vmatpush.bf16.msra.mxu0 %v1588
        %1628 = vmatpush.bf16.msra.mxu0 %v1585
        %1629 = vmatpush.bf16.msra.mxu0 %v1582
        %1630 = vmatpush.bf16.msra.mxu0 %v1579
        %1631 = vmatpush.bf16.msra.mxu0 %v1576
        %1632 = vmatmul.bf16.gmra.mxu0 %v1455
        %v1633 = vpop.f32.mrf.mxu0
        %v1634 = vadd.f32 %v1490, %v1633
        %v1635 = vpop.f32.mrf.mxu0
        %1636 = vdwg.mxu0
        %1637 = vmatpush.bf16.msra.mxu0 %v1598
        %1638 = vmatpush.bf16.msra.mxu0 %v1595
        %1639 = vmatpush.bf16.msra.mxu0 %v1592
        %1640 = vmatpush.bf16.msra.mxu0 %v1589
        %1641 = vmatpush.bf16.msra.mxu0 %v1586
        %1642 = vmatpush.bf16.msra.mxu0 %v1583
        %1643 = vmatpush.bf16.msra.mxu0 %v1580
        %1644 = vmatpush.bf16.msra.mxu0 %v1577
        %1645 = vmatmul.bf16.gmra.mxu0 %v1455
        %v1646 = vpop.f32.mrf.mxu0
        %v1647 = vadd.f32 %v1491, %v1646
        %v1648 = vpop.f32.mrf.mxu0
        %1649 = vdwg.mxu0
        %1650 = vmatpush.bf16.msra.mxu0 %v1599
        %1651 = vmatpush.bf16.msra.mxu0 %v1596
        %1652 = vmatpush.bf16.msra.mxu0 %v1593
        %1653 = vmatpush.bf16.msra.mxu0 %v1590
        %1654 = vmatpush.bf16.msra.mxu0 %v1587
        %1655 = vmatpush.bf16.msra.mxu0 %v1584
        %1656 = vmatpush.bf16.msra.mxu0 %v1581
        %1657 = vmatpush.bf16.msra.mxu0 %v1578
        %1658 = vmatmul.bf16.gmra.mxu0 %v1455
        %v1659 = vpop.f32.mrf.mxu0
        %v1660 = vadd.f32 %v1492, %v1659
        %v1661 = vpop.f32.mrf.mxu0
        %1662 = vdwg.mxu0
        %v1663 = vpack.c.bf16 %v1647, %v1634
        %v1664 = vpack.c.bf16 %v1660, %v1660
        %v1666 = vrot.slane %v1663, 4
        %1668 = vmatpush.bf16.xpose.msra.mxu0 0
        %1669 = vmatpush.bf16.xpose.msra.mxu0 0
        %1670 = vmatpush.bf16.xpose.msra.mxu0 0
        %1671 = vmatpush.bf16.xpose.msra.mxu0 0
        %1672 = vmatpush.bf16.xpose.msra.mxu0 0
        %1673 = vmatpush.bf16.xpose.msra.mxu0 0
        %1674 = vmatpush.bf16.xpose.msra.mxu0 0
        %1675 = vmatpush.bf16.xpose.msra.mxu0 %v1666
        %1676 = vmatmul.bf16.gmra.mxu0 %v1663
        %v1677 = vpop.f32.mrf.mxu0
        %v1678 = vadd.f32 0.0, %v1677
        %v1679 = vpop.f32.mrf.mxu0
        %1680 = vdwg.mxu0
        %v1681 = vmul.f32 %v1678, 0.17677669
        %v1683 = vperm.slane %v1419, 0
        %v1685 = vadd.f32 %v1681, %v1683
        %vm1686 = vcmask 64512
        %v1687 = vsel %vm1686, %v1685, -inf
        %1688 = vmax.xlane.f32.xlu0 %v1687
        %v1689 = vpop.xlane.xlu0 %1688
        %v1690 = vsub.f32 %v1685, %v1689
        %v1691 = vmul.f32 %v1690, 1.442695
        %v1692 = vpow.pop %v1691
        %v1693 = vsel %vm1686, %v1692, 0.0
        %1694 = vadd.xlane.f32.xlu0 %v1693
        %v1695 = vpop.xlane.xlu0 %1694
        %v1696 = vrcp.pop %v1695
        %v1697 = vmul.f32 %v1692, %v1696
        %v1698 = vpack.c.bf16 %v1697, %v1697
        %v1700 = vsel %vm1686, %v1698, 0
        %vm1702 = vcmask 1043456
        %v1704 = vsel %vm1702, %v1664, 0
        %1706 = vmatpush.bf16.msra.mxu0 0
        %1707 = vmatpush.bf16.msra.mxu0 0
        %1708 = vmatpush.bf16.msra.mxu0 0
        %1709 = vmatpush.bf16.msra.mxu0 0
        %1710 = vmatpush.bf16.msra.mxu0 0
        %1711 = vmatpush.bf16.msra.mxu0 0
        %1712 = vmatpush.bf16.msra.mxu0 0
        %1713 = vmatpush.bf16.msra.mxu0 %v1704
        %1714 = vmatmul.bf16.gmra.mxu0 %v1700
        %v1715 = vpop.f32.mrf.mxu0
        %v1716 = vadd.f32 0.0, %v1715
        %v1717 = vpop.f32.mrf.mxu0
        %1718 = vdwg.mxu0
        %v1719 = vpack.c.bf16 %v1716, %v1716
        %v1720 = vld [vmem:[#allocation4] sm:$0xf]
        %v1721 = vld [vmem:[#allocation4 + $0x4] sm:$0xf]
        %v1722 = vld [vmem:[#allocation4 + $0x8] sm:$0xf]
        %v1723 = vld [vmem:[#allocation4 + $0xc] sm:$0xf]
        %v1724 = vld [vmem:[#allocation4 + $0x10] sm:$0xf]
        %v1725 = vld [vmem:[#allocation4 + $0x14] sm:$0xf]
        %v1726 = vld [vmem:[#allocation4 + $0x18] sm:$0xf]
        %v1727 = vld [vmem:[#allocation4 + $0x1c] sm:$0xf]
        %v1728 = vld [vmem:[#allocation4 + $0x20] sm:$0xf]
        %v1729 = vld [vmem:[#allocation4 + $0x24] sm:$0xf]
        %v1730 = vld [vmem:[#allocation4 + $0x28] sm:$0xf]
        %v1731 = vld [vmem:[#allocation4 + $0x2c] sm:$0xf]
        %v1732 = vld [vmem:[#allocation4 + $0x30] sm:$0xf]
        %v1733 = vld [vmem:[#allocation4 + $0x34] sm:$0xf]
        %v1734 = vld [vmem:[#allocation4 + $0x38] sm:$0xf]
        %v1735 = vld [vmem:[#allocation4 + $0x3c] sm:$0xf]
        %v1736 = vld [vmem:[%s19] sm:$0x1]
        %v1738 = vperm.slane %v1736, 0
        %v1756 = vunpack.c.l.b16 %v1720
        %v1757 = vunpack.c.l.b16 %v1721
        %v1758 = vunpack.c.l.b16 %v1722
        %v1759 = vunpack.c.l.b16 %v1723
        %v1760 = vunpack.c.l.b16 %v1724
        %v1761 = vunpack.c.l.b16 %v1725
        %v1762 = vunpack.c.l.b16 %v1726
        %v1763 = vunpack.c.l.b16 %v1727
        %v1764 = vunpack.c.l.b16 %v1728
        %v1765 = vunpack.c.l.b16 %v1729
        %v1766 = vunpack.c.l.b16 %v1730
        %v1767 = vunpack.c.l.b16 %v1731
        %v1768 = vunpack.c.l.b16 %v1732
        %v1769 = vunpack.c.l.b16 %v1733
        %v1770 = vunpack.c.l.b16 %v1734
        %v1771 = vunpack.c.l.b16 %v1735
        %v1772 = vpack.c.b16 %v1757, %v1756
        %v1773 = vpack.c.b16 %v1759, %v1758
        %v1774 = vpack.c.b16 %v1761, %v1760
        %v1775 = vpack.c.b16 %v1763, %v1762
        %v1776 = vpack.c.b16 %v1765, %v1764
        %v1777 = vpack.c.b16 %v1767, %v1766
        %v1778 = vpack.c.b16 %v1769, %v1768
        %v1779 = vpack.c.b16 %v1771, %v1770
        %1788 = vmatpush.bf16.msra.mxu0 %v1779
        %1789 = vmatpush.bf16.msra.mxu0 %v1778
        %1790 = vmatpush.bf16.msra.mxu0 %v1777
        %1791 = vmatpush.bf16.msra.mxu0 %v1776
        %1792 = vmatpush.bf16.msra.mxu0 %v1775
        %1793 = vmatpush.bf16.msra.mxu0 %v1774
        %1794 = vmatpush.bf16.msra.mxu0 %v1773
        %1795 = vmatpush.bf16.msra.mxu0 %v1772
        %1796 = vmatmul.bf16.gmra.mxu0 %v1719
        %v1797 = vpop.f32.mrf.mxu0
        %v1798 = vadd.f32 %v1738, %v1797
        %v1799 = vpop.f32.mrf.mxu0
        %1800 = vdwg.mxu0
        %v1801 = vadd.f32 %v1417, %v1798
        %v1802 = vld [vmem:[%s21] sm:$0x1]
        %v1803 = vld [vmem:[%s23] sm:$0x1]
        %1804 = vadd.xlane.f32.xlu0 %v1801
        %v1805 = vpop.xlane.xlu0 %1804
        %v1806 = vmul.f32 %v1805, 0.03125
        %v1807 = vmul.f32 %v1801, %v1801
        %1808 = vadd.xlane.f32.xlu0 %v1807
        %v1809 = vpop.xlane.xlu0 %1808
        %v1810 = vmul.f32 %v1809, 0.03125
        %v1811 = vmul.f32 %v1806, %v1806
        %v1812 = vsub.f32 %v1810, %v1811
        %v1813 = vmax.f32 %v1812, 0.0
        %v1814 = vsub.f32 %v1801, %v1806
        %v1815 = vadd.f32 %v1813, 1e-05
        %v1816 = vrsqrt.pop %v1815
        %v1817 = vmul.f32 %v1816, %v1815
        %v1818 = vmul.f32 %v1817, %v1816
        %v1819 = vmul.f32 0.5, %v1818
        %v1820 = vsub.f32 1.5, %v1819
        %v1821 = vmul.f32 %v1816, %v1820
        %vm1822 = vweird.f32 %v1815
        %vm1823 = vweird.f32 %v1816
        %vm1824 = vmor %vm1822, %vm1823
        %v1825 = vsel %vm1824, %v1816, %v1821
        %v1826 = vmul.f32 %v1814, %v1825
        %v1828 = vperm.slane %v1802, 0
        %v1830 = vmul.f32 %v1826, %v1828
        %v1832 = vperm.slane %v1803, 0
        %v1834 = vadd.f32 %v1830, %v1832
        %v1835 = vpack.c.bf16 %v1834, %v1834
        %v1836 = vld [vmem:[#allocation6] sm:$0xf]
        %v1837 = vld [vmem:[#allocation6 + $0x4] sm:$0xf]
        %v1838 = vld [vmem:[#allocation6 + $0x8] sm:$0xf]
        %v1839 = vld [vmem:[#allocation6 + $0xc] sm:$0xf]
        %v1840 = vld [vmem:[#allocation6 + $0x10] sm:$0xf]
        %v1841 = vld [vmem:[#allocation6 + $0x14] sm:$0xf]
        %v1842 = vld [vmem:[#allocation6 + $0x18] sm:$0xf]
        %v1843 = vld [vmem:[#allocation6 + $0x1c] sm:$0xf]
        %v1844 = vld [vmem:[#allocation6 + $0x20] sm:$0xf]
        %v1845 = vld [vmem:[#allocation6 + $0x24] sm:$0xf]
        %v1846 = vld [vmem:[#allocation6 + $0x28] sm:$0xf]
        %v1847 = vld [vmem:[#allocation6 + $0x2c] sm:$0xf]
        %v1848 = vld [vmem:[#allocation6 + $0x30] sm:$0xf]
        %v1849 = vld [vmem:[#allocation6 + $0x34] sm:$0xf]
        %v1850 = vld [vmem:[#allocation6 + $0x38] sm:$0xf]
        %v1851 = vld [vmem:[#allocation6 + $0x3c] sm:$0xf]
        %v1852 = vld [vmem:[%s27] sm:$0x1]
        %v1854 = vperm.slane %v1852, 0
        %v1872 = vunpack.c.l.b16 %v1836
        %v1873 = vunpack.c.l.b16 %v1837
        %v1874 = vunpack.c.l.b16 %v1838
        %v1875 = vunpack.c.l.b16 %v1839
        %v1876 = vunpack.c.l.b16 %v1840
        %v1877 = vunpack.c.l.b16 %v1841
        %v1878 = vunpack.c.l.b16 %v1842
        %v1879 = vunpack.c.l.b16 %v1843
        %v1880 = vunpack.c.l.b16 %v1844
        %v1881 = vunpack.c.l.b16 %v1845
        %v1882 = vunpack.c.l.b16 %v1846
        %v1883 = vunpack.c.l.b16 %v1847
        %v1884 = vunpack.c.l.b16 %v1848
        %v1885 = vunpack.c.l.b16 %v1849
        %v1886 = vunpack.c.l.b16 %v1850
        %v1887 = vunpack.c.l.b16 %v1851
        %v1888 = vpack.c.b16 %v1873, %v1872
        %v1889 = vpack.c.b16 %v1875, %v1874
        %v1890 = vpack.c.b16 %v1877, %v1876
        %v1891 = vpack.c.b16 %v1879, %v1878
        %v1892 = vpack.c.b16 %v1881, %v1880
        %v1893 = vpack.c.b16 %v1883, %v1882
        %v1894 = vpack.c.b16 %v1885, %v1884
        %v1895 = vpack.c.b16 %v1887, %v1886
        %1904 = vmatpush.bf16.msra.mxu0 %v1895
        %1905 = vmatpush.bf16.msra.mxu0 %v1894
        %1906 = vmatpush.bf16.msra.mxu0 %v1893
        %1907 = vmatpush.bf16.msra.mxu0 %v1892
        %1908 = vmatpush.bf16.msra.mxu0 %v1891
        %1909 = vmatpush.bf16.msra.mxu0 %v1890
        %1910 = vmatpush.bf16.msra.mxu0 %v1889
        %1911 = vmatpush.bf16.msra.mxu0 %v1888
        %1912 = vmatmul.bf16.gmra.mxu0 %v1835
        %v1913 = vpop.f32.mrf.mxu0
        %v1914 = vadd.f32 %v1854, %v1913
        %v1915 = vpop.f32.mrf.mxu0
        %1916 = vdwg.mxu0
        %v1917 = vpack.c.bf16 %v1914, %v1914
        %v1918 = vld [vmem:[#allocation7] sm:$0xff]
        %v1919 = vld [vmem:[#allocation7 + $0x8] sm:$0xff]
        %v1920 = vld [vmem:[#allocation7 + $0x10] sm:$0xff]
        %v1921 = vld [vmem:[#allocation7 + $0x18] sm:$0xff]
        %v1922 = vld [vmem:[#allocation7 + $0x20] sm:$0xff]
        %v1923 = vld [vmem:[#allocation7 + $0x28] sm:$0xff]
        %v1924 = vld [vmem:[#allocation7 + $0x30] sm:$0xff]
        %v1925 = vld [vmem:[#allocation7 + $0x38] sm:$0xff]
        %v1926 = vld [vmem:[#allocation7 + $0x40] sm:$0xff]
        %v1927 = vld [vmem:[#allocation7 + $0x48] sm:$0xff]
        %v1928 = vld [vmem:[#allocation7 + $0x50] sm:$0xff]
        %v1929 = vld [vmem:[#allocation7 + $0x58] sm:$0xff]
        %v1930 = vld [vmem:[#allocation7 + $0x60] sm:$0xff]
        %v1931 = vld [vmem:[#allocation7 + $0x68] sm:$0xff]
        %v1932 = vld [vmem:[#allocation7 + $0x70] sm:$0xff]
        %v1933 = vld [vmem:[#allocation7 + $0x78] sm:$0xff]
        %v1934 = vld [vmem:[%s31] sm:$0x3]
        %v1936 = vperm.slane %v1934, 0
        %v1937 = vperm.slane %v1934, 1
        %v1956 = vunpack.c.l.b16 %v1918
        %v1957 = vunpack.c.h.b16 %v1918
        %v1958 = vunpack.c.l.b16 %v1919
        %v1959 = vunpack.c.h.b16 %v1919
        %v1960 = vunpack.c.l.b16 %v1920
        %v1961 = vunpack.c.h.b16 %v1920
        %v1962 = vunpack.c.l.b16 %v1921
        %v1963 = vunpack.c.h.b16 %v1921
        %v1964 = vunpack.c.l.b16 %v1922
        %v1965 = vunpack.c.h.b16 %v1922
        %v1966 = vunpack.c.l.b16 %v1923
        %v1967 = vunpack.c.h.b16 %v1923
        %v1968 = vunpack.c.l.b16 %v1924
        %v1969 = vunpack.c.h.b16 %v1924
        %v1970 = vunpack.c.l.b16 %v1925
        %v1971 = vunpack.c.h.b16 %v1925
        %v1972 = vunpack.c.l.b16 %v1926
        %v1973 = vunpack.c.h.b16 %v1926
        %v1974 = vunpack.c.l.b16 %v1927
        %v1975 = vunpack.c.h.b16 %v1927
        %v1976 = vunpack.c.l.b16 %v1928
        %v1977 = vunpack.c.h.b16 %v1928
        %v1978 = vunpack.c.l.b16 %v1929
        %v1979 = vunpack.c.h.b16 %v1929
        %v1980 = vunpack.c.l.b16 %v1930
        %v1981 = vunpack.c.h.b16 %v1930
        %v1982 = vunpack.c.l.b16 %v1931
        %v1983 = vunpack.c.h.b16 %v1931
        %v1984 = vunpack.c.l.b16 %v1932
        %v1985 = vunpack.c.h.b16 %v1932
        %v1986 = vunpack.c.l.b16 %v1933
        %v1987 = vunpack.c.h.b16 %v1933
        %v1988 = vpack.c.b16 %v1958, %v1956
        %v1989 = vpack.c.b16 %v1959, %v1957
        %v1990 = vpack.c.b16 %v1962, %v1960
        %v1991 = vpack.c.b16 %v1963, %v1961
        %v1992 = vpack.c.b16 %v1966, %v1964
        %v1993 = vpack.c.b16 %v1967, %v1965
        %v1994 = vpack.c.b16 %v1970, %v1968
        %v1995 = vpack.c.b16 %v1971, %v1969
        %v1996 = vpack.c.b16 %v1974, %v1972
        %v1997 = vpack.c.b16 %v1975, %v1973
        %v1998 = vpack.c.b16 %v1978, %v1976
        %v1999 = vpack.c.b16 %v1979, %v1977
        %v2000 = vpack.c.b16 %v1982, %v1980
        %v2001 = vpack.c.b16 %v1983, %v1981
        %v2002 = vpack.c.b16 %v1986, %v1984
        %v2003 = vpack.c.b16 %v1987, %v1985
        %2020 = vmatpush.bf16.msra.mxu0 %v2002
        %2021 = vmatpush.bf16.msra.mxu0 %v2000
        %2022 = vmatpush.bf16.msra.mxu0 %v1998
        %2023 = vmatpush.bf16.msra.mxu0 %v1996
        %2024 = vmatpush.bf16.msra.mxu0 %v1994
        %2025 = vmatpush.bf16.msra.mxu0 %v1992
        %2026 = vmatpush.bf16.msra.mxu0 %v1990
        %2027 = vmatpush.bf16.msra.mxu0 %v1988
        %2028 = vmatmul.bf16.gmra.mxu0 %v1421
        %v2029 = vpop.f32.mrf.mxu0
        %v2030 = vadd.f32 %v1936, %v2029
        %v2031 = vpop.f32.mrf.mxu0
        %2032 = vdwg.mxu0
        %2033 = vmatpush.bf16.msra.mxu0 %v2003
        %2034 = vmatpush.bf16.msra.mxu0 %v2001
        %2035 = vmatpush.bf16.msra.mxu0 %v1999
        %2036 = vmatpush.bf16.msra.mxu0 %v1997
        %2037 = vmatpush.bf16.msra.mxu0 %v1995
        %2038 = vmatpush.bf16.msra.mxu0 %v1993
        %2039 = vmatpush.bf16.msra.mxu0 %v1991
        %2040 = vmatpush.bf16.msra.mxu0 %v1989
        %2041 = vmatmul.bf16.gmra.mxu0 %v1421
        %v2042 = vpop.f32.mrf.mxu0
        %v2043 = vadd.f32 %v1937, %v2042
        %v2044 = vpop.f32.mrf.mxu0
        %2045 = vdwg.mxu0
        %v2046 = vpack.c.bf16 %v2043, %v2030
        %v2048 = vrot.slane %v2046, 4
        %2049 = vmatpush.bf16.xpose.msra.mxu0 0
        %2050 = vmatpush.bf16.xpose.msra.mxu0 0
        %2051 = vmatpush.bf16.xpose.msra.mxu0 0
        %2052 = vmatpush.bf16.xpose.msra.mxu0 0
        %2053 = vmatpush.bf16.xpose.msra.mxu0 0
        %2054 = vmatpush.bf16.xpose.msra.mxu0 0
        %2055 = vmatpush.bf16.xpose.msra.mxu0 0
        %2056 = vmatpush.bf16.xpose.msra.mxu0 %v2046
        %2057 = vmatmul.bf16.gmra.mxu0 %v1917
        %v2058 = vpop.f32.mrf.mxu0
        %v2059 = vadd.f32 0.0, %v2058
        %v2060 = vpop.f32.mrf.mxu0
        %2061 = vdwg.mxu0
        %v2062 = vmul.f32 %v2059, 0.17677669
        %v2063 = vsel %vm1686, %v2062, -inf
        %2064 = vmax.xlane.f32.xlu0 %v2063
        %v2065 = vpop.xlane.xlu0 %2064
        %v2066 = vsub.f32 %v2062, %v2065
        %v2067 = vmul.f32 %v2066, 1.442695
        %v2068 = vpow.pop %v2067
        %v2069 = vsel %vm1686, %v2068, 0.0
        %2070 = vadd.xlane.f32.xlu0 %v2069
        %v2071 = vpop.xlane.xlu0 %2070
        %v2072 = vrcp.pop %v2071
        %v2073 = vmul.f32 %v2068, %v2072
        %v2074 = vpack.c.bf16 %v2073, %v2073
        %v2076 = vsel %vm1686, %v2074, 0
        %v2079 = vsel %vm1702, %v2048, 0
        %2081 = vmatpush.bf16.msra.mxu0 0
        %2082 = vmatpush.bf16.msra.mxu0 0
        %2083 = vmatpush.bf16.msra.mxu0 0
        %2084 = vmatpush.bf16.msra.mxu0 0
        %2085 = vmatpush.bf16.msra.mxu0 0
        %2086 = vmatpush.bf16.msra.mxu0 0
        %2087 = vmatpush.bf16.msra.mxu0 0
        %2088 = vmatpush.bf16.msra.mxu0 %v2079
        %2089 = vmatmul.bf16.gmra.mxu0 %v2076
        %v2090 = vpop.f32.mrf.mxu0
        %v2091 = vadd.f32 0.0, %v2090
        %v2092 = vpop.f32.mrf.mxu0
        %2093 = vdwg.mxu0
        %v2094 = vpack.c.bf16 %v2091, %v2091
        %v2095 = vld [vmem:[#allocation9] sm:$0xf]
        %v2096 = vld [vmem:[#allocation9 + $0x4] sm:$0xf]
        %v2097 = vld [vmem:[#allocation9 + $0x8] sm:$0xf]
        %v2098 = vld [vmem:[#allocation9 + $0xc] sm:$0xf]
        %v2099 = vld [vmem:[#allocation9 + $0x10] sm:$0xf]
        %v2100 = vld [vmem:[#allocation9 + $0x14] sm:$0xf]
        %v2101 = vld [vmem:[#allocation9 + $0x18] sm:$0xf]
        %v2102 = vld [vmem:[#allocation9 + $0x1c] sm:$0xf]
        %v2103 = vld [vmem:[#allocation9 + $0x20] sm:$0xf]
        %v2104 = vld [vmem:[#allocation9 + $0x24] sm:$0xf]
        %v2105 = vld [vmem:[#allocation9 + $0x28] sm:$0xf]
        %v2106 = vld [vmem:[#allocation9 + $0x2c] sm:$0xf]
        %v2107 = vld [vmem:[#allocation9 + $0x30] sm:$0xf]
        %v2108 = vld [vmem:[#allocation9 + $0x34] sm:$0xf]
        %v2109 = vld [vmem:[#allocation9 + $0x38] sm:$0xf]
        %v2110 = vld [vmem:[#allocation9 + $0x3c] sm:$0xf]
        %v2111 = vld [vmem:[%s35] sm:$0x1]
        %v2113 = vperm.slane %v2111, 0
        %v2131 = vunpack.c.l.b16 %v2095
        %v2132 = vunpack.c.l.b16 %v2096
        %v2133 = vunpack.c.l.b16 %v2097
        %v2134 = vunpack.c.l.b16 %v2098
        %v2135 = vunpack.c.l.b16 %v2099
        %v2136 = vunpack.c.l.b16 %v2100
        %v2137 = vunpack.c.l.b16 %v2101
        %v2138 = vunpack.c.l.b16 %v2102
        %v2139 = vunpack.c.l.b16 %v2103
        %v2140 = vunpack.c.l.b16 %v2104
        %v2141 = vunpack.c.l.b16 %v2105
        %v2142 = vunpack.c.l.b16 %v2106
        %v2143 = vunpack.c.l.b16 %v2107
        %v2144 = vunpack.c.l.b16 %v2108
        %v2145 = vunpack.c.l.b16 %v2109
        %v2146 = vunpack.c.l.b16 %v2110
        %v2147 = vpack.c.b16 %v2132, %v2131
        %v2148 = vpack.c.b16 %v2134, %v2133
        %v2149 = vpack.c.b16 %v2136, %v2135
        %v2150 = vpack.c.b16 %v2138, %v2137
        %v2151 = vpack.c.b16 %v2140, %v2139
        %v2152 = vpack.c.b16 %v2142, %v2141
        %v2153 = vpack.c.b16 %v2144, %v2143
        %v2154 = vpack.c.b16 %v2146, %v2145
        %2163 = vmatpush.bf16.msra.mxu0 %v2154
        %2164 = vmatpush.bf16.msra.mxu0 %v2153
        %2165 = vmatpush.bf16.msra.mxu0 %v2152
        %2166 = vmatpush.bf16.msra.mxu0 %v2151
        %2167 = vmatpush.bf16.msra.mxu0 %v2150
        %2168 = vmatpush.bf16.msra.mxu0 %v2149
        %2169 = vmatpush.bf16.msra.mxu0 %v2148
        %2170 = vmatpush.bf16.msra.mxu0 %v2147
        %2171 = vmatmul.bf16.gmra.mxu0 %v2094
        %v2172 = vpop.f32.mrf.mxu0
        %v2173 = vadd.f32 %v2113, %v2172
        %v2174 = vpop.f32.mrf.mxu0
        %2175 = vdwg.mxu0
        %v2176 = vadd.f32 %v1801, %v2173
        %v2177 = vld [vmem:[%s37] sm:$0x1]
        %v2178 = vld [vmem:[%s39] sm:$0x1]
        %2179 = vadd.xlane.f32.xlu0 %v2176
        %v2180 = vpop.xlane.xlu0 %2179
        %v2181 = vmul.f32 %v2180, 0.03125
        %v2182 = vmul.f32 %v2176, %v2176
        %2183 = vadd.xlane.f32.xlu0 %v2182
        %v2184 = vpop.xlane.xlu0 %2183
        %v2185 = vmul.f32 %v2184, 0.03125
        %v2186 = vmul.f32 %v2181, %v2181
        %v2187 = vsub.f32 %v2185, %v2186
        %v2188 = vmax.f32 %v2187, 0.0
        %v2189 = vsub.f32 %v2176, %v2181
        %v2190 = vadd.f32 %v2188, 1e-05
        %v2191 = vrsqrt.pop %v2190
        %v2192 = vmul.f32 %v2191, %v2190
        %v2193 = vmul.f32 %v2192, %v2191
        %v2194 = vmul.f32 0.5, %v2193
        %v2195 = vsub.f32 1.5, %v2194
        %v2196 = vmul.f32 %v2191, %v2195
        %vm2197 = vweird.f32 %v2190
        %vm2198 = vweird.f32 %v2191
        %vm2199 = vmor %vm2197, %vm2198
        %v2200 = vsel %vm2199, %v2191, %v2196
        %v2201 = vmul.f32 %v2189, %v2200
        %v2203 = vperm.slane %v2177, 0
        %v2205 = vmul.f32 %v2201, %v2203
        %v2207 = vperm.slane %v2178, 0
        %v2209 = vadd.f32 %v2205, %v2207
        %v2210 = vpack.c.bf16 %v2209, %v2209
        %v2211 = vld [vmem:[#allocation10] sm:$0xf]
        %v2212 = vld [vmem:[#allocation10 + $0x4] sm:$0xf]
        %v2213 = vld [vmem:[#allocation10 + $0x8] sm:$0xf]
        %v2214 = vld [vmem:[#allocation10 + $0xc] sm:$0xf]
        %v2215 = vld [vmem:[#allocation10 + $0x10] sm:$0xf]
        %v2216 = vld [vmem:[#allocation10 + $0x14] sm:$0xf]
        %v2217 = vld [vmem:[#allocation10 + $0x18] sm:$0xf]
        %v2218 = vld [vmem:[#allocation10 + $0x1c] sm:$0xf]
        %v2219 = vld [vmem:[#allocation10 + $0x20] sm:$0xf]
        %v2220 = vld [vmem:[#allocation10 + $0x24] sm:$0xf]
        %v2221 = vld [vmem:[#allocation10 + $0x28] sm:$0xf]
        %v2222 = vld [vmem:[#allocation10 + $0x2c] sm:$0xf]
        %v2223 = vld [vmem:[#allocation10 + $0x30] sm:$0xf]
        %v2224 = vld [vmem:[#allocation10 + $0x34] sm:$0xf]
        %v2225 = vld [vmem:[#allocation10 + $0x38] sm:$0xf]
        %v2226 = vld [vmem:[#allocation10 + $0x3c] sm:$0xf]
        %v2227 = vld [vmem:[%s43] sm:$0x1]
        %v2229 = vperm.slane %v2227, 0
        %v2247 = vunpack.c.l.b16 %v2211
        %v2248 = vunpack.c.l.b16 %v2212
        %v2249 = vunpack.c.l.b16 %v2213
        %v2250 = vunpack.c.l.b16 %v2214
        %v2251 = vunpack.c.l.b16 %v2215
        %v2252 = vunpack.c.l.b16 %v2216
        %v2253 = vunpack.c.l.b16 %v2217
        %v2254 = vunpack.c.l.b16 %v2218
        %v2255 = vunpack.c.l.b16 %v2219
        %v2256 = vunpack.c.l.b16 %v2220
        %v2257 = vunpack.c.l.b16 %v2221
        %v2258 = vunpack.c.l.b16 %v2222
        %v2259 = vunpack.c.l.b16 %v2223
        %v2260 = vunpack.c.l.b16 %v2224
        %v2261 = vunpack.c.l.b16 %v2225
        %v2262 = vunpack.c.l.b16 %v2226
        %v2263 = vpack.c.b16 %v2248, %v2247
        %v2264 = vpack.c.b16 %v2250, %v2249
        %v2265 = vpack.c.b16 %v2252, %v2251
        %v2266 = vpack.c.b16 %v2254, %v2253
        %v2267 = vpack.c.b16 %v2256, %v2255
        %v2268 = vpack.c.b16 %v2258, %v2257
        %v2269 = vpack.c.b16 %v2260, %v2259
        %v2270 = vpack.c.b16 %v2262, %v2261
        %2279 = vmatpush.bf16.msra.mxu0 %v2270
        %2280 = vmatpush.bf16.msra.mxu0 %v2269
        %2281 = vmatpush.bf16.msra.mxu0 %v2268
        %2282 = vmatpush.bf16.msra.mxu0 %v2267
        %2283 = vmatpush.bf16.msra.mxu0 %v2266
        %2284 = vmatpush.bf16.msra.mxu0 %v2265
        %2285 = vmatpush.bf16.msra.mxu0 %v2264
        %2286 = vmatpush.bf16.msra.mxu0 %v2263
        %2287 = vmatmul.bf16.gmra.mxu0 %v2210
        %v2288 = vpop.f32.mrf.mxu0
        %v2289 = vadd.f32 %v2229, %v2288
        %v2290 = vpop.f32.mrf.mxu0
        %2291 = vdwg.mxu0
        %v2292 = vmax.f32 %v2289, 0.0
        %v2293 = vpack.c.bf16 %v2292, %v2292
        %v2294 = vld [vmem:[#allocation12] sm:$0xf]
        %v2295 = vld [vmem:[#allocation12 + $0x4] sm:$0xf]
        %v2296 = vld [vmem:[#allocation12 + $0x8] sm:$0xf]
        %v2297 = vld [vmem:[#allocation12 + $0xc] sm:$0xf]
        %v2298 = vld [vmem:[#allocation12 + $0x10] sm:$0xf]
        %v2299 = vld [vmem:[#allocation12 + $0x14] sm:$0xf]
        %v2300 = vld [vmem:[#allocation12 + $0x18] sm:$0xf]
        %v2301 = vld [vmem:[#allocation12 + $0x1c] sm:$0xf]
        %v2302 = vld [vmem:[#allocation12 + $0x20] sm:$0xf]
        %v2303 = vld [vmem:[#allocation12 + $0x24] sm:$0xf]
        %v2304 = vld [vmem:[#allocation12 + $0x28] sm:$0xf]
        %v2305 = vld [vmem:[#allocation12 + $0x2c] sm:$0xf]
        %v2306 = vld [vmem:[#allocation12 + $0x30] sm:$0xf]
        %v2307 = vld [vmem:[#allocation12 + $0x34] sm:$0xf]
        %v2308 = vld [vmem:[#allocation12 + $0x38] sm:$0xf]
        %v2309 = vld [vmem:[#allocation12 + $0x3c] sm:$0xf]
        %v2310 = vld [vmem:[%s47] sm:$0x1]
        %v2312 = vperm.slane %v2310, 0
        %v2330 = vunpack.c.l.b16 %v2294
        %v2331 = vunpack.c.l.b16 %v2295
        %v2332 = vunpack.c.l.b16 %v2296
        %v2333 = vunpack.c.l.b16 %v2297
        %v2334 = vunpack.c.l.b16 %v2298
        %v2335 = vunpack.c.l.b16 %v2299
        %v2336 = vunpack.c.l.b16 %v2300
        %v2337 = vunpack.c.l.b16 %v2301
        %v2338 = vunpack.c.l.b16 %v2302
        %v2339 = vunpack.c.l.b16 %v2303
        %v2340 = vunpack.c.l.b16 %v2304
        %v2341 = vunpack.c.l.b16 %v2305
        %v2342 = vunpack.c.l.b16 %v2306
        %v2343 = vunpack.c.l.b16 %v2307
        %v2344 = vunpack.c.l.b16 %v2308
        %v2345 = vunpack.c.l.b16 %v2309
        %v2346 = vpack.c.b16 %v2331, %v2330
        %v2347 = vpack.c.b16 %v2333, %v2332
        %v2348 = vpack.c.b16 %v2335, %v2334
        %v2349 = vpack.c.b16 %v2337, %v2336
        %v2350 = vpack.c.b16 %v2339, %v2338
        %v2351 = vpack.c.b16 %v2341, %v2340
        %v2352 = vpack.c.b16 %v2343, %v2342
        %v2353 = vpack.c.b16 %v2345, %v2344
        %2362 = vmatpush.bf16.msra.mxu0 %v2353
        %2363 = vmatpush.bf16.msra.mxu0 %v2352
        %2364 = vmatpush.bf16.msra.mxu0 %v2351
        %2365 = vmatpush.bf16.msra.mxu0 %v2350
        %2366 = vmatpush.bf16.msra.mxu0 %v2349
        %2367 = vmatpush.bf16.msra.mxu0 %v2348
        %2368 = vmatpush.bf16.msra.mxu0 %v2347
        %2369 = vmatpush.bf16.msra.mxu0 %v2346
        %2370 = vmatmul.bf16.gmra.mxu0 %v2293
        %v2371 = vpop.f32.mrf.mxu0
        %v2372 = vadd.f32 %v2312, %v2371
        %v2373 = vpop.f32.mrf.mxu0
        %2374 = vdwg.mxu0
        %v2375 = vadd.f32 %v2176, %v2372
        %s2376 = scalar_lea.vmem %s9, 1
        %v2377 = vld [vmem:[%s2376] sm:$0x1]
        %s2378 = scalar_lea.vmem %s11, 1
        %v2379 = vld [vmem:[%s2378] sm:$0x1]
        %2380 = vadd.xlane.f32.xlu0 %v2375
        %v2381 = vpop.xlane.xlu0 %2380
        %v2382 = vmul.f32 %v2381, 0.03125
        %v2383 = vmul.f32 %v2375, %v2375
        %2384 = vadd.xlane.f32.xlu0 %v2383
        %v2385 = vpop.xlane.xlu0 %2384
        %v2386 = vmul.f32 %v2385, 0.03125
        %v2387 = vmul.f32 %v2382, %v2382
        %v2388 = vsub.f32 %v2386, %v2387
        %v2389 = vmax.f32 %v2388, 0.0
        %v2390 = vsub.f32 %v2375, %v2382
        %v2391 = vadd.f32 %v2389, 1e-05
        %v2392 = vrsqrt.pop %v2391
        %v2393 = vmul.f32 %v2392, %v2391
        %v2394 = vmul.f32 %v2393, %v2392
        %v2395 = vmul.f32 0.5, %v2394
        %v2396 = vsub.f32 1.5, %v2395
        %v2397 = vmul.f32 %v2392, %v2396
        %vm2398 = vweird.f32 %v2391
        %vm2399 = vweird.f32 %v2392
        %vm2400 = vmor %vm2398, %vm2399
        %v2401 = vsel %vm2400, %v2392, %v2397
        %v2402 = vmul.f32 %v2390, %v2401
        %v2404 = vperm.slane %v2377, 0
        %v2406 = vmul.f32 %v2402, %v2404
        %v2408 = vperm.slane %v2379, 0
        %v2410 = vadd.f32 %v2406, %v2408
        %v2411 = vpack.c.bf16 %v2410, %v2410
        %s2412 = scalar_lea.vmem [#allocation2], 192
        %v2413 = vld [vmem:[%s2412] sm:$0xff]
        %v2414 = vld [vmem:[%s2412 + $0x8] sm:$0xf]
        %v2415 = vld [vmem:[%s2412 + $0xc] sm:$0xff]
        %v2416 = vld [vmem:[%s2412 + $0x14] sm:$0xf]
        %v2417 = vld [vmem:[%s2412 + $0x18] sm:$0xff]
        %v2418 = vld [vmem:[%s2412 + $0x20] sm:$0xf]
        %v2419 = vld [vmem:[%s2412 + $0x24] sm:$0xff]
        %v2420 = vld [vmem:[%s2412 + $0x2c] sm:$0xf]
        %v2421 = vld [vmem:[%s2412 + $0x30] sm:$0xff]
        %v2422 = vld [vmem:[%s2412 + $0x38] sm:$0xf]
        %v2423 = vld [vmem:[%s2412 + $0x3c] sm:$0xff]
        %v2424 = vld [vmem:[%s2412 + $0x44] sm:$0xf]
        %v2425 = vld [vmem:[%s2412 + $0x48] sm:$0xff]
        %v2426 = vld [vmem:[%s2412 + $0x50] sm:$0xf]
        %v2427 = vld [vmem:[%s2412 + $0x54] sm:$0xff]
        %v2428 = vld [vmem:[%s2412 + $0x5c] sm:$0xf]
        %v2429 = vld [vmem:[%s2412 + $0x60] sm:$0xff]
        %v2430 = vld [vmem:[%s2412 + $0x68] sm:$0xf]
        %v2431 = vld [vmem:[%s2412 + $0x6c] sm:$0xff]
        %v2432 = vld [vmem:[%s2412 + $0x74] sm:$0xf]
        %v2433 = vld [vmem:[%s2412 + $0x78] sm:$0xff]
        %v2434 = vld [vmem:[%s2412 + $0x80] sm:$0xf]
        %v2435 = vld [vmem:[%s2412 + $0x84] sm:$0xff]
        %v2436 = vld [vmem:[%s2412 + $0x8c] sm:$0xf]
        %v2437 = vld [vmem:[%s2412 + $0x90] sm:$0xff]
        %v2438 = vld [vmem:[%s2412 + $0x98] sm:$0xf]
        %v2439 = vld [vmem:[%s2412 + $0x9c] sm:$0xff]
        %v2440 = vld [vmem:[%s2412 + $0xa4] sm:$0xf]
        %v2441 = vld [vmem:[%s2412 + $0xa8] sm:$0xff]
        %v2442 = vld [vmem:[%s2412 + $0xb0] sm:$0xf]
        %v2443 = vld [vmem:[%s2412 + $0xb4] sm:$0xff]
        %v2444 = vld [vmem:[%s2412 + $0xbc] sm:$0xf]
        %s2445 = scalar_lea.vmem %s15, 3
        %v2446 = vld [vmem:[%s2445] sm:$0x7]
        %v2448 = vperm.slane %v2446, 0
        %v2449 = vperm.slane %v2446, 1
        %v2450 = vperm.slane %v2446, 2
        %v2486 = vunpack.c.l.b16 %v2413
        %v2487 = vunpack.c.h.b16 %v2413
        %v2488 = vunpack.c.l.b16 %v2414
        %v2489 = vunpack.c.l.b16 %v2415
        %v2490 = vunpack.c.h.b16 %v2415
        %v2491 = vunpack.c.l.b16 %v2416
        %v2492 = vunpack.c.l.b16 %v2417
        %v2493 = vunpack.c.h.b16 %v2417
        %v2494 = vunpack.c.l.b16 %v2418
        %v2495 = vunpack.c.l.b16 %v2419
        %v2496 = vunpack.c.h.b16 %v2419
        %v2497 = vunpack.c.l.b16 %v2420
        %v2498 = vunpack.c.l.b16 %v2421
        %v2499 = vunpack.c.h.b16 %v2421
        %v2500 = vunpack.c.l.b16 %v2422
        %v2501 = vunpack.c.l.b16 %v2423
        %v2502 = vunpack.c.h.b16 %v2423
        %v2503 = vunpack.c.l.b16 %v2424
        %v2504 = vunpack.c.l.b16 %v2425
        %v2505 = vunpack.c.h.b16 %v2425
        %v2506 = vunpack.c.l.b16 %v2426
        %v2507 = vunpack.c.l.b16 %v2427
        %v2508 = vunpack.c.h.b16 %v2427
        %v2509 = vunpack.c.l.b16 %v2428
        %v2510 = vunpack.c.l.b16 %v2429
        %v2511 = vunpack.c.h.b16 %v2429
        %v2512 = vunpack.c.l.b16 %v2430
        %v2513 = vunpack.c.l.b16 %v2431
        %v2514 = vunpack.c.h.b16 %v2431
        %v2515 = vunpack.c.l.b16 %v2432
        %v2516 = vunpack.c.l.b16 %v2433
        %v2517 = vunpack.c.h.b16 %v2433
        %v2518 = vunpack.c.l.b16 %v2434
        %v2519 = vunpack.c.l.b16 %v2435
        %v2520 = vunpack.c.h.b16 %v2435
        %v2521 = vunpack.c.l.b16 %v2436
        %v2522 = vunpack.c.l.b16 %v2437
        %v2523 = vunpack.c.h.b16 %v2437
        %v2524 = vunpack.c.l.b16 %v2438
        %v2525 = vunpack.c.l.b16 %v2439
        %v2526 = vunpack.c.h.b16 %v2439
        %v2527 = vunpack.c.l.b16 %v2440
        %v2528 = vunpack.c.l.b16 %v2441
        %v2529 = vunpack.c.h.b16 %v2441
        %v2530 = vunpack.c.l.b16 %v2442
        %v2531 = vunpack.c.l.b16 %v2443
        %v2532 = vunpack.c.h.b16 %v2443
        %v2533 = vunpack.c.l.b16 %v2444
        %v2534 = vpack.c.b16 %v2489, %v2486
        %v2535 = vpack.c.b16 %v2490, %v2487
        %v2536 = vpack.c.b16 %v2491, %v2488
        %v2537 = vpack.c.b16 %v2495, %v2492
        %v2538 = vpack.c.b16 %v2496, %v2493
        %v2539 = vpack.c.b16 %v2497, %v2494
        %v2540 = vpack.c.b16 %v2501, %v2498
        %v2541 = vpack.c.b16 %v2502, %v2499
        %v2542 = vpack.c.b16 %v2503, %v2500
        %v2543 = vpack.c.b16 %v2507, %v2504
        %v2544 = vpack.c.b16 %v2508, %v2505
        %v2545 = vpack.c.b16 %v2509, %v2506
        %v2546 = vpack.c.b16 %v2513, %v2510
        %v2547 = vpack.c.b16 %v2514, %v2511
        %v2548 = vpack.c.b16 %v2515, %v2512
        %v2549 = vpack.c.b16 %v2519, %v2516
        %v2550 = vpack.c.b16 %v2520, %v2517
        %v2551 = vpack.c.b16 %v2521, %v2518
        %v2552 = vpack.c.b16 %v2525, %v2522
        %v2553 = vpack.c.b16 %v2526, %v2523
        %v2554 = vpack.c.b16 %v2527, %v2524
        %v2555 = vpack.c.b16 %v2531, %v2528
        %v2556 = vpack.c.b16 %v2532, %v2529
        %v2557 = vpack.c.b16 %v2533, %v2530
        %2582 = vmatpush.bf16.msra.mxu0 %v2555
        %2583 = vmatpush.bf16.msra.mxu0 %v2552
        %2584 = vmatpush.bf16.msra.mxu0 %v2549
        %2585 = vmatpush.bf16.msra.mxu0 %v2546
        %2586 = vmatpush.bf16.msra.mxu0 %v2543
        %2587 = vmatpush.bf16.msra.mxu0 %v2540
        %2588 = vmatpush.bf16.msra.mxu0 %v2537
        %2589 = vmatpush.bf16.msra.mxu0 %v2534
        %2590 = vmatmul.bf16.gmra.mxu0 %v2411
        %v2591 = vpop.f32.mrf.mxu0
        %v2592 = vadd.f32 %v2448, %v2591
        %v2593 = vpop.f32.mrf.mxu0
        %2594 = vdwg.mxu0
        %2595 = vmatpush.bf16.msra.mxu0 %v2556
        %2596 = vmatpush.bf16.msra.mxu0 %v2553
        %2597 = vmatpush.bf16.msra.mxu0 %v2550
        %2598 = vmatpush.bf16.msra.mxu0 %v2547
        %2599 = vmatpush.bf16.msra.mxu0 %v2544
        %2600 = vmatpush.bf16.msra.mxu0 %v2541
        %2601 = vmatpush.bf16.msra.mxu0 %v2538
        %2602 = vmatpush.bf16.msra.mxu0 %v2535
        %2603 = vmatmul.bf16.gmra.mxu0 %v2411
        %v2604 = vpop.f32.mrf.mxu0
        %v2605 = vadd.f32 %v2449, %v2604
        %v2606 = vpop.f32.mrf.mxu0
        %2607 = vdwg.mxu0
        %2608 = vmatpush.bf16.msra.mxu0 %v2557
        %2609 = vmatpush.bf16.msra.mxu0 %v2554
        %2610 = vmatpush.bf16.msra.mxu0 %v2551
        %2611 = vmatpush.bf16.msra.mxu0 %v2548
        %2612 = vmatpush.bf16.msra.mxu0 %v2545
        %2613 = vmatpush.bf16.msra.mxu0 %v2542
        %2614 = vmatpush.bf16.msra.mxu0 %v2539
        %2615 = vmatpush.bf16.msra.mxu0 %v2536
        %2616 = vmatmul.bf16.gmra.mxu0 %v2411
        %v2617 = vpop.f32.mrf.mxu0
        %v2618 = vadd.f32 %v2450, %v2617
        %v2619 = vpop.f32.mrf.mxu0
        %2620 = vdwg.mxu0
        %v2621 = vpack.c.bf16 %v2605, %v2592
        %v2622 = vpack.c.bf16 %v2618, %v2618
        %v2624 = vrot.slane %v2621, 4
        %2626 = vmatpush.bf16.xpose.msra.mxu0 0
        %2627 = vmatpush.bf16.xpose.msra.mxu0 0
        %2628 = vmatpush.bf16.xpose.msra.mxu0 0
        %2629 = vmatpush.bf16.xpose.msra.mxu0 0
        %2630 = vmatpush.bf16.xpose.msra.mxu0 0
        %2631 = vmatpush.bf16.xpose.msra.mxu0 0
        %2632 = vmatpush.bf16.xpose.msra.mxu0 0
        %2633 = vmatpush.bf16.xpose.msra.mxu0 %v2624
        %2634 = vmatmul.bf16.gmra.mxu0 %v2621
        %v2635 = vpop.f32.mrf.mxu0
        %v2636 = vadd.f32 0.0, %v2635
        %v2637 = vpop.f32.mrf.mxu0
        %2638 = vdwg.mxu0
        %v2639 = vmul.f32 %v2636, 0.17677669
        %v2640 = vadd.f32 %v2639, %v1683
        %v2641 = vsel %vm1686, %v2640, -inf
        %2642 = vmax.xlane.f32.xlu0 %v2641
        %v2643 = vpop.xlane.xlu0 %2642
        %v2644 = vsub.f32 %v2640, %v2643
        %v2645 = vmul.f32 %v2644, 1.442695
        %v2646 = vpow.pop %v2645
        %v2647 = vsel %vm1686, %v2646, 0.0
        %2648 = vadd.xlane.f32.xlu0 %v2647
        %v2649 = vpop.xlane.xlu0 %2648
        %v2650 = vrcp.pop %v2649
        %v2651 = vmul.f32 %v2646, %v2650
        %v2652 = vpack.c.bf16 %v2651, %v2651
        %v2654 = vsel %vm1686, %v2652, 0
        %v2657 = vsel %vm1702, %v2622, 0
        %2659 = vmatpush.bf16.msra.mxu0 0
        %2660 = vmatpush.bf16.msra.mxu0 0
        %2661 = vmatpush.bf16.msra.mxu0 0
        %2662 = vmatpush.bf16.msra.mxu0 0
        %2663 = vmatpush.bf16.msra.mxu0 0
        %2664 = vmatpush.bf16.msra.mxu0 0
        %2665 = vmatpush.bf16.msra.mxu0 0
        %2666 = vmatpush.bf16.msra.mxu0 %v2657
        %2667 = vmatmul.bf16.gmra.mxu0 %v2654
        %v2668 = vpop.f32.mrf.mxu0
        %v2669 = vadd.f32 0.0, %v2668
        %v2670 = vpop.f32.mrf.mxu0
        %2671 = vdwg.mxu0
        %v2672 = vpack.c.bf16 %v2669, %v2669
        %s2673 = scalar_lea.vmem [#allocation4], 64
        %v2674 = vld [vmem:[%s2673] sm:$0xf]
        %v2675 = vld [vmem:[%s2673 + $0x4] sm:$0xf]
        %v2676 = vld [vmem:[%s2673 + $0x8] sm:$0xf]
        %v2677 = vld [vmem:[%s2673 + $0xc] sm:$0xf]
        %v2678 = vld [vmem:[%s2673 + $0x10] sm:$0xf]
        %v2679 = vld [vmem:[%s2673 + $0x14] sm:$0xf]
        %v2680 = vld [vmem:[%s2673 + $0x18] sm:$0xf]
        %v2681 = vld [vmem:[%s2673 + $0x1c] sm:$0xf]
        %v2682 = vld [vmem:[%s2673 + $0x20] sm:$0xf]
        %v2683 = vld [vmem:[%s2673 + $0x24] sm:$0xf]
        %v2684 = vld [vmem:[%s2673 + $0x28] sm:$0xf]
        %v2685 = vld [vmem:[%s2673 + $0x2c] sm:$0xf]
        %v2686 = vld [vmem:[%s2673 + $0x30] sm:$0xf]
        %v2687 = vld [vmem:[%s2673 + $0x34] sm:$0xf]
        %v2688 = vld [vmem:[%s2673 + $0x38] sm:$0xf]
        %v2689 = vld [vmem:[%s2673 + $0x3c] sm:$0xf]
        %s2690 = scalar_lea.vmem %s19, 1
        %v2691 = vld [vmem:[%s2690] sm:$0x1]
        %v2693 = vperm.slane %v2691, 0
        %v2711 = vunpack.c.l.b16 %v2674
        %v2712 = vunpack.c.l.b16 %v2675
        %v2713 = vunpack.c.l.b16 %v2676
        %v2714 = vunpack.c.l.b16 %v2677
        %v2715 = vunpack.c.l.b16 %v2678
        %v2716 = vunpack.c.l.b16 %v2679
        %v2717 = vunpack.c.l.b16 %v2680
        %v2718 = vunpack.c.l.b16 %v2681
        %v2719 = vunpack.c.l.b16 %v2682
        %v2720 = vunpack.c.l.b16 %v2683
        %v2721 = vunpack.c.l.b16 %v2684
        %v2722 = vunpack.c.l.b16 %v2685
        %v2723 = vunpack.c.l.b16 %v2686
        %v2724 = vunpack.c.l.b16 %v2687
        %v2725 = vunpack.c.l.b16 %v2688
        %v2726 = vunpack.c.l.b16 %v2689
        %v2727 = vpack.c.b16 %v2712, %v2711
        %v2728 = vpack.c.b16 %v2714, %v2713
        %v2729 = vpack.c.b16 %v2716, %v2715
        %v2730 = vpack.c.b16 %v2718, %v2717
        %v2731 = vpack.c.b16 %v2720, %v2719
        %v2732 = vpack.c.b16 %v2722, %v2721
        %v2733 = vpack.c.b16 %v2724, %v2723
        %v2734 = vpack.c.b16 %v2726, %v2725
        %2743 = vmatpush.bf16.msra.mxu0 %v2734
        %2744 = vmatpush.bf16.msra.mxu0 %v2733
        %2745 = vmatpush.bf16.msra.mxu0 %v2732
        %2746 = vmatpush.bf16.msra.mxu0 %v2731
        %2747 = vmatpush.bf16.msra.mxu0 %v2730
        %2748 = vmatpush.bf16.msra.mxu0 %v2729
        %2749 = vmatpush.bf16.msra.mxu0 %v2728
        %2750 = vmatpush.bf16.msra.mxu0 %v2727
        %2751 = vmatmul.bf16.gmra.mxu0 %v2672
        %v2752 = vpop.f32.mrf.mxu0
        %v2753 = vadd.f32 %v2693, %v2752
        %v2754 = vpop.f32.mrf.mxu0
        %2755 = vdwg.mxu0
        %v2756 = vadd.f32 %v2375, %v2753
        %s2757 = scalar_lea.vmem %s21, 1
        %v2758 = vld [vmem:[%s2757] sm:$0x1]
        %s2759 = scalar_lea.vmem %s23, 1
        %v2760 = vld [vmem:[%s2759] sm:$0x1]
        %2761 = vadd.xlane.f32.xlu0 %v2756
        %v2762 = vpop.xlane.xlu0 %2761
        %v2763 = vmul.f32 %v2762, 0.03125
        %v2764 = vmul.f32 %v2756, %v2756
        %2765 = vadd.xlane.f32.xlu0 %v2764
        %v2766 = vpop.xlane.xlu0 %2765
        %v2767 = vmul.f32 %v2766, 0.03125
        %v2768 = vmul.f32 %v2763, %v2763
        %v2769 = vsub.f32 %v2767, %v2768
        %v2770 = vmax.f32 %v2769, 0.0
        %v2771 = vsub.f32 %v2756, %v2763
        %v2772 = vadd.f32 %v2770, 1e-05
        %v2773 = vrsqrt.pop %v2772
        %v2774 = vmul.f32 %v2773, %v2772
        %v2775 = vmul.f32 %v2774, %v2773
        %v2776 = vmul.f32 0.5, %v2775
        %v2777 = vsub.f32 1.5, %v2776
        %v2778 = vmul.f32 %v2773, %v2777
        %vm2779 = vweird.f32 %v2772
        %vm2780 = vweird.f32 %v2773
        %vm2781 = vmor %vm2779, %vm2780
        %v2782 = vsel %vm2781, %v2773, %v2778
        %v2783 = vmul.f32 %v2771, %v2782
        %v2785 = vperm.slane %v2758, 0
        %v2787 = vmul.f32 %v2783, %v2785
        %v2789 = vperm.slane %v2760, 0
        %v2791 = vadd.f32 %v2787, %v2789
        %v2792 = vpack.c.bf16 %v2791, %v2791
        %s2793 = scalar_lea.vmem [#allocation6], 64
        %v2794 = vld [vmem:[%s2793] sm:$0xf]
        %v2795 = vld [vmem:[%s2793 + $0x4] sm:$0xf]
        %v2796 = vld [vmem:[%s2793 + $0x8] sm:$0xf]
        %v2797 = vld [vmem:[%s2793 + $0xc] sm:$0xf]
        %v2798 = vld [vmem:[%s2793 + $0x10] sm:$0xf]
        %v2799 = vld [vmem:[%s2793 + $0x14] sm:$0xf]
        %v2800 = vld [vmem:[%s2793 + $0x18] sm:$0xf]
        %v2801 = vld [vmem:[%s2793 + $0x1c] sm:$0xf]
        %v2802 = vld [vmem:[%s2793 + $0x20] sm:$0xf]
        %v2803 = vld [vmem:[%s2793 + $0x24] sm:$0xf]
        %v2804 = vld [vmem:[%s2793 + $0x28] sm:$0xf]
        %v2805 = vld [vmem:[%s2793 + $0x2c] sm:$0xf]
        %v2806 = vld [vmem:[%s2793 + $0x30] sm:$0xf]
        %v2807 = vld [vmem:[%s2793 + $0x34] sm:$0xf]
        %v2808 = vld [vmem:[%s2793 + $0x38] sm:$0xf]
        %v2809 = vld [vmem:[%s2793 + $0x3c] sm:$0xf]
        %s2810 = scalar_lea.vmem %s27, 1
        %v2811 = vld [vmem:[%s2810] sm:$0x1]
        %v2813 = vperm.slane %v2811, 0
        %v2831 = vunpack.c.l.b16 %v2794
        %v2832 = vunpack.c.l.b16 %v2795
        %v2833 = vunpack.c.l.b16 %v2796
        %v2834 = vunpack.c.l.b16 %v2797
        %v2835 = vunpack.c.l.b16 %v2798
        %v2836 = vunpack.c.l.b16 %v2799
        %v2837 = vunpack.c.l.b16 %v2800
        %v2838 = vunpack.c.l.b16 %v2801
        %v2839 = vunpack.c.l.b16 %v2802
        %v2840 = vunpack.c.l.b16 %v2803
        %v2841 = vunpack.c.l.b16 %v2804
        %v2842 = vunpack.c.l.b16 %v2805
        %v2843 = vunpack.c.l.b16 %v2806
        %v2844 = vunpack.c.l.b16 %v2807
        %v2845 = vunpack.c.l.b16 %v2808
        %v2846 = vunpack.c.l.b16 %v2809
        %v2847 = vpack.c.b16 %v2832, %v2831
        %v2848 = vpack.c.b16 %v2834, %v2833
        %v2849 = vpack.c.b16 %v2836, %v2835
        %v2850 = vpack.c.b16 %v2838, %v2837
        %v2851 = vpack.c.b16 %v2840, %v2839
        %v2852 = vpack.c.b16 %v2842, %v2841
        %v2853 = vpack.c.b16 %v2844, %v2843
        %v2854 = vpack.c.b16 %v2846, %v2845
        %2863 = vmatpush.bf16.msra.mxu0 %v2854
        %2864 = vmatpush.bf16.msra.mxu0 %v2853
        %2865 = vmatpush.bf16.msra.mxu0 %v2852
        %2866 = vmatpush.bf16.msra.mxu0 %v2851
        %2867 = vmatpush.bf16.msra.mxu0 %v2850
        %2868 = vmatpush.bf16.msra.mxu0 %v2849
        %2869 = vmatpush.bf16.msra.mxu0 %v2848
        %2870 = vmatpush.bf16.msra.mxu0 %v2847
        %2871 = vmatmul.bf16.gmra.mxu0 %v2792
        %v2872 = vpop.f32.mrf.mxu0
        %v2873 = vadd.f32 %v2813, %v2872
        %v2874 = vpop.f32.mrf.mxu0
        %2875 = vdwg.mxu0
        %v2876 = vpack.c.bf16 %v2873, %v2873
        %s2877 = scalar_lea.vmem [#allocation7], 128
        %v2878 = vld [vmem:[%s2877] sm:$0xff]
        %v2879 = vld [vmem:[%s2877 + $0x8] sm:$0xff]
        %v2880 = vld [vmem:[%s2877 + $0x10] sm:$0xff]
        %v2881 = vld [vmem:[%s2877 + $0x18] sm:$0xff]
        %v2882 = vld [vmem:[%s2877 + $0x20] sm:$0xff]
        %v2883 = vld [vmem:[%s2877 + $0x28] sm:$0xff]
        %v2884 = vld [vmem:[%s2877 + $0x30] sm:$0xff]
        %v2885 = vld [vmem:[%s2877 + $0x38] sm:$0xff]
        %v2886 = vld [vmem:[%s2877 + $0x40] sm:$0xff]
        %v2887 = vld [vmem:[%s2877 + $0x48] sm:$0xff]
        %v2888 = vld [vmem:[%s2877 + $0x50] sm:$0xff]
        %v2889 = vld [vmem:[%s2877 + $0x58] sm:$0xff]
        %v2890 = vld [vmem:[%s2877 + $0x60] sm:$0xff]
        %v2891 = vld [vmem:[%s2877 + $0x68] sm:$0xff]
        %v2892 = vld [vmem:[%s2877 + $0x70] sm:$0xff]
        %v2893 = vld [vmem:[%s2877 + $0x78] sm:$0xff]
        %s2894 = scalar_lea.vmem %s31, 2
        %v2895 = vld [vmem:[%s2894] sm:$0x3]
        %v2897 = vperm.slane %v2895, 0
        %v2898 = vperm.slane %v2895, 1
        %v2917 = vunpack.c.l.b16 %v2878
        %v2918 = vunpack.c.h.b16 %v2878
        %v2919 = vunpack.c.l.b16 %v2879
        %v2920 = vunpack.c.h.b16 %v2879
        %v2921 = vunpack.c.l.b16 %v2880
        %v2922 = vunpack.c.h.b16 %v2880
        %v2923 = vunpack.c.l.b16 %v2881
        %v2924 = vunpack.c.h.b16 %v2881
        %v2925 = vunpack.c.l.b16 %v2882
        %v2926 = vunpack.c.h.b16 %v2882
        %v2927 = vunpack.c.l.b16 %v2883
        %v2928 = vunpack.c.h.b16 %v2883
        %v2929 = vunpack.c.l.b16 %v2884
        %v2930 = vunpack.c.h.b16 %v2884
        %v2931 = vunpack.c.l.b16 %v2885
        %v2932 = vunpack.c.h.b16 %v2885
        %v2933 = vunpack.c.l.b16 %v2886
        %v2934 = vunpack.c.h.b16 %v2886
        %v2935 = vunpack.c.l.b16 %v2887
        %v2936 = vunpack.c.h.b16 %v2887
        %v2937 = vunpack.c.l.b16 %v2888
        %v2938 = vunpack.c.h.b16 %v2888
        %v2939 = vunpack.c.l.b16 %v2889
        %v2940 = vunpack.c.h.b16 %v2889
        %v2941 = vunpack.c.l.b16 %v2890
        %v2942 = vunpack.c.h.b16 %v2890
        %v2943 = vunpack.c.l.b16 %v2891
        %v2944 = vunpack.c.h.b16 %v2891
        %v2945 = vunpack.c.l.b16 %v2892
        %v2946 = vunpack.c.h.b16 %v2892
        %v2947 = vunpack.c.l.b16 %v2893
        %v2948 = vunpack.c.h.b16 %v2893
        %v2949 = vpack.c.b16 %v2919, %v2917
        %v2950 = vpack.c.b16 %v2920, %v2918
        %v2951 = vpack.c.b16 %v2923, %v2921
        %v2952 = vpack.c.b16 %v2924, %v2922
        %v2953 = vpack.c.b16 %v2927, %v2925
        %v2954 = vpack.c.b16 %v2928, %v2926
        %v2955 = vpack.c.b16 %v2931, %v2929
        %v2956 = vpack.c.b16 %v2932, %v2930
        %v2957 = vpack.c.b16 %v2935, %v2933
        %v2958 = vpack.c.b16 %v2936, %v2934
        %v2959 = vpack.c.b16 %v2939, %v2937
        %v2960 = vpack.c.b16 %v2940, %v2938
        %v2961 = vpack.c.b16 %v2943, %v2941
        %v2962 = vpack.c.b16 %v2944, %v2942
        %v2963 = vpack.c.b16 %v2947, %v2945
        %v2964 = vpack.c.b16 %v2948, %v2946
        %2981 = vmatpush.bf16.msra.mxu0 %v2963
        %2982 = vmatpush.bf16.msra.mxu0 %v2961
        %2983 = vmatpush.bf16.msra.mxu0 %v2959
        %2984 = vmatpush.bf16.msra.mxu0 %v2957
        %2985 = vmatpush.bf16.msra.mxu0 %v2955
        %2986 = vmatpush.bf16.msra.mxu0 %v2953
        %2987 = vmatpush.bf16.msra.mxu0 %v2951
        %2988 = vmatpush.bf16.msra.mxu0 %v2949
        %2989 = vmatmul.bf16.gmra.mxu0 %v1421
        %v2990 = vpop.f32.mrf.mxu0
        %v2991 = vadd.f32 %v2897, %v2990
        %v2992 = vpop.f32.mrf.mxu0
        %2993 = vdwg.mxu0
        %2994 = vmatpush.bf16.msra.mxu0 %v2964
        %2995 = vmatpush.bf16.msra.mxu0 %v2962
        %2996 = vmatpush.bf16.msra.mxu0 %v2960
        %2997 = vmatpush.bf16.msra.mxu0 %v2958
        %2998 = vmatpush.bf16.msra.mxu0 %v2956
        %2999 = vmatpush.bf16.msra.mxu0 %v2954
        %3000 = vmatpush.bf16.msra.mxu0 %v2952
        %3001 = vmatpush.bf16.msra.mxu0 %v2950
        %3002 = vmatmul.bf16.gmra.mxu0 %v1421
        %v3003 = vpop.f32.mrf.mxu0
        %v3004 = vadd.f32 %v2898, %v3003
        %v3005 = vpop.f32.mrf.mxu0
        %3006 = vdwg.mxu0
        %v3007 = vpack.c.bf16 %v3004, %v2991
        %v3009 = vrot.slane %v3007, 4
        %3010 = vmatpush.bf16.xpose.msra.mxu0 0
        %3011 = vmatpush.bf16.xpose.msra.mxu0 0
        %3012 = vmatpush.bf16.xpose.msra.mxu0 0
        %3013 = vmatpush.bf16.xpose.msra.mxu0 0
        %3014 = vmatpush.bf16.xpose.msra.mxu0 0
        %3015 = vmatpush.bf16.xpose.msra.mxu0 0
        %3016 = vmatpush.bf16.xpose.msra.mxu0 0
        %3017 = vmatpush.bf16.xpose.msra.mxu0 %v3007
        %3018 = vmatmul.bf16.gmra.mxu0 %v2876
        %v3019 = vpop.f32.mrf.mxu0
        %v3020 = vadd.f32 0.0, %v3019
        %v3021 = vpop.f32.mrf.mxu0
        %3022 = vdwg.mxu0
        %v3023 = vmul.f32 %v3020, 0.17677669
        %v3024 = vsel %vm1686, %v3023, -inf
        %3025 = vmax.xlane.f32.xlu0 %v3024
        %v3026 = vpop.xlane.xlu0 %3025
        %v3027 = vsub.f32 %v3023, %v3026
        %v3028 = vmul.f32 %v3027, 1.442695
        %v3029 = vpow.pop %v3028
        %v3030 = vsel %vm1686, %v3029, 0.0
        %3031 = vadd.xlane.f32.xlu0 %v3030
        %v3032 = vpop.xlane.xlu0 %3031
        %v3033 = vrcp.pop %v3032
        %v3034 = vmul.f32 %v3029, %v3033
        %v3035 = vpack.c.bf16 %v3034, %v3034
        %v3037 = vsel %vm1686, %v3035, 0
        %v3040 = vsel %vm1702, %v3009, 0
        %3042 = vmatpush.bf16.msra.mxu0 0
        %3043 = vmatpush.bf16.msra.mxu0 0
        %3044 = vmatpush.bf16.msra.mxu0 0
        %3045 = vmatpush.bf16.msra.mxu0 0
        %3046 = vmatpush.bf16.msra.mxu0 0
        %3047 = vmatpush.bf16.msra.mxu0 0
        %3048 = vmatpush.bf16.msra.mxu0 0
        %3049 = vmatpush.bf16.msra.mxu0 %v3040
        %3050 = vmatmul.bf16.gmra.mxu0 %v3037
        %v3051 = vpop.f32.mrf.mxu0
        %v3052 = vadd.f32 0.0, %v3051
        %v3053 = vpop.f32.mrf.mxu0
        %3054 = vdwg.mxu0
        %v3055 = vpack.c.bf16 %v3052, %v3052
        %s3056 = scalar_lea.vmem [#allocation9], 64
        %v3057 = vld [vmem:[%s3056] sm:$0xf]
        %v3058 = vld [vmem:[%s3056 + $0x4] sm:$0xf]
        %v3059 = vld [vmem:[%s3056 + $0x8] sm:$0xf]
        %v3060 = vld [vmem:[%s3056 + $0xc] sm:$0xf]
        %v3061 = vld [vmem:[%s3056 + $0x10] sm:$0xf]
        %v3062 = vld [vmem:[%s3056 + $0x14] sm:$0xf]
        %v3063 = vld [vmem:[%s3056 + $0x18] sm:$0xf]
        %v3064 = vld [vmem:[%s3056 + $0x1c] sm:$0xf]
        %v3065 = vld [vmem:[%s3056 + $0x20] sm:$0xf]
        %v3066 = vld [vmem:[%s3056 + $0x24] sm:$0xf]
        %v3067 = vld [vmem:[%s3056 + $0x28] sm:$0xf]
        %v3068 = vld [vmem:[%s3056 + $0x2c] sm:$0xf]
        %v3069 = vld [vmem:[%s3056 + $0x30] sm:$0xf]
        %v3070 = vld [vmem:[%s3056 + $0x34] sm:$0xf]
        %v3071 = vld [vmem:[%s3056 + $0x38] sm:$0xf]
        %v3072 = vld [vmem:[%s3056 + $0x3c] sm:$0xf]
        %s3073 = scalar_lea.vmem %s35, 1
        %v3074 = vld [vmem:[%s3073] sm:$0x1]
        %v3076 = vperm.slane %v3074, 0
        %v3094 = vunpack.c.l.b16 %v3057
        %v3095 = vunpack.c.l.b16 %v3058
        %v3096 = vunpack.c.l.b16 %v3059
        %v3097 = vunpack.c.l.b16 %v3060
        %v3098 = vunpack.c.l.b16 %v3061
        %v3099 = vunpack.c.l.b16 %v3062
        %v3100 = vunpack.c.l.b16 %v3063
        %v3101 = vunpack.c.l.b16 %v3064
        %v3102 = vunpack.c.l.b16 %v3065
        %v3103 = vunpack.c.l.b16 %v3066
        %v3104 = vunpack.c.l.b16 %v3067
        %v3105 = vunpack.c.l.b16 %v3068
        %v3106 = vunpack.c.l.b16 %v3069
        %v3107 = vunpack.c.l.b16 %v3070
        %v3108 = vunpack.c.l.b16 %v3071
        %v3109 = vunpack.c.l.b16 %v3072
        %v3110 = vpack.c.b16 %v3095, %v3094
        %v3111 = vpack.c.b16 %v3097, %v3096
        %v3112 = vpack.c.b16 %v3099, %v3098
        %v3113 = vpack.c.b16 %v3101, %v3100
        %v3114 = vpack.c.b16 %v3103, %v3102
        %v3115 = vpack.c.b16 %v3105, %v3104
        %v3116 = vpack.c.b16 %v3107, %v3106
        %v3117 = vpack.c.b16 %v3109, %v3108
        %3126 = vmatpush.bf16.msra.mxu0 %v3117
        %3127 = vmatpush.bf16.msra.mxu0 %v3116
        %3128 = vmatpush.bf16.msra.mxu0 %v3115
        %3129 = vmatpush.bf16.msra.mxu0 %v3114
        %3130 = vmatpush.bf16.msra.mxu0 %v3113
        %3131 = vmatpush.bf16.msra.mxu0 %v3112
        %3132 = vmatpush.bf16.msra.mxu0 %v3111
        %3133 = vmatpush.bf16.msra.mxu0 %v3110
        %3134 = vmatmul.bf16.gmra.mxu0 %v3055
        %v3135 = vpop.f32.mrf.mxu0
        %v3136 = vadd.f32 %v3076, %v3135
        %v3137 = vpop.f32.mrf.mxu0
        %3138 = vdwg.mxu0
        %v3139 = vadd.f32 %v2756, %v3136
        %s3140 = scalar_lea.vmem %s37, 1
        %v3141 = vld [vmem:[%s3140] sm:$0x1]
        %s3142 = scalar_lea.vmem %s39, 1
        %v3143 = vld [vmem:[%s3142] sm:$0x1]
        %3144 = vadd.xlane.f32.xlu0 %v3139
        %v3145 = vpop.xlane.xlu0 %3144
        %v3146 = vmul.f32 %v3145, 0.03125
        %v3147 = vmul.f32 %v3139, %v3139
        %3148 = vadd.xlane.f32.xlu0 %v3147
        %v3149 = vpop.xlane.xlu0 %3148
        %v3150 = vmul.f32 %v3149, 0.03125
        %v3151 = vmul.f32 %v3146, %v3146
        %v3152 = vsub.f32 %v3150, %v3151
        %v3153 = vmax.f32 %v3152, 0.0
        %v3154 = vsub.f32 %v3139, %v3146
        %v3155 = vadd.f32 %v3153, 1e-05
        %v3156 = vrsqrt.pop %v3155
        %v3157 = vmul.f32 %v3156, %v3155
        %v3158 = vmul.f32 %v3157, %v3156
        %v3159 = vmul.f32 0.5, %v3158
        %v3160 = vsub.f32 1.5, %v3159
        %v3161 = vmul.f32 %v3156, %v3160
        %vm3162 = vweird.f32 %v3155
        %vm3163 = vweird.f32 %v3156
        %vm3164 = vmor %vm3162, %vm3163
        %v3165 = vsel %vm3164, %v3156, %v3161
        %v3166 = vmul.f32 %v3154, %v3165
        %v3168 = vperm.slane %v3141, 0
        %v3170 = vmul.f32 %v3166, %v3168
        %v3172 = vperm.slane %v3143, 0
        %v3174 = vadd.f32 %v3170, %v3172
        %v3175 = vpack.c.bf16 %v3174, %v3174
        %s3176 = scalar_lea.vmem [#allocation10], 64
        %v3177 = vld [vmem:[%s3176] sm:$0xf]
        %v3178 = vld [vmem:[%s3176 + $0x4] sm:$0xf]
        %v3179 = vld [vmem:[%s3176 + $0x8] sm:$0xf]
        %v3180 = vld [vmem:[%s3176 + $0xc] sm:$0xf]
        %v3181 = vld [vmem:[%s3176 + $0x10] sm:$0xf]
        %v3182 = vld [vmem:[%s3176 + $0x14] sm:$0xf]
        %v3183 = vld [vmem:[%s3176 + $0x18] sm:$0xf]
        %v3184 = vld [vmem:[%s3176 + $0x1c] sm:$0xf]
        %v3185 = vld [vmem:[%s3176 + $0x20] sm:$0xf]
        %v3186 = vld [vmem:[%s3176 + $0x24] sm:$0xf]
        %v3187 = vld [vmem:[%s3176 + $0x28] sm:$0xf]
        %v3188 = vld [vmem:[%s3176 + $0x2c] sm:$0xf]
        %v3189 = vld [vmem:[%s3176 + $0x30] sm:$0xf]
        %v3190 = vld [vmem:[%s3176 + $0x34] sm:$0xf]
        %v3191 = vld [vmem:[%s3176 + $0x38] sm:$0xf]
        %v3192 = vld [vmem:[%s3176 + $0x3c] sm:$0xf]
        %s3193 = scalar_lea.vmem %s43, 1
        %v3194 = vld [vmem:[%s3193] sm:$0x1]
        %v3196 = vperm.slane %v3194, 0
        %v3214 = vunpack.c.l.b16 %v3177
        %v3215 = vunpack.c.l.b16 %v3178
        %v3216 = vunpack.c.l.b16 %v3179
        %v3217 = vunpack.c.l.b16 %v3180
        %v3218 = vunpack.c.l.b16 %v3181
        %v3219 = vunpack.c.l.b16 %v3182
        %v3220 = vunpack.c.l.b16 %v3183
        %v3221 = vunpack.c.l.b16 %v3184
        %v3222 = vunpack.c.l.b16 %v3185
        %v3223 = vunpack.c.l.b16 %v3186
        %v3224 = vunpack.c.l.b16 %v3187
        %v3225 = vunpack.c.l.b16 %v3188
        %v3226 = vunpack.c.l.b16 %v3189
        %v3227 = vunpack.c.l.b16 %v3190
        %v3228 = vunpack.c.l.b16 %v3191
        %v3229 = vunpack.c.l.b16 %v3192
        %v3230 = vpack.c.b16 %v3215, %v3214
        %v3231 = vpack.c.b16 %v3217, %v3216
        %v3232 = vpack.c.b16 %v3219, %v3218
        %v3233 = vpack.c.b16 %v3221, %v3220
        %v3234 = vpack.c.b16 %v3223, %v3222
        %v3235 = vpack.c.b16 %v3225, %v3224
        %v3236 = vpack.c.b16 %v3227, %v3226
        %v3237 = vpack.c.b16 %v3229, %v3228
        %3246 = vmatpush.bf16.msra.mxu0 %v3237
        %3247 = vmatpush.bf16.msra.mxu0 %v3236
        %3248 = vmatpush.bf16.msra.mxu0 %v3235
        %3249 = vmatpush.bf16.msra.mxu0 %v3234
        %3250 = vmatpush.bf16.msra.mxu0 %v3233
        %3251 = vmatpush.bf16.msra.mxu0 %v3232
        %3252 = vmatpush.bf16.msra.mxu0 %v3231
        %3253 = vmatpush.bf16.msra.mxu0 %v3230
        %3254 = vmatmul.bf16.gmra.mxu0 %v3175
        %v3255 = vpop.f32.mrf.mxu0
        %v3256 = vadd.f32 %v3196, %v3255
        %v3257 = vpop.f32.mrf.mxu0
        %3258 = vdwg.mxu0
        %v3259 = vmax.f32 %v3256, 0.0
        %v3260 = vpack.c.bf16 %v3259, %v3259
        %s3261 = scalar_lea.vmem [#allocation12], 64
        %v3262 = vld [vmem:[%s3261] sm:$0xf]
        %v3263 = vld [vmem:[%s3261 + $0x4] sm:$0xf]
        %v3264 = vld [vmem:[%s3261 + $0x8] sm:$0xf]
        %v3265 = vld [vmem:[%s3261 + $0xc] sm:$0xf]
        %v3266 = vld [vmem:[%s3261 + $0x10] sm:$0xf]
        %v3267 = vld [vmem:[%s3261 + $0x14] sm:$0xf]
        %v3268 = vld [vmem:[%s3261 + $0x18] sm:$0xf]
        %v3269 = vld [vmem:[%s3261 + $0x1c] sm:$0xf]
        %v3270 = vld [vmem:[%s3261 + $0x20] sm:$0xf]
        %v3271 = vld [vmem:[%s3261 + $0x24] sm:$0xf]
        %v3272 = vld [vmem:[%s3261 + $0x28] sm:$0xf]
        %v3273 = vld [vmem:[%s3261 + $0x2c] sm:$0xf]
        %v3274 = vld [vmem:[%s3261 + $0x30] sm:$0xf]
        %v3275 = vld [vmem:[%s3261 + $0x34] sm:$0xf]
        %v3276 = vld [vmem:[%s3261 + $0x38] sm:$0xf]
        %v3277 = vld [vmem:[%s3261 + $0x3c] sm:$0xf]
        %s3278 = scalar_lea.vmem %s47, 1
        %v3279 = vld [vmem:[%s3278] sm:$0x1]
        %v3281 = vperm.slane %v3279, 0
        %v3299 = vunpack.c.l.b16 %v3262
        %v3300 = vunpack.c.l.b16 %v3263
        %v3301 = vunpack.c.l.b16 %v3264
        %v3302 = vunpack.c.l.b16 %v3265
        %v3303 = vunpack.c.l.b16 %v3266
        %v3304 = vunpack.c.l.b16 %v3267
        %v3305 = vunpack.c.l.b16 %v3268
        %v3306 = vunpack.c.l.b16 %v3269
        %v3307 = vunpack.c.l.b16 %v3270
        %v3308 = vunpack.c.l.b16 %v3271
        %v3309 = vunpack.c.l.b16 %v3272
        %v3310 = vunpack.c.l.b16 %v3273
        %v3311 = vunpack.c.l.b16 %v3274
        %v3312 = vunpack.c.l.b16 %v3275
        %v3313 = vunpack.c.l.b16 %v3276
        %v3314 = vunpack.c.l.b16 %v3277
        %v3315 = vpack.c.b16 %v3300, %v3299
        %v3316 = vpack.c.b16 %v3302, %v3301
        %v3317 = vpack.c.b16 %v3304, %v3303
        %v3318 = vpack.c.b16 %v3306, %v3305
        %v3319 = vpack.c.b16 %v3308, %v3307
        %v3320 = vpack.c.b16 %v3310, %v3309
        %v3321 = vpack.c.b16 %v3312, %v3311
        %v3322 = vpack.c.b16 %v3314, %v3313
        %3331 = vmatpush.bf16.msra.mxu0 %v3322
        %3332 = vmatpush.bf16.msra.mxu0 %v3321
        %3333 = vmatpush.bf16.msra.mxu0 %v3320
        %3334 = vmatpush.bf16.msra.mxu0 %v3319
        %3335 = vmatpush.bf16.msra.mxu0 %v3318
        %3336 = vmatpush.bf16.msra.mxu0 %v3317
        %3337 = vmatpush.bf16.msra.mxu0 %v3316
        %3338 = vmatpush.bf16.msra.mxu0 %v3315
        %3339 = vmatmul.bf16.gmra.mxu0 %v3260
        %v3340 = vpop.f32.mrf.mxu0
        %v3341 = vadd.f32 %v3281, %v3340
        %v3342 = vpop.f32.mrf.mxu0
        %3343 = vdwg.mxu0
        %v3344 = vadd.f32 %v3139, %v3341
        %v3345 = vpack.c.bf16 %v3344, %v3344
        %v3346 = vld [vmem:[%s49] sm:$0x1]
        %v3347 = vld [vmem:[%s51] sm:$0x1]
        %3348 = vadd.xlane.f32.xlu0 %v1418
        %v3349 = vpop.xlane.xlu0 %3348
        %v3350 = vmul.f32 %v3349, 0.03125
        %v3351 = vmul.f32 %v1418, %v1418
        %3352 = vadd.xlane.f32.xlu0 %v3351
        %v3353 = vpop.xlane.xlu0 %3352
        %v3354 = vmul.f32 %v3353, 0.03125
        %v3355 = vmul.f32 %v3350, %v3350
        %v3356 = vsub.f32 %v3354, %v3355
        %v3357 = vmax.f32 %v3356, 0.0
        %v3358 = vsub.f32 %v1418, %v3350
        %v3359 = vadd.f32 %v3357, 1e-05
        %v3360 = vrsqrt.pop %v3359
        %v3361 = vmul.f32 %v3360, %v3359
        %v3362 = vmul.f32 %v3361, %v3360
        %v3363 = vmul.f32 0.5, %v3362
        %v3364 = vsub.f32 1.5, %v3363
        %v3365 = vmul.f32 %v3360, %v3364
        %vm3366 = vweird.f32 %v3359
        %vm3367 = vweird.f32 %v3360
        %vm3368 = vmor %vm3366, %vm3367
        %v3369 = vsel %vm3368, %v3360, %v3365
        %v3370 = vmul.f32 %v3358, %v3369
        %v3372 = vperm.slane %v3346, 0
        %v3374 = vmul.f32 %v3370, %v3372
        %v3376 = vperm.slane %v3347, 0
        %v3378 = vadd.f32 %v3374, %v3376
        %v3379 = vpack.c.bf16 %v3378, %v3378
        %v3380 = vld [vmem:[%s53] sm:$0xf]
        %v3381 = vld [vmem:[%s53 + $0x4] sm:$0xf]
        %v3382 = vld [vmem:[%s53 + $0x8] sm:$0xf]
        %v3383 = vld [vmem:[%s53 + $0xc] sm:$0xf]
        %v3384 = vld [vmem:[%s53 + $0x10] sm:$0xf]
        %v3385 = vld [vmem:[%s53 + $0x14] sm:$0xf]
        %v3386 = vld [vmem:[%s53 + $0x18] sm:$0xf]
        %v3387 = vld [vmem:[%s53 + $0x1c] sm:$0xf]
        %v3388 = vld [vmem:[%s53 + $0x20] sm:$0xf]
        %v3389 = vld [vmem:[%s53 + $0x24] sm:$0xf]
        %v3390 = vld [vmem:[%s53 + $0x28] sm:$0xf]
        %v3391 = vld [vmem:[%s53 + $0x2c] sm:$0xf]
        %v3392 = vld [vmem:[%s53 + $0x30] sm:$0xf]
        %v3393 = vld [vmem:[%s53 + $0x34] sm:$0xf]
        %v3394 = vld [vmem:[%s53 + $0x38] sm:$0xf]
        %v3395 = vld [vmem:[%s53 + $0x3c] sm:$0xf]
        %v3396 = vld [vmem:[%s55] sm:$0x1]
        %v3398 = vperm.slane %v3396, 0
        %v3416 = vunpack.c.l.b16 %v3380
        %v3417 = vunpack.c.l.b16 %v3381
        %v3418 = vunpack.c.l.b16 %v3382
        %v3419 = vunpack.c.l.b16 %v3383
        %v3420 = vunpack.c.l.b16 %v3384
        %v3421 = vunpack.c.l.b16 %v3385
        %v3422 = vunpack.c.l.b16 %v3386
        %v3423 = vunpack.c.l.b16 %v3387
        %v3424 = vunpack.c.l.b16 %v3388
        %v3425 = vunpack.c.l.b16 %v3389
        %v3426 = vunpack.c.l.b16 %v3390
        %v3427 = vunpack.c.l.b16 %v3391
        %v3428 = vunpack.c.l.b16 %v3392
        %v3429 = vunpack.c.l.b16 %v3393
        %v3430 = vunpack.c.l.b16 %v3394
        %v3431 = vunpack.c.l.b16 %v3395
        %v3432 = vpack.c.b16 %v3417, %v3416
        %v3433 = vpack.c.b16 %v3419, %v3418
        %v3434 = vpack.c.b16 %v3421, %v3420
        %v3435 = vpack.c.b16 %v3423, %v3422
        %v3436 = vpack.c.b16 %v3425, %v3424
        %v3437 = vpack.c.b16 %v3427, %v3426
        %v3438 = vpack.c.b16 %v3429, %v3428
        %v3439 = vpack.c.b16 %v3431, %v3430
        %3448 = vmatpush.bf16.msra.mxu0 %v3439
        %3449 = vmatpush.bf16.msra.mxu0 %v3438
        %3450 = vmatpush.bf16.msra.mxu0 %v3437
        %3451 = vmatpush.bf16.msra.mxu0 %v3436
        %3452 = vmatpush.bf16.msra.mxu0 %v3435
        %3453 = vmatpush.bf16.msra.mxu0 %v3434
        %3454 = vmatpush.bf16.msra.mxu0 %v3433
        %3455 = vmatpush.bf16.msra.mxu0 %v3432
        %3456 = vmatmul.bf16.gmra.mxu0 %v3379
        %v3457 = vpop.f32.mrf.mxu0
        %v3458 = vadd.f32 %v3398, %v3457
        %v3459 = vpop.f32.mrf.mxu0
        %3460 = vdwg.mxu0
        %v3461 = vpack.c.bf16 %v3458, %v3458
        %v3462 = vld [vmem:[#allocation13] sm:$0xff]
        %v3463 = vld [vmem:[#allocation13 + $0x8] sm:$0xff]
        %v3464 = vld [vmem:[#allocation13 + $0x10] sm:$0xff]
        %v3465 = vld [vmem:[#allocation13 + $0x18] sm:$0xff]
        %v3466 = vld [vmem:[#allocation13 + $0x20] sm:$0xff]
        %v3467 = vld [vmem:[#allocation13 + $0x28] sm:$0xff]
        %v3468 = vld [vmem:[#allocation13 + $0x30] sm:$0xff]
        %v3469 = vld [vmem:[#allocation13 + $0x38] sm:$0xff]
        %v3470 = vld [vmem:[#allocation13 + $0x40] sm:$0xff]
        %v3471 = vld [vmem:[#allocation13 + $0x48] sm:$0xff]
        %v3472 = vld [vmem:[#allocation13 + $0x50] sm:$0xff]
        %v3473 = vld [vmem:[#allocation13 + $0x58] sm:$0xff]
        %v3474 = vld [vmem:[#allocation13 + $0x60] sm:$0xff]
        %v3475 = vld [vmem:[#allocation13 + $0x68] sm:$0xff]
        %v3476 = vld [vmem:[#allocation13 + $0x70] sm:$0xff]
        %v3477 = vld [vmem:[#allocation13 + $0x78] sm:$0xff]
        %v3478 = vld [vmem:[%s59] sm:$0x3]
        %v3480 = vperm.slane %v3478, 0
        %v3481 = vperm.slane %v3478, 1
        %v3500 = vunpack.c.l.b16 %v3462
        %v3501 = vunpack.c.h.b16 %v3462
        %v3502 = vunpack.c.l.b16 %v3463
        %v3503 = vunpack.c.h.b16 %v3463
        %v3504 = vunpack.c.l.b16 %v3464
        %v3505 = vunpack.c.h.b16 %v3464
        %v3506 = vunpack.c.l.b16 %v3465
        %v3507 = vunpack.c.h.b16 %v3465
        %v3508 = vunpack.c.l.b16 %v3466
        %v3509 = vunpack.c.h.b16 %v3466
        %v3510 = vunpack.c.l.b16 %v3467
        %v3511 = vunpack.c.h.b16 %v3467
        %v3512 = vunpack.c.l.b16 %v3468
        %v3513 = vunpack.c.h.b16 %v3468
        %v3514 = vunpack.c.l.b16 %v3469
        %v3515 = vunpack.c.h.b16 %v3469
        %v3516 = vunpack.c.l.b16 %v3470
        %v3517 = vunpack.c.h.b16 %v3470
        %v3518 = vunpack.c.l.b16 %v3471
        %v3519 = vunpack.c.h.b16 %v3471
        %v3520 = vunpack.c.l.b16 %v3472
        %v3521 = vunpack.c.h.b16 %v3472
        %v3522 = vunpack.c.l.b16 %v3473
        %v3523 = vunpack.c.h.b16 %v3473
        %v3524 = vunpack.c.l.b16 %v3474
        %v3525 = vunpack.c.h.b16 %v3474
        %v3526 = vunpack.c.l.b16 %v3475
        %v3527 = vunpack.c.h.b16 %v3475
        %v3528 = vunpack.c.l.b16 %v3476
        %v3529 = vunpack.c.h.b16 %v3476
        %v3530 = vunpack.c.l.b16 %v3477
        %v3531 = vunpack.c.h.b16 %v3477
        %v3532 = vpack.c.b16 %v3502, %v3500
        %v3533 = vpack.c.b16 %v3503, %v3501
        %v3534 = vpack.c.b16 %v3506, %v3504
        %v3535 = vpack.c.b16 %v3507, %v3505
        %v3536 = vpack.c.b16 %v3510, %v3508
        %v3537 = vpack.c.b16 %v3511, %v3509
        %v3538 = vpack.c.b16 %v3514, %v3512
        %v3539 = vpack.c.b16 %v3515, %v3513
        %v3540 = vpack.c.b16 %v3518, %v3516
        %v3541 = vpack.c.b16 %v3519, %v3517
        %v3542 = vpack.c.b16 %v3522, %v3520
        %v3543 = vpack.c.b16 %v3523, %v3521
        %v3544 = vpack.c.b16 %v3526, %v3524
        %v3545 = vpack.c.b16 %v3527, %v3525
        %v3546 = vpack.c.b16 %v3530, %v3528
        %v3547 = vpack.c.b16 %v3531, %v3529
        %3564 = vmatpush.bf16.msra.mxu0 %v3546
        %3565 = vmatpush.bf16.msra.mxu0 %v3544
        %3566 = vmatpush.bf16.msra.mxu0 %v3542
        %3567 = vmatpush.bf16.msra.mxu0 %v3540
        %3568 = vmatpush.bf16.msra.mxu0 %v3538
        %3569 = vmatpush.bf16.msra.mxu0 %v3536
        %3570 = vmatpush.bf16.msra.mxu0 %v3534
        %3571 = vmatpush.bf16.msra.mxu0 %v3532
        %3572 = vmatmul.bf16.gmra.mxu0 %v3345
        %v3573 = vpop.f32.mrf.mxu0
        %v3574 = vadd.f32 %v3480, %v3573
        %v3575 = vpop.f32.mrf.mxu0
        %3576 = vdwg.mxu0
        %3577 = vmatpush.bf16.msra.mxu0 %v3547
        %3578 = vmatpush.bf16.msra.mxu0 %v3545
        %3579 = vmatpush.bf16.msra.mxu0 %v3543
        %3580 = vmatpush.bf16.msra.mxu0 %v3541
        %3581 = vmatpush.bf16.msra.mxu0 %v3539
        %3582 = vmatpush.bf16.msra.mxu0 %v3537
        %3583 = vmatpush.bf16.msra.mxu0 %v3535
        %3584 = vmatpush.bf16.msra.mxu0 %v3533
        %3585 = vmatmul.bf16.gmra.mxu0 %v3345
        %v3586 = vpop.f32.mrf.mxu0
        %v3587 = vadd.f32 %v3481, %v3586
        %v3588 = vpop.f32.mrf.mxu0
        %3589 = vdwg.mxu0
        %v3590 = vpack.c.bf16 %v3587, %v3574
        %v3592 = vrot.slane %v3590, 4
        %3593 = vmatpush.bf16.xpose.msra.mxu0 0
        %3594 = vmatpush.bf16.xpose.msra.mxu0 0
        %3595 = vmatpush.bf16.xpose.msra.mxu0 0
        %3596 = vmatpush.bf16.xpose.msra.mxu0 0
        %3597 = vmatpush.bf16.xpose.msra.mxu0 0
        %3598 = vmatpush.bf16.xpose.msra.mxu0 0
        %3599 = vmatpush.bf16.xpose.msra.mxu0 0
        %3600 = vmatpush.bf16.xpose.msra.mxu0 %v3590
        %3601 = vmatmul.bf16.gmra.mxu0 %v3461
        %v3602 = vpop.f32.mrf.mxu0
        %v3603 = vadd.f32 0.0, %v3602
        %v3604 = vpop.f32.mrf.mxu0
        %3605 = vdwg.mxu0
        %v3606 = vmul.f32 %v3603, 0.17677669
        %v3607 = vadd.f32 %v3606, %v1683
        %v3608 = vsel %vm1686, %v3607, -inf
        %3609 = vmax.xlane.f32.xlu0 %v3608
        %v3610 = vpop.xlane.xlu0 %3609
        %v3611 = vsub.f32 %v3607, %v3610
        %v3612 = vmul.f32 %v3611, 1.442695
        %v3613 = vpow.pop %v3612
        %v3614 = vsel %vm1686, %v3613, 0.0
        %3615 = vadd.xlane.f32.xlu0 %v3614
        %v3616 = vpop.xlane.xlu0 %3615
        %v3617 = vrcp.pop %v3616
        %v3618 = vmul.f32 %v3613, %v3617
        %v3619 = vpack.c.bf16 %v3618, %v3618
        %v3621 = vsel %vm1686, %v3619, 0
        %v3624 = vsel %vm1702, %v3592, 0
        %3626 = vmatpush.bf16.msra.mxu0 0
        %3627 = vmatpush.bf16.msra.mxu0 0
        %3628 = vmatpush.bf16.msra.mxu0 0
        %3629 = vmatpush.bf16.msra.mxu0 0
        %3630 = vmatpush.bf16.msra.mxu0 0
        %3631 = vmatpush.bf16.msra.mxu0 0
        %3632 = vmatpush.bf16.msra.mxu0 0
        %3633 = vmatpush.bf16.msra.mxu0 %v3624
        %3634 = vmatmul.bf16.gmra.mxu0 %v3621
        %v3635 = vpop.f32.mrf.mxu0
        %v3636 = vadd.f32 0.0, %v3635
        %v3637 = vpop.f32.mrf.mxu0
        %3638 = vdwg.mxu0
        %v3639 = vpack.c.bf16 %v3636, %v3636
        %v3640 = vld [vmem:[#allocation15] sm:$0xf]
        %v3641 = vld [vmem:[#allocation15 + $0x4] sm:$0xf]
        %v3642 = vld [vmem:[#allocation15 + $0x8] sm:$0xf]
        %v3643 = vld [vmem:[#allocation15 + $0xc] sm:$0xf]
        %v3644 = vld [vmem:[#allocation15 + $0x10] sm:$0xf]
        %v3645 = vld [vmem:[#allocation15 + $0x14] sm:$0xf]
        %v3646 = vld [vmem:[#allocation15 + $0x18] sm:$0xf]
        %v3647 = vld [vmem:[#allocation15 + $0x1c] sm:$0xf]
        %v3648 = vld [vmem:[#allocation15 + $0x20] sm:$0xf]
        %v3649 = vld [vmem:[#allocation15 + $0x24] sm:$0xf]
        %v3650 = vld [vmem:[#allocation15 + $0x28] sm:$0xf]
        %v3651 = vld [vmem:[#allocation15 + $0x2c] sm:$0xf]
        %v3652 = vld [vmem:[#allocation15 + $0x30] sm:$0xf]
        %v3653 = vld [vmem:[#allocation15 + $0x34] sm:$0xf]
        %v3654 = vld [vmem:[#allocation15 + $0x38] sm:$0xf]
        %v3655 = vld [vmem:[#allocation15 + $0x3c] sm:$0xf]
        %v3656 = vld [vmem:[%s63] sm:$0x1]
        %v3658 = vperm.slane %v3656, 0
        %v3676 = vunpack.c.l.b16 %v3640
        %v3677 = vunpack.c.l.b16 %v3641
        %v3678 = vunpack.c.l.b16 %v3642
        %v3679 = vunpack.c.l.b16 %v3643
        %v3680 = vunpack.c.l.b16 %v3644
        %v3681 = vunpack.c.l.b16 %v3645
        %v3682 = vunpack.c.l.b16 %v3646
        %v3683 = vunpack.c.l.b16 %v3647
        %v3684 = vunpack.c.l.b16 %v3648
        %v3685 = vunpack.c.l.b16 %v3649
        %v3686 = vunpack.c.l.b16 %v3650
        %v3687 = vunpack.c.l.b16 %v3651
        %v3688 = vunpack.c.l.b16 %v3652
        %v3689 = vunpack.c.l.b16 %v3653
        %v3690 = vunpack.c.l.b16 %v3654
        %v3691 = vunpack.c.l.b16 %v3655
        %v3692 = vpack.c.b16 %v3677, %v3676
        %v3693 = vpack.c.b16 %v3679, %v3678
        %v3694 = vpack.c.b16 %v3681, %v3680
        %v3695 = vpack.c.b16 %v3683, %v3682
        %v3696 = vpack.c.b16 %v3685, %v3684
        %v3697 = vpack.c.b16 %v3687, %v3686
        %v3698 = vpack.c.b16 %v3689, %v3688
        %v3699 = vpack.c.b16 %v3691, %v3690
        %3708 = vmatpush.bf16.msra.mxu0 %v3699
        %3709 = vmatpush.bf16.msra.mxu0 %v3698
        %3710 = vmatpush.bf16.msra.mxu0 %v3697
        %3711 = vmatpush.bf16.msra.mxu0 %v3696
        %3712 = vmatpush.bf16.msra.mxu0 %v3695
        %3713 = vmatpush.bf16.msra.mxu0 %v3694
        %3714 = vmatpush.bf16.msra.mxu0 %v3693
        %3715 = vmatpush.bf16.msra.mxu0 %v3692
        %3716 = vmatmul.bf16.gmra.mxu0 %v3639
        %v3717 = vpop.f32.mrf.mxu0
        %v3718 = vadd.f32 %v3658, %v3717
        %v3719 = vpop.f32.mrf.mxu0
        %3720 = vdwg.mxu0
        %v3721 = vadd.f32 %v1418, %v3718
        %v3722 = vld [vmem:[%s65] sm:$0x1]
        %v3723 = vld [vmem:[%s67] sm:$0x1]
        %3724 = vadd.xlane.f32.xlu0 %v3721
        %v3725 = vpop.xlane.xlu0 %3724
        %v3726 = vmul.f32 %v3725, 0.03125
        %v3727 = vmul.f32 %v3721, %v3721
        %3728 = vadd.xlane.f32.xlu0 %v3727
        %v3729 = vpop.xlane.xlu0 %3728
        %v3730 = vmul.f32 %v3729, 0.03125
        %v3731 = vmul.f32 %v3726, %v3726
        %v3732 = vsub.f32 %v3730, %v3731
        %v3733 = vmax.f32 %v3732, 0.0
        %v3734 = vsub.f32 %v3721, %v3726
        %v3735 = vadd.f32 %v3733, 1e-05
        %v3736 = vrsqrt.pop %v3735
        %v3737 = vmul.f32 %v3736, %v3735
        %v3738 = vmul.f32 %v3737, %v3736
        %v3739 = vmul.f32 0.5, %v3738
        %v3740 = vsub.f32 1.5, %v3739
        %v3741 = vmul.f32 %v3736, %v3740
        %vm3742 = vweird.f32 %v3735
        %vm3743 = vweird.f32 %v3736
        %vm3744 = vmor %vm3742, %vm3743
        %v3745 = vsel %vm3744, %v3736, %v3741
        %v3746 = vmul.f32 %v3734, %v3745
        %v3748 = vperm.slane %v3722, 0
        %v3750 = vmul.f32 %v3746, %v3748
        %v3752 = vperm.slane %v3723, 0
        %v3754 = vadd.f32 %v3750, %v3752
        %v3755 = vpack.c.bf16 %v3754, %v3754
        %v3756 = vld [vmem:[#allocation16] sm:$0xf]
        %v3757 = vld [vmem:[#allocation16 + $0x4] sm:$0xf]
        %v3758 = vld [vmem:[#allocation16 + $0x8] sm:$0xf]
        %v3759 = vld [vmem:[#allocation16 + $0xc] sm:$0xf]
        %v3760 = vld [vmem:[#allocation16 + $0x10] sm:$0xf]
        %v3761 = vld [vmem:[#allocation16 + $0x14] sm:$0xf]
        %v3762 = vld [vmem:[#allocation16 + $0x18] sm:$0xf]
        %v3763 = vld [vmem:[#allocation16 + $0x1c] sm:$0xf]
        %v3764 = vld [vmem:[#allocation16 + $0x20] sm:$0xf]
        %v3765 = vld [vmem:[#allocation16 + $0x24] sm:$0xf]
        %v3766 = vld [vmem:[#allocation16 + $0x28] sm:$0xf]
        %v3767 = vld [vmem:[#allocation16 + $0x2c] sm:$0xf]
        %v3768 = vld [vmem:[#allocation16 + $0x30] sm:$0xf]
        %v3769 = vld [vmem:[#allocation16 + $0x34] sm:$0xf]
        %v3770 = vld [vmem:[#allocation16 + $0x38] sm:$0xf]
        %v3771 = vld [vmem:[#allocation16 + $0x3c] sm:$0xf]
        %v3772 = vld [vmem:[%s71] sm:$0x1]
        %v3774 = vperm.slane %v3772, 0
        %v3792 = vunpack.c.l.b16 %v3756
        %v3793 = vunpack.c.l.b16 %v3757
        %v3794 = vunpack.c.l.b16 %v3758
        %v3795 = vunpack.c.l.b16 %v3759
        %v3796 = vunpack.c.l.b16 %v3760
        %v3797 = vunpack.c.l.b16 %v3761
        %v3798 = vunpack.c.l.b16 %v3762
        %v3799 = vunpack.c.l.b16 %v3763
        %v3800 = vunpack.c.l.b16 %v3764
        %v3801 = vunpack.c.l.b16 %v3765
        %v3802 = vunpack.c.l.b16 %v3766
        %v3803 = vunpack.c.l.b16 %v3767
        %v3804 = vunpack.c.l.b16 %v3768
        %v3805 = vunpack.c.l.b16 %v3769
        %v3806 = vunpack.c.l.b16 %v3770
        %v3807 = vunpack.c.l.b16 %v3771
        %v3808 = vpack.c.b16 %v3793, %v3792
        %v3809 = vpack.c.b16 %v3795, %v3794
        %v3810 = vpack.c.b16 %v3797, %v3796
        %v3811 = vpack.c.b16 %v3799, %v3798
        %v3812 = vpack.c.b16 %v3801, %v3800
        %v3813 = vpack.c.b16 %v3803, %v3802
        %v3814 = vpack.c.b16 %v3805, %v3804
        %v3815 = vpack.c.b16 %v3807, %v3806
        %3824 = vmatpush.bf16.msra.mxu0 %v3815
        %3825 = vmatpush.bf16.msra.mxu0 %v3814
        %3826 = vmatpush.bf16.msra.mxu0 %v3813
        %3827 = vmatpush.bf16.msra.mxu0 %v3812
        %3828 = vmatpush.bf16.msra.mxu0 %v3811
        %3829 = vmatpush.bf16.msra.mxu0 %v3810
        %3830 = vmatpush.bf16.msra.mxu0 %v3809
        %3831 = vmatpush.bf16.msra.mxu0 %v3808
        %3832 = vmatmul.bf16.gmra.mxu0 %v3755
        %v3833 = vpop.f32.mrf.mxu0
        %v3834 = vadd.f32 %v3774, %v3833
        %v3835 = vpop.f32.mrf.mxu0
        %3836 = vdwg.mxu0
        %v3837 = vmax.f32 %v3834, 0.0
        %v3838 = vpack.c.bf16 %v3837, %v3837
        %v3839 = vld [vmem:[#allocation18] sm:$0xf]
        %v3840 = vld [vmem:[#allocation18 + $0x4] sm:$0xf]
        %v3841 = vld [vmem:[#allocation18 + $0x8] sm:$0xf]
        %v3842 = vld [vmem:[#allocation18 + $0xc] sm:$0xf]
        %v3843 = vld [vmem:[#allocation18 + $0x10] sm:$0xf]
        %v3844 = vld [vmem:[#allocation18 + $0x14] sm:$0xf]
        %v3845 = vld [vmem:[#allocation18 + $0x18] sm:$0xf]
        %v3846 = vld [vmem:[#allocation18 + $0x1c] sm:$0xf]
        %v3847 = vld [vmem:[#allocation18 + $0x20] sm:$0xf]
        %v3848 = vld [vmem:[#allocation18 + $0x24] sm:$0xf]
        %v3849 = vld [vmem:[#allocation18 + $0x28] sm:$0xf]
        %v3850 = vld [vmem:[#allocation18 + $0x2c] sm:$0xf]
        %v3851 = vld [vmem:[#allocation18 + $0x30] sm:$0xf]
        %v3852 = vld [vmem:[#allocation18 + $0x34] sm:$0xf]
        %v3853 = vld [vmem:[#allocation18 + $0x38] sm:$0xf]
        %v3854 = vld [vmem:[#allocation18 + $0x3c] sm:$0xf]
        %v3855 = vld [vmem:[%s75] sm:$0x1]
        %v3857 = vperm.slane %v3855, 0
        %v3875 = vunpack.c.l.b16 %v3839
        %v3876 = vunpack.c.l.b16 %v3840
        %v3877 = vunpack.c.l.b16 %v3841
        %v3878 = vunpack.c.l.b16 %v3842
        %v3879 = vunpack.c.l.b16 %v3843
        %v3880 = vunpack.c.l.b16 %v3844
        %v3881 = vunpack.c.l.b16 %v3845
        %v3882 = vunpack.c.l.b16 %v3846
        %v3883 = vunpack.c.l.b16 %v3847
        %v3884 = vunpack.c.l.b16 %v3848
        %v3885 = vunpack.c.l.b16 %v3849
        %v3886 = vunpack.c.l.b16 %v3850
        %v3887 = vunpack.c.l.b16 %v3851
        %v3888 = vunpack.c.l.b16 %v3852
        %v3889 = vunpack.c.l.b16 %v3853
        %v3890 = vunpack.c.l.b16 %v3854
        %v3891 = vpack.c.b16 %v3876, %v3875
        %v3892 = vpack.c.b16 %v3878, %v3877
        %v3893 = vpack.c.b16 %v3880, %v3879
        %v3894 = vpack.c.b16 %v3882, %v3881
        %v3895 = vpack.c.b16 %v3884, %v3883
        %v3896 = vpack.c.b16 %v3886, %v3885
        %v3897 = vpack.c.b16 %v3888, %v3887
        %v3898 = vpack.c.b16 %v3890, %v3889
        %3907 = vmatpush.bf16.msra.mxu0 %v3898
        %3908 = vmatpush.bf16.msra.mxu0 %v3897
        %3909 = vmatpush.bf16.msra.mxu0 %v3896
        %3910 = vmatpush.bf16.msra.mxu0 %v3895
        %3911 = vmatpush.bf16.msra.mxu0 %v3894
        %3912 = vmatpush.bf16.msra.mxu0 %v3893
        %3913 = vmatpush.bf16.msra.mxu0 %v3892
        %3914 = vmatpush.bf16.msra.mxu0 %v3891
        %3915 = vmatmul.bf16.gmra.mxu0 %v3838
        %v3916 = vpop.f32.mrf.mxu0
        %v3917 = vadd.f32 %v3857, %v3916
        %v3918 = vpop.f32.mrf.mxu0
        %3919 = vdwg.mxu0
        %v3920 = vadd.f32 %v3721, %v3917
        %vm3921 = vcmp.gt.f32.partialorder %v1420, 0.5
        %v3922 = vsel %vm3921, 1, 0
        %v3923 = vperm.slane %v3922, 0
        %3924 = vset.pattern.permute.xlu0 0
        %3925 = vperm.xlu0 %3924, %v3923
        %v3926 = vpop.permute.xlu0 %3925
        %vm3927 = vcmp.eq.s32.totalorder %v3926, 1
        %v3928 = vsel %vm3927, %v3344, %v1417
        %3929 = vst [vmem:[%s1411] sm:$0xff] %v3928
        %v3930 = vsel %vm3927, %v3920, %v1418
        %3931 = vst [vmem:[%s1415] sm:$0xff] %v3930
        %p3932 = scmp.lt.s32.totalorder %s97, 1
        %s3933 = scalar_select %p3932, %s97, 1
        %s3934 = smul.addr %s3933, 8
        %s3935 = scalar_lea.vmem %s77, %s3934
        %p3936 = scmp.lt.s32.totalorder %s97, 1
        %s3937 = scalar_select %p3936, %s97, 1
        %s3938 = smul.addr %s3937, 8
        %s3939 = scalar_lea.vmem %s79, %s3938
        // Predicated region
        $region217: #{_lambda_.3} parent=171 // pred_check
          %p3940 = pneg %p933
        $region218: #{_lambda_.3} parent=171 // pred_check_branch
          %3942 = sbr.rel (%p3940) target = $region220
        $region219: #{_lambda_.3} parent=171 // pred_region
          _
        $region220: #{_lambda_.3} parent=171 // pred_fallthru
          _
        // Predicated region
        $region221: #{_lambda_.3} parent=171 // pred_check
          %p3943 = pneg %p959
        $region222: #{_lambda_.3} parent=171 // pred_check_branch
          %3945 = sbr.rel (%p3943) target = $region224
        $region223: #{_lambda_.3} parent=171 // pred_region
          _
        $region224: #{_lambda_.3} parent=171 // pred_fallthru
          _
      $region172: #{_lambda_.3} parent=5 // pred_fallthru
        _
      %p3946 = scmp.le.s32.totalorder 2, %s92
      // Predicated region
      $region225: #{_lambda_.3} parent=5 // pred_check
        %p3947 = pneg %p3946
      $region226: #{_lambda_.3} parent=5 // pred_check_branch
        %3949 = sbr.rel (%p3947) target = $region228
      $region227: #{_lambda_.3} parent=5 // pred_region
        %s3950 = ssub.s32 %s92, 2
        // Predicated region
        $region229: #{_lambda_.3} parent=227 // pred_check
          %p3951 = pneg %p939
        $region230: #{_lambda_.3} parent=227 // pred_check_branch
          %3953 = sbr.rel (%p3951) target = $region232
        $region231: #{_lambda_.3} parent=227 // pred_region
          %p3954 = scmp.lt.s32.totalorder %s98, 1
          %s3955 = scalar_select %p3954, %s98, 1
          %s3956 = smul.addr %s3955, 8
          %s3957 = scalar_lea.vmem %s77, %s3956
        $region232: #{_lambda_.3} parent=227 // pred_fallthru
          _
        // Predicated region
        $region233: #{_lambda_.3} parent=227 // pred_check
          %p3958 = pneg %p965
        $region234: #{_lambda_.3} parent=227 // pred_check_branch
          %3960 = sbr.rel (%p3958) target = $region236
        $region235: #{_lambda_.3} parent=227 // pred_region
          %p3961 = scmp.lt.s32.totalorder %s98, 1
          %s3962 = scalar_select %p3961, %s98, 1
          %s3963 = smul.addr %s3962, 8
          %s3964 = scalar_lea.vmem %s79, %s3963
        $region236: #{_lambda_.3} parent=227 // pred_fallthru
          _
      $region228: #{_lambda_.3} parent=5 // pred_fallthru
        _
    $region6: #{_lambda_.3} parent=1 // loop_footer
      %s96 = sadd.s32 1, %s92
    $region7: #{_lambda_.3} parent=1 // loop_footer_branch
      %91 = sbr.rel target = $region3
    $region8: #{_lambda_.3} parent=1 // loop_exit
      _
    %3965 = vsyncpa [#allocation3], 1
    %s3966 = scalar_lea.sflag [#allocation3], 1
    %3967 = vsyncpa %s3966, 1
    %3968 = vsyncpa [#allocation5], 1
    %3969 = vsyncpa [#allocation8], 1
    %3970 = vsyncpa [#allocation11], 1
    %3971 = vsyncpa [#allocation14], 1
    %3972 = vsyncpa [#allocation17], 1

</llo_original>
